<compile_context>
chip_gen: v7x
topology: tpu7x:2x2x1
jax: 0.10.0
libtpu: 0.0.40
codegen_flags: <defaults>
</compile_context>

<pallas_src>
import jax
import jax.numpy as jnp
from jax import lax
from jax.experimental import pallas as pl
from jax.experimental.pallas import tpu as pltpu


def _round_up(x, m):
    return (x + m - 1) // m * m


def _pick_time_chunk(T, max_chunk=32):
    # Largest divisor of T not exceeding max_chunk (keeps chunks exact; time
    # padding would change LSTM semantics).
    for c in range(min(T, max_chunk), 0, -1):
        if T % c == 0:
            return c
    return T


def make_lstm_kernel(Tt, Bp, I, Hp, Op):
    def lstm_kernel(x_ref, w_ih_ref, w_hh_ref, b_ref, w_fc_ref, b_fc_ref,
                    out_ref, h_scr, c_scr, xproj_scr):
        tchunk = pl.program_id(0)

        @pl.when(tchunk == 0)
        def _():
            # h0 = c0 = 0 (matches torch.zeros in the reference forward)
            h_scr[...] = jnp.zeros_like(h_scr)
            c_scr[...] = jnp.zeros_like(c_scr)

        # Hoisted input projection + bias for the whole chunk: one large
        # matmul instead of Tt tiny ones on the serial critical path.
        xproj_scr[...] = (
            jnp.dot(x_ref[...], w_ih_ref[...], preferred_element_type=jnp.float32)
            + b_ref[...]
        )  # (Tt*Bp, 4Hp), gate order i,f,g,o (each gate block is Hp wide)

        def step(t, carry):
            base = pl.multiple_of(t * Bp, Bp)
            xp_t = xproj_scr[pl.ds(base, Bp), :]          # (Bp, 4Hp)
            h = h_scr[...]                                # (Bp, Hp)
            c = c_scr[...]                                # (Bp, Hp)
            gates = xp_t + jnp.dot(h, w_hh_ref[...],
                                   preferred_element_type=jnp.float32)
            # Hp is a multiple of 128, so each gate slice is a lane-aligned
            # full-vreg view (no masked / lane-shuffle ops).
            i_g = jax.nn.sigmoid(gates[:, 0 * Hp:1 * Hp])
            f_g = jax.nn.sigmoid(gates[:, 1 * Hp:2 * Hp])
            g_g = jnp.tanh(gates[:, 2 * Hp:3 * Hp])
            o_g = jax.nn.sigmoid(gates[:, 3 * Hp:4 * Hp])
            c_new = f_g * c + i_g * g_g
            c_scr[...] = c_new
            h_scr[...] = o_g * jnp.tanh(c_new)
            return carry

        # Fully unrolled so the LLO scheduler can interleave MXU / EUP / VPU
        # work of adjacent timesteps and drop loop scalar overhead.
        lax.fori_loop(0, Tt, step, 0, unroll=True)

        @pl.when(tchunk == pl.num_programs(0) - 1)
        def _():
            # fc on the last timestep's hidden state (lane-dense Op store).
            out_ref[...] = (
                jnp.dot(h_scr[...], w_fc_ref[...],
                        preferred_element_type=jnp.float32)
                + b_fc_ref[...]
            )

    return lstm_kernel


def _pad_gate_blocks(w, H, Hp):
    """PyTorch gate-stacked (4H, ...) -> (4Hp, ...) with gate k at rows k*Hp."""
    if w.ndim == 1:
        out = jnp.zeros((4 * Hp,), w.dtype)
        for k in range(4):
            out = out.at[k * Hp:k * Hp + H].set(w[k * H:(k + 1) * H])
        return out
    out = jnp.zeros((4 * Hp, w.shape[1]), w.dtype)
    for k in range(4):
        out = out.at[k * Hp:k * Hp + H, :].set(w[k * H:(k + 1) * H, :])
    return out


def lstm_forward(x, w_ih, w_hh, b_ih, b_hh, w_fc, b_fc):
    """x: (B, T, I) float32. Weights in PyTorch layout:
       w_ih: (4H, I), w_hh: (4H, H), b_ih/b_hh: (4H,), w_fc: (O, H), b_fc: (O,).
       Returns (B, O), matching fc(lstm_out[:, -1, :])."""
    B, T, I = x.shape
    H = w_hh.shape[1]
    O = w_fc.shape[0]

    Bp = _round_up(B, 8)      # f32 sublane count
    Hp = _round_up(H, 128)    # lane-aligned per-gate block
    Op = _round_up(O, 128)    # lane-dense output store
    Tt = _pick_time_chunk(T)
    n_chunks = T // Tt

    f32 = jnp.float32
    # TODO(synk): for large production shapes, cast x / weights to bf16 (keep
    # f32 accumulation) for v5e/v6e/v7x MXU throughput; kept f32 here to hold
    # the 1e-4 correctness tolerance at these tiny test shapes.

    # x -> time-major, batch padded, flattened so each chunk's input
    # projection is a single (Tt*Bp, I) x (I, 4Hp) matmul inside the kernel.
    x_tm = jnp.transpose(x.astype(f32), (1, 0, 2))            # (T, B, I)
    x_tm = jnp.pad(x_tm, ((0, 0), (0, Bp - B), (0, 0)))       # (T, Bp, I)
    x_flat = x_tm.reshape(T * Bp, I)                          # (T*Bp, I)

    w_ih_t = _pad_gate_blocks(w_ih.astype(f32), H, Hp).T              # (I, 4Hp)
    w_hh_p = _pad_gate_blocks(w_hh.astype(f32), H, Hp)                # (4Hp, H)
    w_hh_t = jnp.pad(w_hh_p, ((0, 0), (0, Hp - H))).T                 # (Hp, 4Hp)
    b_p = _pad_gate_blocks((b_ih + b_hh).astype(f32), H, Hp).reshape(1, 4 * Hp)

    w_fc_t = jnp.pad(w_fc.astype(f32), ((0, Op - O), (0, Hp - H))).T  # (Hp, Op)
    b_fc_p = jnp.pad(b_fc.astype(f32), (0, Op - O)).reshape(1, Op)

    kernel = make_lstm_kernel(Tt, Bp, I, Hp, Op)

    out_p = pl.pallas_call(
        kernel,
        out_shape=jax.ShapeDtypeStruct((Bp, Op), f32),
        grid_spec=pltpu.PrefetchScalarGridSpec(
            num_scalar_prefetch=0,
            grid=(n_chunks,),
            in_specs=[
                pl.BlockSpec((Tt * Bp, I), lambda t: (t, 0)),     # x chunk (streamed)
                pl.BlockSpec((I, 4 * Hp), lambda t: (0, 0)),      # w_ih^T (resident)
                pl.BlockSpec((Hp, 4 * Hp), lambda t: (0, 0)),     # w_hh^T (resident)
                pl.BlockSpec((1, 4 * Hp), lambda t: (0, 0)),      # combined bias
                pl.BlockSpec((Hp, Op), lambda t: (0, 0)),         # w_fc^T
                pl.BlockSpec((1, Op), lambda t: (0, 0)),          # b_fc
            ],
            out_specs=pl.BlockSpec((Bp, Op), lambda t: (0, 0)),
            scratch_shapes=[
                pltpu.VMEM((Bp, Hp), f32),             # h
                pltpu.VMEM((Bp, Hp), f32),             # c
                pltpu.VMEM((Tt * Bp, 4 * Hp), f32),    # hoisted x projection
            ],
        ),
        compiler_params=pltpu.CompilerParams(
            dimension_semantics=("arbitrary",),        # sequential recurrence over T
        ),
    )(x_flat, w_ih_t, w_hh_t, b_p, w_fc_t, b_fc_p)

    return out_p[:B, :O]


def lstm_reference(x, w_ih, w_hh, b_ih, b_hh, w_fc, b_fc):
    """Pure-JAX reference matching torch.nn.LSTM (batch_first) + Linear."""
    B, T, I = x.shape
    H = w_hh.shape[1]
    h = jnp.zeros((B, H), jnp.float32)
    c = jnp.zeros((B, H), jnp.float32)
    for t in range(T):
        gates = x[:, t, :] @ w_ih.T + h @ w_hh.T + b_ih + b_hh
        i_g = jax.nn.sigmoid(gates[:, 0 * H:1 * H])
        f_g = jax.nn.sigmoid(gates[:, 1 * H:2 * H])
        g_g = jnp.tanh(gates[:, 2 * H:3 * H])
        o_g = jax.nn.sigmoid(gates[:, 3 * H:4 * H])
        c = f_g * c + i_g * g_g
        h = o_g * jnp.tanh(c)
    return h @ w_fc.T + b_fc


if __name__ == "__main__":
    # Small shapes consistent with the module's forward: x is (B, T, input_size)
    B, T, I, H, O = 2, 8, 16, 32, 8

    key = jax.random.PRNGKey(0)
    ks = jax.random.split(key, 7)
    bound = 1.0 / jnp.sqrt(H)

    x = jax.random.normal(ks[0], (B, T, I), dtype=jnp.float32)
    w_ih = jax.random.uniform(ks[1], (4 * H, I), minval=-bound, maxval=bound)
    w_hh = jax.random.uniform(ks[2], (4 * H, H), minval=-bound, maxval=bound)
    b_ih = jax.random.uniform(ks[3], (4 * H,), minval=-bound, maxval=bound)
    b_hh = jax.random.uniform(ks[4], (4 * H,), minval=-bound, maxval=bound)
    w_fc = jax.random.uniform(ks[5], (O, H), minval=-bound, maxval=bound)
    b_fc = jax.random.uniform(ks[6], (O,), minval=-bound, maxval=bound)

    out = lstm_forward(x, w_ih, w_hh, b_ih, b_hh, w_fc, b_fc)
    out = jax.block_until_ready(out)

    ref = lstm_reference(x, w_ih, w_hh, b_ih, b_hh, w_fc, b_fc)
    assert out.shape == (B, O)
    assert jnp.allclose(out, ref, atol=1e-4, rtol=1e-4), "mismatch vs reference"

    print("KERNEL_OK")
</pallas_src>

<mosaic_0001>
module attributes {stable_mosaic.version = 11 : i64} {
  func.func @lstm_kernel(%arg0: i32, %arg1: memref<64x16xf32, #tpu.memory_space<vmem>>, %arg2: memref<16x512xf32, #tpu.memory_space<vmem>>, %arg3: memref<128x512xf32, #tpu.memory_space<vmem>>, %arg4: memref<1x512xf32, #tpu.memory_space<vmem>>, %arg5: memref<128x128xf32, #tpu.memory_space<vmem>>, %arg6: memref<1x128xf32, #tpu.memory_space<vmem>>, %arg7: memref<8x128xf32, #tpu.memory_space<vmem>>, %arg8: memref<8x128xf32, #tpu.memory_space<vmem>>, %arg9: memref<8x128xf32, #tpu.memory_space<vmem>>, %arg10: memref<64x512xf32, #tpu.memory_space<vmem>>) attributes {dimension_semantics = [#tpu.dimension_semantics<arbitrary>], iteration_bounds = array<i64: 1>, scalar_prefetch = 0 : i64, scratch_operands = 3 : i64, tpu.core_type = #tpu.core_type<tc>, window_params = [{transform_indices = @transform_0, window_bounds = array<i64: 64, 16>}, {pipeline_mode = #tpu.pipeline_mode<synchronous>, transform_indices = @transform_1, window_bounds = array<i64: 16, 512>}, {pipeline_mode = #tpu.pipeline_mode<synchronous>, transform_indices = @transform_2, window_bounds = array<i64: 128, 512>}, {pipeline_mode = #tpu.pipeline_mode<synchronous>, transform_indices = @transform_3, window_bounds = array<i64: 1, 512>}, {pipeline_mode = #tpu.pipeline_mode<synchronous>, transform_indices = @transform_4, window_bounds = array<i64: 128, 128>}, {pipeline_mode = #tpu.pipeline_mode<synchronous>, transform_indices = @transform_5, window_bounds = array<i64: 1, 128>}, {pipeline_mode = #tpu.pipeline_mode<synchronous>, transform_indices = @transform_6, window_bounds = array<i64: 8, 128>}]} {
    %c0_i32 = arith.constant 0 : i32
    %0 = arith.cmpi eq, %arg0, %c0_i32 : i32
    %1 = arith.extui %0 : i1 to i32
    %c0_i32_0 = arith.constant 0 : i32
    %2 = arith.cmpi ne, %1, %c0_i32_0 : i32
    scf.if %2 {
      %cst_139 = arith.constant 0.000000e+00 : f32
      %301 = vector.broadcast %cst_139 : f32 to vector<8x128xf32>
      %c0_140 = arith.constant 0 : index
      %c0_141 = arith.constant 0 : index
      %302 = vector.load %arg8[%c0_140, %c0_141] : memref<8x128xf32, #tpu.memory_space<vmem>>, vector<8x128xf32>
      tpu.vector_store %arg8[%c0_140, %c0_141], %301 {strides = array<i32>} : memref<8x128xf32, #tpu.memory_space<vmem>>, vector<8x128xf32>,
      %cst_142 = arith.constant 0.000000e+00 : f32
      %303 = vector.broadcast %cst_142 : f32 to vector<8x128xf32>
      %c0_143 = arith.constant 0 : index
      %c0_144 = arith.constant 0 : index
      %304 = vector.load %arg9[%c0_143, %c0_144] : memref<8x128xf32, #tpu.memory_space<vmem>>, vector<8x128xf32>
      tpu.vector_store %arg9[%c0_143, %c0_144], %303 {strides = array<i32>} : memref<8x128xf32, #tpu.memory_space<vmem>>, vector<8x128xf32>,
    } else {
    }
    %c0 = arith.constant 0 : index
    %c0_1 = arith.constant 0 : index
    %3 = vector.load %arg1[%c0, %c0_1] : memref<64x16xf32, #tpu.memory_space<vmem>>, vector<64x16xf32>
    %c0_2 = arith.constant 0 : index
    %c0_3 = arith.constant 0 : index
    %4 = vector.load %arg2[%c0_2, %c0_3] : memref<16x512xf32, #tpu.memory_space<vmem>>, vector<16x512xf32>
    %cst = arith.constant dense<0.000000e+00> : vector<64x512xf32>
    %5 = tpu.matmul %3, %4, %cst {dimension_numbers = #tpu.dot_dimension_numbers<[1], [0], [0], [1], [0, 0, 1, 1], [], []>} : vector<64x16xf32>, vector<16x512xf32>, vector<64x512xf32> -> vector<64x512xf32>
    %c0_4 = arith.constant 0 : index
    %c0_5 = arith.constant 0 : index
    %6 = vector.load %arg4[%c0_4, %c0_5] : memref<1x512xf32, #tpu.memory_space<vmem>>, vector<1x512xf32>
    %7 = vector.broadcast %6 : vector<1x512xf32> to vector<64x512xf32>
    %8 = arith.addf %5, %7 : vector<64x512xf32>
    %c0_6 = arith.constant 0 : index
    %c0_7 = arith.constant 0 : index
    %9 = vector.load %arg10[%c0_6, %c0_7] : memref<64x512xf32, #tpu.memory_space<vmem>>, vector<64x512xf32>
    tpu.vector_store %arg10[%c0_6, %c0_7], %8 {strides = array<i32>} : memref<64x512xf32, #tpu.memory_space<vmem>>, vector<64x512xf32>,
    %c0_i32_8 = arith.constant 0 : i32
    %c8_i32 = arith.constant 8 : i32
    %10 = arith.muli %c0_i32_8, %c8_i32 : i32
    %11 = tpu.assume_multiple %10, 8 : i32
    %12 = arith.index_cast %11 : i32 to index
    %c0_9 = arith.constant 0 : index
    %13 = vector.load %arg10[%12, %c0_9] : memref<64x512xf32, #tpu.memory_space<vmem>>, vector<8x512xf32>
    %c0_10 = arith.constant 0 : index
    %c0_11 = arith.constant 0 : index
    %14 = vector.load %arg8[%c0_10, %c0_11] : memref<8x128xf32, #tpu.memory_space<vmem>>, vector<8x128xf32>
    %c0_12 = arith.constant 0 : index
    %c0_13 = arith.constant 0 : index
    %15 = vector.load %arg9[%c0_12, %c0_13] : memref<8x128xf32, #tpu.memory_space<vmem>>, vector<8x128xf32>
    %c0_14 = arith.constant 0 : index
    %c0_15 = arith.constant 0 : index
    %16 = vector.load %arg3[%c0_14, %c0_15] : memref<128x512xf32, #tpu.memory_space<vmem>>, vector<128x512xf32>
    %cst_16 = arith.constant dense<0.000000e+00> : vector<8x512xf32>
    %17 = tpu.matmul %14, %16, %cst_16 {dimension_numbers = #tpu.dot_dimension_numbers<[1], [0], [0], [1], [0, 0, 1, 1], [], []>} : vector<8x128xf32>, vector<128x512xf32>, vector<8x512xf32> -> vector<8x512xf32>
    %18 = arith.addf %13, %17 : vector<8x512xf32>
    %19 = vector.extract_strided_slice %18 {offsets = [0, 0], sizes = [8, 128], strides = [1, 1]} : vector<8x512xf32> to vector<8x128xf32>
    %20 = arith.negf %19 : vector<8x128xf32>
    %21 = math.exp %20 : vector<8x128xf32>
    %cst_17 = arith.constant 1.000000e+00 : f32
    %22 = vector.broadcast %cst_17 : f32 to vector<8x128xf32>
    %23 = arith.addf %22, %21 : vector<8x128xf32>
    %24 = arith.divf %22, %23 : vector<8x128xf32>
    %25 = vector.extract_strided_slice %18 {offsets = [0, 128], sizes = [8, 128], strides = [1, 1]} : vector<8x512xf32> to vector<8x128xf32>
    %26 = arith.negf %25 : vector<8x128xf32>
    %27 = math.exp %26 : vector<8x128xf32>
    %cst_18 = arith.constant 1.000000e+00 : f32
    %28 = vector.broadcast %cst_18 : f32 to vector<8x128xf32>
    %29 = arith.addf %28, %27 : vector<8x128xf32>
    %30 = arith.divf %28, %29 : vector<8x128xf32>
    %31 = vector.extract_strided_slice %18 {offsets = [0, 256], sizes = [8, 128], strides = [1, 1]} : vector<8x512xf32> to vector<8x128xf32>
    %32 = math.tanh %31 : vector<8x128xf32>
    %33 = vector.extract_strided_slice %18 {offsets = [0, 384], sizes = [8, 128], strides = [1, 1]} : vector<8x512xf32> to vector<8x128xf32>
    %34 = arith.negf %33 : vector<8x128xf32>
    %35 = math.exp %34 : vector<8x128xf32>
    %cst_19 = arith.constant 1.000000e+00 : f32
    %36 = vector.broadcast %cst_19 : f32 to vector<8x128xf32>
    %37 = arith.addf %36, %35 : vector<8x128xf32>
    %38 = arith.divf %36, %37 : vector<8x128xf32>
    %39 = arith.mulf %30, %15 : vector<8x128xf32>
    %40 = arith.mulf %24, %32 : vector<8x128xf32>
    %41 = arith.addf %39, %40 : vector<8x128xf32>
    %c0_20 = arith.constant 0 : index
    %c0_21 = arith.constant 0 : index
    %42 = vector.load %arg9[%c0_20, %c0_21] : memref<8x128xf32, #tpu.memory_space<vmem>>, vector<8x128xf32>
    tpu.vector_store %arg9[%c0_20, %c0_21], %41 {strides = array<i32>} : memref<8x128xf32, #tpu.memory_space<vmem>>, vector<8x128xf32>,
    %43 = math.tanh %41 : vector<8x128xf32>
    %44 = arith.mulf %38, %43 : vector<8x128xf32>
    %c0_22 = arith.constant 0 : index
    %c0_23 = arith.constant 0 : index
    %45 = vector.load %arg8[%c0_22, %c0_23] : memref<8x128xf32, #tpu.memory_space<vmem>>, vector<8x128xf32>
    tpu.vector_store %arg8[%c0_22, %c0_23], %44 {strides = array<i32>} : memref<8x128xf32, #tpu.memory_space<vmem>>, vector<8x128xf32>,
    %c1_i32 = arith.constant 1 : i32
    %c8_i32_24 = arith.constant 8 : i32
    %46 = arith.muli %c1_i32, %c8_i32_24 : i32
    %47 = tpu.assume_multiple %46, 8 : i32
    %48 = arith.index_cast %47 : i32 to index
    %c0_25 = arith.constant 0 : index
    %49 = vector.load %arg10[%48, %c0_25] : memref<64x512xf32, #tpu.memory_space<vmem>>, vector<8x512xf32>
    %c0_26 = arith.constant 0 : index
    %c0_27 = arith.constant 0 : index
    %50 = vector.load %arg8[%c0_26, %c0_27] : memref<8x128xf32, #tpu.memory_space<vmem>>, vector<8x128xf32>
    %c0_28 = arith.constant 0 : index
    %c0_29 = arith.constant 0 : index
    %51 = vector.load %arg9[%c0_28, %c0_29] : memref<8x128xf32, #tpu.memory_space<vmem>>, vector<8x128xf32>
    %c0_30 = arith.constant 0 : index
    %c0_31 = arith.constant 0 : index
    %52 = vector.load %arg3[%c0_30, %c0_31] : memref<128x512xf32, #tpu.memory_space<vmem>>, vector<128x512xf32>
    %cst_32 = arith.constant dense<0.000000e+00> : vector<8x512xf32>
    %53 = tpu.matmul %50, %52, %cst_32 {dimension_numbers = #tpu.dot_dimension_numbers<[1], [0], [0], [1], [0, 0, 1, 1], [], []>} : vector<8x128xf32>, vector<128x512xf32>, vector<8x512xf32> -> vector<8x512xf32>
    %54 = arith.addf %49, %53 : vector<8x512xf32>
    %55 = vector.extract_strided_slice %54 {offsets = [0, 0], sizes = [8, 128], strides = [1, 1]} : vector<8x512xf32> to vector<8x128xf32>
    %56 = arith.negf %55 : vector<8x128xf32>
    %57 = math.exp %56 : vector<8x128xf32>
    %cst_33 = arith.constant 1.000000e+00 : f32
    %58 = vector.broadcast %cst_33 : f32 to vector<8x128xf32>
    %59 = arith.addf %58, %57 : vector<8x128xf32>
    %60 = arith.divf %58, %59 : vector<8x128xf32>
    %61 = vector.extract_strided_slice %54 {offsets = [0, 128], sizes = [8, 128], strides = [1, 1]} : vector<8x512xf32> to vector<8x128xf32>
    %62 = arith.negf %61 : vector<8x128xf32>
    %63 = math.exp %62 : vector<8x128xf32>
    %cst_34 = arith.constant 1.000000e+00 : f32
    %64 = vector.broadcast %cst_34 : f32 to vector<8x128xf32>
    %65 = arith.addf %64, %63 : vector<8x128xf32>
    %66 = arith.divf %64, %65 : vector<8x128xf32>
    %67 = vector.extract_strided_slice %54 {offsets = [0, 256], sizes = [8, 128], strides = [1, 1]} : vector<8x512xf32> to vector<8x128xf32>
    %68 = math.tanh %67 : vector<8x128xf32>
    %69 = vector.extract_strided_slice %54 {offsets = [0, 384], sizes = [8, 128], strides = [1, 1]} : vector<8x512xf32> to vector<8x128xf32>
    %70 = arith.negf %69 : vector<8x128xf32>
    %71 = math.exp %70 : vector<8x128xf32>
    %cst_35 = arith.constant 1.000000e+00 : f32
    %72 = vector.broadcast %cst_35 : f32 to vector<8x128xf32>
    %73 = arith.addf %72, %71 : vector<8x128xf32>
    %74 = arith.divf %72, %73 : vector<8x128xf32>
    %75 = arith.mulf %66, %51 : vector<8x128xf32>
    %76 = arith.mulf %60, %68 : vector<8x128xf32>
    %77 = arith.addf %75, %76 : vector<8x128xf32>
    %c0_36 = arith.constant 0 : index
    %c0_37 = arith.constant 0 : index
    %78 = vector.load %arg9[%c0_36, %c0_37] : memref<8x128xf32, #tpu.memory_space<vmem>>, vector<8x128xf32>
    tpu.vector_store %arg9[%c0_36, %c0_37], %77 {strides = array<i32>} : memref<8x128xf32, #tpu.memory_space<vmem>>, vector<8x128xf32>,
    %79 = math.tanh %77 : vector<8x128xf32>
    %80 = arith.mulf %74, %79 : vector<8x128xf32>
    %c0_38 = arith.constant 0 : index
    %c0_39 = arith.constant 0 : index
    %81 = vector.load %arg8[%c0_38, %c0_39] : memref<8x128xf32, #tpu.memory_space<vmem>>, vector<8x128xf32>
    tpu.vector_store %arg8[%c0_38, %c0_39], %80 {strides = array<i32>} : memref<8x128xf32, #tpu.memory_space<vmem>>, vector<8x128xf32>,
    %c2_i32 = arith.constant 2 : i32
    %c8_i32_40 = arith.constant 8 : i32
    %82 = arith.muli %c2_i32, %c8_i32_40 : i32
    %83 = tpu.assume_multiple %82, 8 : i32
    %84 = arith.index_cast %83 : i32 to index
    %c0_41 = arith.constant 0 : index
    %85 = vector.load %arg10[%84, %c0_41] : memref<64x512xf32, #tpu.memory_space<vmem>>, vector<8x512xf32>
    %c0_42 = arith.constant 0 : index
    %c0_43 = arith.constant 0 : index
    %86 = vector.load %arg8[%c0_42, %c0_43] : memref<8x128xf32, #tpu.memory_space<vmem>>, vector<8x128xf32>
    %c0_44 = arith.constant 0 : index
    %c0_45 = arith.constant 0 : index
    %87 = vector.load %arg9[%c0_44, %c0_45] : memref<8x128xf32, #tpu.memory_space<vmem>>, vector<8x128xf32>
    %c0_46 = arith.constant 0 : index
    %c0_47 = arith.constant 0 : index
    %88 = vector.load %arg3[%c0_46, %c0_47] : memref<128x512xf32, #tpu.memory_space<vmem>>, vector<128x512xf32>
    %cst_48 = arith.constant dense<0.000000e+00> : vector<8x512xf32>
    %89 = tpu.matmul %86, %88, %cst_48 {dimension_numbers = #tpu.dot_dimension_numbers<[1], [0], [0], [1], [0, 0, 1, 1], [], []>} : vector<8x128xf32>, vector<128x512xf32>, vector<8x512xf32> -> vector<8x512xf32>
    %90 = arith.addf %85, %89 : vector<8x512xf32>
    %91 = vector.extract_strided_slice %90 {offsets = [0, 0], sizes = [8, 128], strides = [1, 1]} : vector<8x512xf32> to vector<8x128xf32>
    %92 = arith.negf %91 : vector<8x128xf32>
    %93 = math.exp %92 : vector<8x128xf32>
    %cst_49 = arith.constant 1.000000e+00 : f32
    %94 = vector.broadcast %cst_49 : f32 to vector<8x128xf32>
    %95 = arith.addf %94, %93 : vector<8x128xf32>
    %96 = arith.divf %94, %95 : vector<8x128xf32>
    %97 = vector.extract_strided_slice %90 {offsets = [0, 128], sizes = [8, 128], strides = [1, 1]} : vector<8x512xf32> to vector<8x128xf32>
    %98 = arith.negf %97 : vector<8x128xf32>
    %99 = math.exp %98 : vector<8x128xf32>
    %cst_50 = arith.constant 1.000000e+00 : f32
    %100 = vector.broadcast %cst_50 : f32 to vector<8x128xf32>
    %101 = arith.addf %100, %99 : vector<8x128xf32>
    %102 = arith.divf %100, %101 : vector<8x128xf32>
    %103 = vector.extract_strided_slice %90 {offsets = [0, 256], sizes = [8, 128], strides = [1, 1]} : vector<8x512xf32> to vector<8x128xf32>
    %104 = math.tanh %103 : vector<8x128xf32>
    %105 = vector.extract_strided_slice %90 {offsets = [0, 384], sizes = [8, 128], strides = [1, 1]} : vector<8x512xf32> to vector<8x128xf32>
    %106 = arith.negf %105 : vector<8x128xf32>
    %107 = math.exp %106 : vector<8x128xf32>
    %cst_51 = arith.constant 1.000000e+00 : f32
    %108 = vector.broadcast %cst_51 : f32 to vector<8x128xf32>
    %109 = arith.addf %108, %107 : vector<8x128xf32>
    %110 = arith.divf %108, %109 : vector<8x128xf32>
    %111 = arith.mulf %102, %87 : vector<8x128xf32>
    %112 = arith.mulf %96, %104 : vector<8x128xf32>
    %113 = arith.addf %111, %112 : vector<8x128xf32>
    %c0_52 = arith.constant 0 : index
    %c0_53 = arith.constant 0 : index
    %114 = vector.load %arg9[%c0_52, %c0_53] : memref<8x128xf32, #tpu.memory_space<vmem>>, vector<8x128xf32>
    tpu.vector_store %arg9[%c0_52, %c0_53], %113 {strides = array<i32>} : memref<8x128xf32, #tpu.memory_space<vmem>>, vector<8x128xf32>,
    %115 = math.tanh %113 : vector<8x128xf32>
    %116 = arith.mulf %110, %115 : vector<8x128xf32>
    %c0_54 = arith.constant 0 : index
    %c0_55 = arith.constant 0 : index
    %117 = vector.load %arg8[%c0_54, %c0_55] : memref<8x128xf32, #tpu.memory_space<vmem>>, vector<8x128xf32>
    tpu.vector_store %arg8[%c0_54, %c0_55], %116 {strides = array<i32>} : memref<8x128xf32, #tpu.memory_space<vmem>>, vector<8x128xf32>,
    %c3_i32 = arith.constant 3 : i32
    %c8_i32_56 = arith.constant 8 : i32
    %118 = arith.muli %c3_i32, %c8_i32_56 : i32
    %119 = tpu.assume_multiple %118, 8 : i32
    %120 = arith.index_cast %119 : i32 to index
    %c0_57 = arith.constant 0 : index
    %121 = vector.load %arg10[%120, %c0_57] : memref<64x512xf32, #tpu.memory_space<vmem>>, vector<8x512xf32>
    %c0_58 = arith.constant 0 : index
    %c0_59 = arith.constant 0 : index
    %122 = vector.load %arg8[%c0_58, %c0_59] : memref<8x128xf32, #tpu.memory_space<vmem>>, vector<8x128xf32>
    %c0_60 = arith.constant 0 : index
    %c0_61 = arith.constant 0 : index
    %123 = vector.load %arg9[%c0_60, %c0_61] : memref<8x128xf32, #tpu.memory_space<vmem>>, vector<8x128xf32>
    %c0_62 = arith.constant 0 : index
    %c0_63 = arith.constant 0 : index
    %124 = vector.load %arg3[%c0_62, %c0_63] : memref<128x512xf32, #tpu.memory_space<vmem>>, vector<128x512xf32>
    %cst_64 = arith.constant dense<0.000000e+00> : vector<8x512xf32>
    %125 = tpu.matmul %122, %124, %cst_64 {dimension_numbers = #tpu.dot_dimension_numbers<[1], [0], [0], [1], [0, 0, 1, 1], [], []>} : vector<8x128xf32>, vector<128x512xf32>, vector<8x512xf32> -> vector<8x512xf32>
    %126 = arith.addf %121, %125 : vector<8x512xf32>
    %127 = vector.extract_strided_slice %126 {offsets = [0, 0], sizes = [8, 128], strides = [1, 1]} : vector<8x512xf32> to vector<8x128xf32>
    %128 = arith.negf %127 : vector<8x128xf32>
    %129 = math.exp %128 : vector<8x128xf32>
    %cst_65 = arith.constant 1.000000e+00 : f32
    %130 = vector.broadcast %cst_65 : f32 to vector<8x128xf32>
    %131 = arith.addf %130, %129 : vector<8x128xf32>
    %132 = arith.divf %130, %131 : vector<8x128xf32>
    %133 = vector.extract_strided_slice %126 {offsets = [0, 128], sizes = [8, 128], strides = [1, 1]} : vector<8x512xf32> to vector<8x128xf32>
    %134 = arith.negf %133 : vector<8x128xf32>
    %135 = math.exp %134 : vector<8x128xf32>
    %cst_66 = arith.constant 1.000000e+00 : f32
    %136 = vector.broadcast %cst_66 : f32 to vector<8x128xf32>
    %137 = arith.addf %136, %135 : vector<8x128xf32>
    %138 = arith.divf %136, %137 : vector<8x128xf32>
    %139 = vector.extract_strided_slice %126 {offsets = [0, 256], sizes = [8, 128], strides = [1, 1]} : vector<8x512xf32> to vector<8x128xf32>
    %140 = math.tanh %139 : vector<8x128xf32>
    %141 = vector.extract_strided_slice %126 {offsets = [0, 384], sizes = [8, 128], strides = [1, 1]} : vector<8x512xf32> to vector<8x128xf32>
    %142 = arith.negf %141 : vector<8x128xf32>
    %143 = math.exp %142 : vector<8x128xf32>
    %cst_67 = arith.constant 1.000000e+00 : f32
    %144 = vector.broadcast %cst_67 : f32 to vector<8x128xf32>
    %145 = arith.addf %144, %143 : vector<8x128xf32>
    %146 = arith.divf %144, %145 : vector<8x128xf32>
    %147 = arith.mulf %138, %123 : vector<8x128xf32>
    %148 = arith.mulf %132, %140 : vector<8x128xf32>
    %149 = arith.addf %147, %148 : vector<8x128xf32>
    %c0_68 = arith.constant 0 : index
    %c0_69 = arith.constant 0 : index
    %150 = vector.load %arg9[%c0_68, %c0_69] : memref<8x128xf32, #tpu.memory_space<vmem>>, vector<8x128xf32>
    tpu.vector_store %arg9[%c0_68, %c0_69], %149 {strides = array<i32>} : memref<8x128xf32, #tpu.memory_space<vmem>>, vector<8x128xf32>,
    %151 = math.tanh %149 : vector<8x128xf32>
    %152 = arith.mulf %146, %151 : vector<8x128xf32>
    %c0_70 = arith.constant 0 : index
    %c0_71 = arith.constant 0 : index
    %153 = vector.load %arg8[%c0_70, %c0_71] : memref<8x128xf32, #tpu.memory_space<vmem>>, vector<8x128xf32>
    tpu.vector_store %arg8[%c0_70, %c0_71], %152 {strides = array<i32>} : memref<8x128xf32, #tpu.memory_space<vmem>>, vector<8x128xf32>,
    %c4_i32 = arith.constant 4 : i32
    %c8_i32_72 = arith.constant 8 : i32
    %154 = arith.muli %c4_i32, %c8_i32_72 : i32
    %155 = tpu.assume_multiple %154, 8 : i32
    %156 = arith.index_cast %155 : i32 to index
    %c0_73 = arith.constant 0 : index
    %157 = vector.load %arg10[%156, %c0_73] : memref<64x512xf32, #tpu.memory_space<vmem>>, vector<8x512xf32>
    %c0_74 = arith.constant 0 : index
    %c0_75 = arith.constant 0 : index
    %158 = vector.load %arg8[%c0_74, %c0_75] : memref<8x128xf32, #tpu.memory_space<vmem>>, vector<8x128xf32>
    %c0_76 = arith.constant 0 : index
    %c0_77 = arith.constant 0 : index
    %159 = vector.load %arg9[%c0_76, %c0_77] : memref<8x128xf32, #tpu.memory_space<vmem>>, vector<8x128xf32>
    %c0_78 = arith.constant 0 : index
    %c0_79 = arith.constant 0 : index
    %160 = vector.load %arg3[%c0_78, %c0_79] : memref<128x512xf32, #tpu.memory_space<vmem>>, vector<128x512xf32>
    %cst_80 = arith.constant dense<0.000000e+00> : vector<8x512xf32>
    %161 = tpu.matmul %158, %160, %cst_80 {dimension_numbers = #tpu.dot_dimension_numbers<[1], [0], [0], [1], [0, 0, 1, 1], [], []>} : vector<8x128xf32>, vector<128x512xf32>, vector<8x512xf32> -> vector<8x512xf32>
    %162 = arith.addf %157, %161 : vector<8x512xf32>
    %163 = vector.extract_strided_slice %162 {offsets = [0, 0], sizes = [8, 128], strides = [1, 1]} : vector<8x512xf32> to vector<8x128xf32>
    %164 = arith.negf %163 : vector<8x128xf32>
    %165 = math.exp %164 : vector<8x128xf32>
    %cst_81 = arith.constant 1.000000e+00 : f32
    %166 = vector.broadcast %cst_81 : f32 to vector<8x128xf32>
    %167 = arith.addf %166, %165 : vector<8x128xf32>
    %168 = arith.divf %166, %167 : vector<8x128xf32>
    %169 = vector.extract_strided_slice %162 {offsets = [0, 128], sizes = [8, 128], strides = [1, 1]} : vector<8x512xf32> to vector<8x128xf32>
    %170 = arith.negf %169 : vector<8x128xf32>
    %171 = math.exp %170 : vector<8x128xf32>
    %cst_82 = arith.constant 1.000000e+00 : f32
    %172 = vector.broadcast %cst_82 : f32 to vector<8x128xf32>
    %173 = arith.addf %172, %171 : vector<8x128xf32>
    %174 = arith.divf %172, %173 : vector<8x128xf32>
    %175 = vector.extract_strided_slice %162 {offsets = [0, 256], sizes = [8, 128], strides = [1, 1]} : vector<8x512xf32> to vector<8x128xf32>
    %176 = math.tanh %175 : vector<8x128xf32>
    %177 = vector.extract_strided_slice %162 {offsets = [0, 384], sizes = [8, 128], strides = [1, 1]} : vector<8x512xf32> to vector<8x128xf32>
    %178 = arith.negf %177 : vector<8x128xf32>
    %179 = math.exp %178 : vector<8x128xf32>
    %cst_83 = arith.constant 1.000000e+00 : f32
    %180 = vector.broadcast %cst_83 : f32 to vector<8x128xf32>
    %181 = arith.addf %180, %179 : vector<8x128xf32>
    %182 = arith.divf %180, %181 : vector<8x128xf32>
    %183 = arith.mulf %174, %159 : vector<8x128xf32>
    %184 = arith.mulf %168, %176 : vector<8x128xf32>
    %185 = arith.addf %183, %184 : vector<8x128xf32>
    %c0_84 = arith.constant 0 : index
    %c0_85 = arith.constant 0 : index
    %186 = vector.load %arg9[%c0_84, %c0_85] : memref<8x128xf32, #tpu.memory_space<vmem>>, vector<8x128xf32>
    tpu.vector_store %arg9[%c0_84, %c0_85], %185 {strides = array<i32>} : memref<8x128xf32, #tpu.memory_space<vmem>>, vector<8x128xf32>,
    %187 = math.tanh %185 : vector<8x128xf32>
    %188 = arith.mulf %182, %187 : vector<8x128xf32>
    %c0_86 = arith.constant 0 : index
    %c0_87 = arith.constant 0 : index
    %189 = vector.load %arg8[%c0_86, %c0_87] : memref<8x128xf32, #tpu.memory_space<vmem>>, vector<8x128xf32>
    tpu.vector_store %arg8[%c0_86, %c0_87], %188 {strides = array<i32>} : memref<8x128xf32, #tpu.memory_space<vmem>>, vector<8x128xf32>,
    %c5_i32 = arith.constant 5 : i32
    %c8_i32_88 = arith.constant 8 : i32
    %190 = arith.muli %c5_i32, %c8_i32_88 : i32
    %191 = tpu.assume_multiple %190, 8 : i32
    %192 = arith.index_cast %191 : i32 to index
    %c0_89 = arith.constant 0 : index
    %193 = vector.load %arg10[%192, %c0_89] : memref<64x512xf32, #tpu.memory_space<vmem>>, vector<8x512xf32>
    %c0_90 = arith.constant 0 : index
    %c0_91 = arith.constant 0 : index
    %194 = vector.load %arg8[%c0_90, %c0_91] : memref<8x128xf32, #tpu.memory_space<vmem>>, vector<8x128xf32>
    %c0_92 = arith.constant 0 : index
    %c0_93 = arith.constant 0 : index
    %195 = vector.load %arg9[%c0_92, %c0_93] : memref<8x128xf32, #tpu.memory_space<vmem>>, vector<8x128xf32>
    %c0_94 = arith.constant 0 : index
    %c0_95 = arith.constant 0 : index
    %196 = vector.load %arg3[%c0_94, %c0_95] : memref<128x512xf32, #tpu.memory_space<vmem>>, vector<128x512xf32>
    %cst_96 = arith.constant dense<0.000000e+00> : vector<8x512xf32>
    %197 = tpu.matmul %194, %196, %cst_96 {dimension_numbers = #tpu.dot_dimension_numbers<[1], [0], [0], [1], [0, 0, 1, 1], [], []>} : vector<8x128xf32>, vector<128x512xf32>, vector<8x512xf32> -> vector<8x512xf32>
    %198 = arith.addf %193, %197 : vector<8x512xf32>
    %199 = vector.extract_strided_slice %198 {offsets = [0, 0], sizes = [8, 128], strides = [1, 1]} : vector<8x512xf32> to vector<8x128xf32>
    %200 = arith.negf %199 : vector<8x128xf32>
    %201 = math.exp %200 : vector<8x128xf32>
    %cst_97 = arith.constant 1.000000e+00 : f32
    %202 = vector.broadcast %cst_97 : f32 to vector<8x128xf32>
    %203 = arith.addf %202, %201 : vector<8x128xf32>
    %204 = arith.divf %202, %203 : vector<8x128xf32>
    %205 = vector.extract_strided_slice %198 {offsets = [0, 128], sizes = [8, 128], strides = [1, 1]} : vector<8x512xf32> to vector<8x128xf32>
    %206 = arith.negf %205 : vector<8x128xf32>
    %207 = math.exp %206 : vector<8x128xf32>
    %cst_98 = arith.constant 1.000000e+00 : f32
    %208 = vector.broadcast %cst_98 : f32 to vector<8x128xf32>
    %209 = arith.addf %208, %207 : vector<8x128xf32>
    %210 = arith.divf %208, %209 : vector<8x128xf32>
    %211 = vector.extract_strided_slice %198 {offsets = [0, 256], sizes = [8, 128], strides = [1, 1]} : vector<8x512xf32> to vector<8x128xf32>
    %212 = math.tanh %211 : vector<8x128xf32>
    %213 = vector.extract_strided_slice %198 {offsets = [0, 384], sizes = [8, 128], strides = [1, 1]} : vector<8x512xf32> to vector<8x128xf32>
    %214 = arith.negf %213 : vector<8x128xf32>
    %215 = math.exp %214 : vector<8x128xf32>
    %cst_99 = arith.constant 1.000000e+00 : f32
    %216 = vector.broadcast %cst_99 : f32 to vector<8x128xf32>
    %217 = arith.addf %216, %215 : vector<8x128xf32>
    %218 = arith.divf %216, %217 : vector<8x128xf32>
    %219 = arith.mulf %210, %195 : vector<8x128xf32>
    %220 = arith.mulf %204, %212 : vector<8x128xf32>
    %221 = arith.addf %219, %220 : vector<8x128xf32>
    %c0_100 = arith.constant 0 : index
    %c0_101 = arith.constant 0 : index
    %222 = vector.load %arg9[%c0_100, %c0_101] : memref<8x128xf32, #tpu.memory_space<vmem>>, vector<8x128xf32>
    tpu.vector_store %arg9[%c0_100, %c0_101], %221 {strides = array<i32>} : memref<8x128xf32, #tpu.memory_space<vmem>>, vector<8x128xf32>,
    %223 = math.tanh %221 : vector<8x128xf32>
    %224 = arith.mulf %218, %223 : vector<8x128xf32>
    %c0_102 = arith.constant 0 : index
    %c0_103 = arith.constant 0 : index
    %225 = vector.load %arg8[%c0_102, %c0_103] : memref<8x128xf32, #tpu.memory_space<vmem>>, vector<8x128xf32>
    tpu.vector_store %arg8[%c0_102, %c0_103], %224 {strides = array<i32>} : memref<8x128xf32, #tpu.memory_space<vmem>>, vector<8x128xf32>,
    %c6_i32 = arith.constant 6 : i32
    %c8_i32_104 = arith.constant 8 : i32
    %226 = arith.muli %c6_i32, %c8_i32_104 : i32
    %227 = tpu.assume_multiple %226, 8 : i32
    %228 = arith.index_cast %227 : i32 to index
    %c0_105 = arith.constant 0 : index
    %229 = vector.load %arg10[%228, %c0_105] : memref<64x512xf32, #tpu.memory_space<vmem>>, vector<8x512xf32>
    %c0_106 = arith.constant 0 : index
    %c0_107 = arith.constant 0 : index
    %230 = vector.load %arg8[%c0_106, %c0_107] : memref<8x128xf32, #tpu.memory_space<vmem>>, vector<8x128xf32>
    %c0_108 = arith.constant 0 : index
    %c0_109 = arith.constant 0 : index
    %231 = vector.load %arg9[%c0_108, %c0_109] : memref<8x128xf32, #tpu.memory_space<vmem>>, vector<8x128xf32>
    %c0_110 = arith.constant 0 : index
    %c0_111 = arith.constant 0 : index
    %232 = vector.load %arg3[%c0_110, %c0_111] : memref<128x512xf32, #tpu.memory_space<vmem>>, vector<128x512xf32>
    %cst_112 = arith.constant dense<0.000000e+00> : vector<8x512xf32>
    %233 = tpu.matmul %230, %232, %cst_112 {dimension_numbers = #tpu.dot_dimension_numbers<[1], [0], [0], [1], [0, 0, 1, 1], [], []>} : vector<8x128xf32>, vector<128x512xf32>, vector<8x512xf32> -> vector<8x512xf32>
    %234 = arith.addf %229, %233 : vector<8x512xf32>
    %235 = vector.extract_strided_slice %234 {offsets = [0, 0], sizes = [8, 128], strides = [1, 1]} : vector<8x512xf32> to vector<8x128xf32>
    %236 = arith.negf %235 : vector<8x128xf32>
    %237 = math.exp %236 : vector<8x128xf32>
    %cst_113 = arith.constant 1.000000e+00 : f32
    %238 = vector.broadcast %cst_113 : f32 to vector<8x128xf32>
    %239 = arith.addf %238, %237 : vector<8x128xf32>
    %240 = arith.divf %238, %239 : vector<8x128xf32>
    %241 = vector.extract_strided_slice %234 {offsets = [0, 128], sizes = [8, 128], strides = [1, 1]} : vector<8x512xf32> to vector<8x128xf32>
    %242 = arith.negf %241 : vector<8x128xf32>
    %243 = math.exp %242 : vector<8x128xf32>
    %cst_114 = arith.constant 1.000000e+00 : f32
    %244 = vector.broadcast %cst_114 : f32 to vector<8x128xf32>
    %245 = arith.addf %244, %243 : vector<8x128xf32>
    %246 = arith.divf %244, %245 : vector<8x128xf32>
    %247 = vector.extract_strided_slice %234 {offsets = [0, 256], sizes = [8, 128], strides = [1, 1]} : vector<8x512xf32> to vector<8x128xf32>
    %248 = math.tanh %247 : vector<8x128xf32>
    %249 = vector.extract_strided_slice %234 {offsets = [0, 384], sizes = [8, 128], strides = [1, 1]} : vector<8x512xf32> to vector<8x128xf32>
    %250 = arith.negf %249 : vector<8x128xf32>
    %251 = math.exp %250 : vector<8x128xf32>
    %cst_115 = arith.constant 1.000000e+00 : f32
    %252 = vector.broadcast %cst_115 : f32 to vector<8x128xf32>
    %253 = arith.addf %252, %251 : vector<8x128xf32>
    %254 = arith.divf %252, %253 : vector<8x128xf32>
    %255 = arith.mulf %246, %231 : vector<8x128xf32>
    %256 = arith.mulf %240, %248 : vector<8x128xf32>
    %257 = arith.addf %255, %256 : vector<8x128xf32>
    %c0_116 = arith.constant 0 : index
    %c0_117 = arith.constant 0 : index
    %258 = vector.load %arg9[%c0_116, %c0_117] : memref<8x128xf32, #tpu.memory_space<vmem>>, vector<8x128xf32>
    tpu.vector_store %arg9[%c0_116, %c0_117], %257 {strides = array<i32>} : memref<8x128xf32, #tpu.memory_space<vmem>>, vector<8x128xf32>,
    %259 = math.tanh %257 : vector<8x128xf32>
    %260 = arith.mulf %254, %259 : vector<8x128xf32>
    %c0_118 = arith.constant 0 : index
    %c0_119 = arith.constant 0 : index
    %261 = vector.load %arg8[%c0_118, %c0_119] : memref<8x128xf32, #tpu.memory_space<vmem>>, vector<8x128xf32>
    tpu.vector_store %arg8[%c0_118, %c0_119], %260 {strides = array<i32>} : memref<8x128xf32, #tpu.memory_space<vmem>>, vector<8x128xf32>,
    %c7_i32 = arith.constant 7 : i32
    %c8_i32_120 = arith.constant 8 : i32
    %262 = arith.muli %c7_i32, %c8_i32_120 : i32
    %263 = tpu.assume_multiple %262, 8 : i32
    %264 = arith.index_cast %263 : i32 to index
    %c0_121 = arith.constant 0 : index
    %265 = vector.load %arg10[%264, %c0_121] : memref<64x512xf32, #tpu.memory_space<vmem>>, vector<8x512xf32>
    %c0_122 = arith.constant 0 : index
    %c0_123 = arith.constant 0 : index
    %266 = vector.load %arg8[%c0_122, %c0_123] : memref<8x128xf32, #tpu.memory_space<vmem>>, vector<8x128xf32>
    %c0_124 = arith.constant 0 : index
    %c0_125 = arith.constant 0 : index
    %267 = vector.load %arg9[%c0_124, %c0_125] : memref<8x128xf32, #tpu.memory_space<vmem>>, vector<8x128xf32>
    %c0_126 = arith.constant 0 : index
    %c0_127 = arith.constant 0 : index
    %268 = vector.load %arg3[%c0_126, %c0_127] : memref<128x512xf32, #tpu.memory_space<vmem>>, vector<128x512xf32>
    %cst_128 = arith.constant dense<0.000000e+00> : vector<8x512xf32>
    %269 = tpu.matmul %266, %268, %cst_128 {dimension_numbers = #tpu.dot_dimension_numbers<[1], [0], [0], [1], [0, 0, 1, 1], [], []>} : vector<8x128xf32>, vector<128x512xf32>, vector<8x512xf32> -> vector<8x512xf32>
    %270 = arith.addf %265, %269 : vector<8x512xf32>
    %271 = vector.extract_strided_slice %270 {offsets = [0, 0], sizes = [8, 128], strides = [1, 1]} : vector<8x512xf32> to vector<8x128xf32>
    %272 = arith.negf %271 : vector<8x128xf32>
    %273 = math.exp %272 : vector<8x128xf32>
    %cst_129 = arith.constant 1.000000e+00 : f32
    %274 = vector.broadcast %cst_129 : f32 to vector<8x128xf32>
    %275 = arith.addf %274, %273 : vector<8x128xf32>
    %276 = arith.divf %274, %275 : vector<8x128xf32>
    %277 = vector.extract_strided_slice %270 {offsets = [0, 128], sizes = [8, 128], strides = [1, 1]} : vector<8x512xf32> to vector<8x128xf32>
    %278 = arith.negf %277 : vector<8x128xf32>
    %279 = math.exp %278 : vector<8x128xf32>
    %cst_130 = arith.constant 1.000000e+00 : f32
    %280 = vector.broadcast %cst_130 : f32 to vector<8x128xf32>
    %281 = arith.addf %280, %279 : vector<8x128xf32>
    %282 = arith.divf %280, %281 : vector<8x128xf32>
    %283 = vector.extract_strided_slice %270 {offsets = [0, 256], sizes = [8, 128], strides = [1, 1]} : vector<8x512xf32> to vector<8x128xf32>
    %284 = math.tanh %283 : vector<8x128xf32>
    %285 = vector.extract_strided_slice %270 {offsets = [0, 384], sizes = [8, 128], strides = [1, 1]} : vector<8x512xf32> to vector<8x128xf32>
    %286 = arith.negf %285 : vector<8x128xf32>
    %287 = math.exp %286 : vector<8x128xf32>
    %cst_131 = arith.constant 1.000000e+00 : f32
    %288 = vector.broadcast %cst_131 : f32 to vector<8x128xf32>
    %289 = arith.addf %288, %287 : vector<8x128xf32>
    %290 = arith.divf %288, %289 : vector<8x128xf32>
    %291 = arith.mulf %282, %267 : vector<8x128xf32>
    %292 = arith.mulf %276, %284 : vector<8x128xf32>
    %293 = arith.addf %291, %292 : vector<8x128xf32>
    %c0_132 = arith.constant 0 : index
    %c0_133 = arith.constant 0 : index
    %294 = vector.load %arg9[%c0_132, %c0_133] : memref<8x128xf32, #tpu.memory_space<vmem>>, vector<8x128xf32>
    tpu.vector_store %arg9[%c0_132, %c0_133], %293 {strides = array<i32>} : memref<8x128xf32, #tpu.memory_space<vmem>>, vector<8x128xf32>,
    %295 = math.tanh %293 : vector<8x128xf32>
    %296 = arith.mulf %290, %295 : vector<8x128xf32>
    %c0_134 = arith.constant 0 : index
    %c0_135 = arith.constant 0 : index
    %297 = vector.load %arg8[%c0_134, %c0_135] : memref<8x128xf32, #tpu.memory_space<vmem>>, vector<8x128xf32>
    tpu.vector_store %arg8[%c0_134, %c0_135], %296 {strides = array<i32>} : memref<8x128xf32, #tpu.memory_space<vmem>>, vector<8x128xf32>,
    %c8_i32_136 = arith.constant 8 : i32
    %c0_i32_137 = arith.constant 0 : i32
    %298 = arith.cmpi eq, %arg0, %c0_i32_137 : i32
    %299 = arith.extui %298 : i1 to i32
    %c0_i32_138 = arith.constant 0 : i32
    %300 = arith.cmpi ne, %299, %c0_i32_138 : i32
    scf.if %300 {
      %c0_139 = arith.constant 0 : index
      %c0_140 = arith.constant 0 : index
      %301 = vector.load %arg8[%c0_139, %c0_140] : memref<8x128xf32, #tpu.memory_space<vmem>>, vector<8x128xf32>
      %c0_141 = arith.constant 0 : index
      %c0_142 = arith.constant 0 : index
      %302 = vector.load %arg5[%c0_141, %c0_142] : memref<128x128xf32, #tpu.memory_space<vmem>>, vector<128x128xf32>
      %cst_143 = arith.constant dense<0.000000e+00> : vector<8x128xf32>
      %303 = tpu.matmul %301, %302, %cst_143 {dimension_numbers = #tpu.dot_dimension_numbers<[1], [0], [0], [1], [0, 0, 1, 1], [], []>} : vector<8x128xf32>, vector<128x128xf32>, vector<8x128xf32> -> vector<8x128xf32>
      %c0_144 = arith.constant 0 : index
      %c0_145 = arith.constant 0 : index
      %304 = vector.load %arg6[%c0_144, %c0_145] : memref<1x128xf32, #tpu.memory_space<vmem>>, vector<1x128xf32>
      %305 = vector.broadcast %304 : vector<1x128xf32> to vector<8x128xf32>
      %306 = arith.addf %303, %305 : vector<8x128xf32>
      %c0_146 = arith.constant 0 : index
      %c0_147 = arith.constant 0 : index
      %307 = vector.load %arg7[%c0_146, %c0_147] : memref<8x128xf32, #tpu.memory_space<vmem>>, vector<8x128xf32>
      tpu.vector_store %arg7[%c0_146, %c0_147], %306 {strides = array<i32>} : memref<8x128xf32, #tpu.memory_space<vmem>>, vector<8x128xf32>,
    } else {
    }
    return
  }
  func.func @transform_0(%arg0: i32) -> (i32, i32) {
    %c0_i32 = arith.constant 0 : i32
    %c0_i32_0 = arith.constant 0 : i32
    return %arg0, %c0_i32 : i32, i32
  }
  func.func @transform_1(%arg0: i32) -> (i32, i32) {
    %c0_i32 = arith.constant 0 : i32
    %c0_i32_0 = arith.constant 0 : i32
    %c0_i32_1 = arith.constant 0 : i32
    return %c0_i32, %c0_i32_0 : i32, i32
  }
  func.func @transform_2(%arg0: i32) -> (i32, i32) {
    %c0_i32 = arith.constant 0 : i32
    %c0_i32_0 = arith.constant 0 : i32
    %c0_i32_1 = arith.constant 0 : i32
    return %c0_i32, %c0_i32_0 : i32, i32
  }
  func.func @transform_3(%arg0: i32) -> (i32, i32) {
    %c0_i32 = arith.constant 0 : i32
    %c0_i32_0 = arith.constant 0 : i32
    %c0_i32_1 = arith.constant 0 : i32
    return %c0_i32, %c0_i32_0 : i32, i32
  }
  func.func @transform_4(%arg0: i32) -> (i32, i32) {
    %c0_i32 = arith.constant 0 : i32
    %c0_i32_0 = arith.constant 0 : i32
    %c0_i32_1 = arith.constant 0 : i32
    return %c0_i32, %c0_i32_0 : i32, i32
  }
  func.func @transform_5(%arg0: i32) -> (i32, i32) {
    %c0_i32 = arith.constant 0 : i32
    %c0_i32_0 = arith.constant 0 : i32
    %c0_i32_1 = arith.constant 0 : i32
    return %c0_i32, %c0_i32_0 : i32, i32
  }
  func.func @transform_6(%arg0: i32) -> (i32, i32) {
    %c0_i32 = arith.constant 0 : i32
    %c0_i32_0 = arith.constant 0 : i32
    %c0_i32_1 = arith.constant 0 : i32
    return %c0_i32, %c0_i32_0 : i32, i32
  }
}

</mosaic_0001>

<llo_original>
// kernel: tpu_custom_call.1
$region0: #{tpu_custom_call.1}
  #allocation0 [shape = 'u32[]', space=smem, size = 0x4, offset = 0x4, fixed_abs, tag = 'smem constant byte address 0x4 - core index']
  #allocation1 [shape = 'u32[144,128]{1,0:T(1,128)}', space=vmem, size = 0x12000, scoped, tag = 'internal scratch']
  #allocation2 [shape = 'f32[8,128]{1,0:T(8,128)}', space=vmem, size = 0x1000, scoped, tag = 'scratch operand']
  #allocation3 [shape = 'f32[8,128]{1,0:T(8,128)}', space=vmem, size = 0x1000, scoped, tag = 'scratch operand']
  #allocation4 [shape = 'f32[64,512]{1,0:T(8,128)}', space=vmem, size = 0x20000, scoped, tag = 'scratch operand']
  %s0 = inlined_call_operand.vmem [shape: f32[64,16], index: 0, kind: input, shape index: {}]
  %s1 = inlined_call_operand.vmem [shape: f32[16,512], index: 1, kind: input, shape index: {}]
  %s2 = inlined_call_operand.hbm [shape: f32[128,512], index: 2, kind: input, shape index: {}]
  %s3 = inlined_call_operand.vmem [shape: f32[1,512], index: 3, kind: input, shape index: {}]
  %s4 = inlined_call_operand.hbm [shape: f32[128,128], index: 4, kind: input, shape index: {}]
  %s5 = inlined_call_operand.vmem [shape: f32[1,128], index: 5, kind: input, shape index: {}]
  %s6 = inlined_call_operand.hbm [shape: f32[8,128], index: 6, kind: output, shape index: {}]
  %s7 = sld [smem:[#allocation0]]
  $region50: #{tpu_custom_call.1} parent=0
    _
  %s9 = ssub.s32 1, %s7
  %s10 = scalar_select 0, %s9, %s7
  $region1: #{tpu_custom_call.1} parent=0
    #allocation5 [shape = 'u8[262144]{0}', space=vmem, size = 0x40000, scoped, tag = 'input window, operand 2, single buffered']
    #allocation6 [shape = 's32[1]{0}', space=sflag, size = 0x4, scoped, tag = 'scoped memory for tpu_custom_call.1']
    #allocation7 [shape = 's32[1]{0}', space=sflag, size = 0x4, scoped, tag = 'scoped memory for tpu_custom_call.1']
    #allocation8 [shape = 'u8[65536]{0}', space=vmem, size = 0x10000, scoped, tag = 'input window, operand 4, single buffered']
    #allocation9 [shape = 's32[1]{0}', space=sflag, size = 0x4, scoped, tag = 'scoped memory for tpu_custom_call.1']
    #allocation10 [shape = 'u8[4096]{0}', space=vmem, size = 0x1000, scoped, tag = 'output window, operand 0, single buffered']
    %11 = vsyncpa [#allocation6], 0
    %12 = vsyncpa [#allocation9], 0
    %13 = vsyncpa [#allocation7], 0
    // Predicated region
    $region2: #{tpu_custom_call.1} parent=1 // pred_check
      _
    $region3: #{tpu_custom_call.1} parent=1 // pred_check_branch
      %15 = sbr.rel (0) target = $region5
    $region4: #{tpu_custom_call.1} parent=1 // pred_region
      _
    $region5: #{tpu_custom_call.1} parent=1 // pred_fallthru
      _
    // Predicated region
    $region6: #{tpu_custom_call.1} parent=1 // pred_check
      _
    $region7: #{tpu_custom_call.1} parent=1 // pred_check_branch
      %17 = sbr.rel (0) target = $region9
    $region8: #{tpu_custom_call.1} parent=1 // pred_region
      _
    $region9: #{tpu_custom_call.1} parent=1 // pred_fallthru
      _
    // Predicated region
    $region10: #{tpu_custom_call.1} parent=1 // pred_check
      _
    $region11: #{tpu_custom_call.1} parent=1 // pred_check_branch
      %19 = sbr.rel (0) target = $region13
    $region12: #{tpu_custom_call.1} parent=1 // pred_region
      %s21 = ssub.s32 8192, 8192
      %22 = vsyncadd [#allocation6], %s21
      %s23 = sshll.u32 [#allocation5], 4
      %s24 = int_to_ptr.vmem [resolvable:$true] %s23
      %29 = dma.hbm_to_vmem [thread:$0]  %s2, 8192, %s24, [#allocation6], 512, 512, 32
    $region13: #{tpu_custom_call.1} parent=1 // pred_fallthru
      _
    // Predicated region
    $region14: #{tpu_custom_call.1} parent=1 // pred_check
      _
    $region15: #{tpu_custom_call.1} parent=1 // pred_check_branch
      %31 = sbr.rel (0) target = $region17
    $region16: #{tpu_custom_call.1} parent=1 // pred_region
      _
    $region17: #{tpu_custom_call.1} parent=1 // pred_fallthru
      _
    // Predicated region
    $region18: #{tpu_custom_call.1} parent=1 // pred_check
      _
    $region19: #{tpu_custom_call.1} parent=1 // pred_check_branch
      %33 = sbr.rel (0) target = $region21
    $region20: #{tpu_custom_call.1} parent=1 // pred_region
      %s35 = ssub.s32 2048, 2048
      %36 = vsyncadd [#allocation9], %s35
      %s37 = sshll.u32 [#allocation8], 4
      %s38 = int_to_ptr.vmem [resolvable:$true] %s37
      %43 = dma.hbm_to_vmem [thread:$0]  %s4, 2048, %s38, [#allocation9], 128, 128, 8
    $region21: #{tpu_custom_call.1} parent=1 // pred_fallthru
      _
    // Predicated region
    $region22: #{tpu_custom_call.1} parent=1 // pred_check
      _
    $region23: #{tpu_custom_call.1} parent=1 // pred_check_branch
      %45 = sbr.rel (0) target = $region25
    $region24: #{tpu_custom_call.1} parent=1 // pred_region
      _
    $region25: #{tpu_custom_call.1} parent=1 // pred_fallthru
      _
    // Predicated region
    $region26: #{tpu_custom_call.1} parent=1 // pred_check
      _
    $region27: #{tpu_custom_call.1} parent=1 // pred_check_branch
      %47 = sbr.rel (0) target = $region29
    $region28: #{tpu_custom_call.1} parent=1 // pred_region
      %48 = dma.done [#allocation6], 8192
    $region29: #{tpu_custom_call.1} parent=1 // pred_fallthru
      _
    // Predicated region
    $region30: #{tpu_custom_call.1} parent=1 // pred_check
      _
    $region31: #{tpu_custom_call.1} parent=1 // pred_check_branch
      %50 = sbr.rel (0) target = $region33
    $region32: #{tpu_custom_call.1} parent=1 // pred_region
      %51 = dma.done [#allocation9], 2048
    $region33: #{tpu_custom_call.1} parent=1 // pred_fallthru
      _
    %p52 = scmp.eq.s32.totalorder 0, 0
    // Predicated region
    $region34: #{tpu_custom_call.1} parent=1 // pred_check
      %p53 = pneg %p52
    $region35: #{tpu_custom_call.1} parent=1 // pred_check_branch
      %55 = sbr.rel (%p53) target = $region37
    $region36: #{tpu_custom_call.1} parent=1 // pred_region
      %56 = vst [vmem:[#allocation2] sm:$0xff] 0.0
      %57 = vst [vmem:[#allocation3] sm:$0xff] 0.0
    $region37: #{tpu_custom_call.1} parent=1 // pred_fallthru
      _
    %v58 = vld [vmem:[%s0] sm:$0xff]
    %v59 = vld [vmem:[%s0 + $0x8] sm:$0xff]
    %v60 = vld [vmem:[%s0 + $0x10] sm:$0xff]
    %v61 = vld [vmem:[%s0 + $0x18] sm:$0xff]
    %v62 = vld [vmem:[%s0 + $0x20] sm:$0xff]
    %v63 = vld [vmem:[%s0 + $0x28] sm:$0xff]
    %v64 = vld [vmem:[%s0 + $0x30] sm:$0xff]
    %v65 = vld [vmem:[%s0 + $0x38] sm:$0xff]
    %v66 = vld [vmem:[%s1] sm:$0xff]
    %v67 = vld [vmem:[%s1 + $0x8] sm:$0xff]
    %v68 = vld [vmem:[%s1 + $0x10] sm:$0xff]
    %v69 = vld [vmem:[%s1 + $0x18] sm:$0xff]
    %v70 = vld [vmem:[%s1 + $0x20] sm:$0xff]
    %v71 = vld [vmem:[%s1 + $0x28] sm:$0xff]
    %v72 = vld [vmem:[%s1 + $0x30] sm:$0xff]
    %v73 = vld [vmem:[%s1 + $0x38] sm:$0xff]
    %v74 = vld [vmem:[%s3] sm:$0xf]
    %v76 = vlaneseq
    %v77 = vshrl.u32 %v76, 7
    %v78 = vsub.s32 0, %v77
    %v79 = vrot.slane %v74, %v78
    %v80 = vlaneseq
    %v81 = vshrl.u32 %v80, 7
    %v82 = vsub.s32 1, %v81
    %v83 = vrot.slane %v74, %v82
    %v84 = vlaneseq
    %v85 = vshrl.u32 %v84, 7
    %v86 = vsub.s32 2, %v85
    %v87 = vrot.slane %v74, %v86
    %v88 = vlaneseq
    %v89 = vshrl.u32 %v88, 7
    %v90 = vsub.s32 3, %v89
    %v91 = vrot.slane %v74, %v90
    %vm96 = vcmask 130048
    %v98 = vsel %vm96, %v58, 0
    %v101 = vsel %vm96, %v59, 0
    %v104 = vsel %vm96, %v60, 0
    %v107 = vsel %vm96, %v61, 0
    %v110 = vsel %vm96, %v62, 0
    %v113 = vsel %vm96, %v63, 0
    %v116 = vsel %vm96, %v64, 0
    %v119 = vsel %vm96, %v65, 0
    %121 = vmatprep.subr.mxu0 %v67
    %122 = vmatpush1.msra.mxu0 %v66
    %123 = vmatprep.subr.mxu0 %v71
    %124 = vmatpush1.msra.mxu0 %v70
    %125 = vmatprep.subr.mxu0 0.0
    %126 = vmatpush1.msra.mxu0 0.0
    %127 = vmatprep.subr.mxu0 0.0
    %128 = vmatpush1.msra.mxu0 0.0
    %129 = vmatprep.subr.mxu0 0.0
    %130 = vmatpush1.msra.mxu0 0.0
    %131 = vmatprep.subr.mxu0 0.0
    %132 = vmatpush1.msra.mxu0 0.0
    %133 = vmatprep.subr.mxu0 0.0
    %134 = vmatpush1.msra.mxu0 0.0
    %135 = vmatprep.subr.mxu0 0.0
    %136 = vmatpush1.msra.mxu0 0.0
    %137 = vmatprep.subr.mxu0 0.0
    %138 = vmatpush1.msra.mxu0 0.0
    %139 = vmatprep.subr.mxu0 0.0
    %140 = vmatpush1.msra.mxu0 0.0
    %141 = vmatprep.subr.mxu0 0.0
    %142 = vmatpush1.msra.mxu0 0.0
    %143 = vmatprep.subr.mxu0 0.0
    %144 = vmatpush1.msra.mxu0 0.0
    %145 = vmatprep.subr.mxu0 0.0
    %146 = vmatpush1.msra.mxu0 0.0
    %147 = vmatprep.subr.mxu0 0.0
    %148 = vmatpush1.msra.mxu0 0.0
    %149 = vmatprep.subr.mxu0 0.0
    %150 = vmatpush1.msra.mxu0 0.0
    %151 = vmatprep.subr.mxu0 0.0
    %152 = vmatpush1.msra.mxu0 0.0
    %153 = vmatprep.subr.mxu0 0.0
    %154 = vmatpush1.msra.mxu0 0.0
    %155 = vmatprep.subr.mxu0 0.0
    %156 = vmatpush1.msra.mxu0 0.0
    %157 = vmatprep.subr.mxu0 0.0
    %158 = vmatpush1.msra.mxu0 0.0
    %159 = vmatprep.subr.mxu0 0.0
    %160 = vmatpush1.msra.mxu0 0.0
    %161 = vmatprep.subr.mxu0 0.0
    %162 = vmatpush1.msra.mxu0 0.0
    %163 = vmatprep.subr.mxu0 0.0
    %164 = vmatpush1.msra.mxu0 0.0
    %165 = vmatprep.subr.mxu0 0.0
    %166 = vmatpush1.msra.mxu0 0.0
    %167 = vmatprep.subr.mxu0 0.0
    %168 = vmatpush1.msra.mxu0 0.0
    %169 = vmatprep.subr.mxu0 0.0
    %170 = vmatpush1.msra.mxu0 0.0
    %171 = vmatprep.subr.mxu0 0.0
    %172 = vmatpush1.msra.mxu0 0.0
    %173 = vmatprep.subr.mxu0 0.0
    %174 = vmatpush1.msra.mxu0 0.0
    %175 = vmatprep.subr.mxu0 0.0
    %176 = vmatpush1.msra.mxu0 0.0
    %177 = vmatprep.subr.mxu0 0.0
    %178 = vmatpush1.msra.mxu0 0.0
    %179 = vmatprep.subr.mxu0 0.0
    %180 = vmatpush1.msra.mxu0 0.0
    %181 = vmatprep.subr.mxu0 0.0
    %182 = vmatpush1.msra.mxu0 0.0
    %183 = vmatprep.subr.mxu0 0.0
    %184 = vmatpush1.msra.mxu0 0.0
    %185 = vmatprep.mubr.f32.mxu0 0.0
    %186 = vmatmul.mubr.f32.gmra.mrb[0].mxu0 %v98
    %v187 = vpop.f32.mrb[0].mxu0
    %v188 = vadd.f32 %v79, %v187
    %v189 = vpop.f32.mrb[0].mxu0
    %v190 = vadd.f32 %v83, %v189
    %191 = vmatprep.mubr.f32.mxu0 0.0
    %192 = vmatmul.mubr.f32.gmra.mrb[0].mxu0 %v101
    %v193 = vpop.f32.mrb[0].mxu0
    %v194 = vadd.f32 %v79, %v193
    %v195 = vpop.f32.mrb[0].mxu0
    %v196 = vadd.f32 %v83, %v195
    %197 = vmatprep.mubr.f32.mxu0 0.0
    %198 = vmatmul.mubr.f32.gmra.mrb[0].mxu0 %v104
    %v199 = vpop.f32.mrb[0].mxu0
    %v200 = vadd.f32 %v79, %v199
    %v201 = vpop.f32.mrb[0].mxu0
    %v202 = vadd.f32 %v83, %v201
    %203 = vmatprep.mubr.f32.mxu0 0.0
    %204 = vmatmul.mubr.f32.gmra.mrb[0].mxu0 %v107
    %v205 = vpop.f32.mrb[0].mxu0
    %v206 = vadd.f32 %v79, %v205
    %v207 = vpop.f32.mrb[0].mxu0
    %v208 = vadd.f32 %v83, %v207
    %209 = vmatprep.mubr.f32.mxu0 0.0
    %210 = vmatmul.mubr.f32.gmra.mrb[0].mxu0 %v110
    %v211 = vpop.f32.mrb[0].mxu0
    %v212 = vadd.f32 %v79, %v211
    %v213 = vpop.f32.mrb[0].mxu0
    %v214 = vadd.f32 %v83, %v213
    %215 = vmatprep.mubr.f32.mxu0 0.0
    %216 = vmatmul.mubr.f32.gmra.mrb[0].mxu0 %v113
    %v217 = vpop.f32.mrb[0].mxu0
    %v218 = vadd.f32 %v79, %v217
    %v219 = vpop.f32.mrb[0].mxu0
    %v220 = vadd.f32 %v83, %v219
    %221 = vmatprep.mubr.f32.mxu0 0.0
    %222 = vmatmul.mubr.f32.gmra.mrb[0].mxu0 %v116
    %v223 = vpop.f32.mrb[0].mxu0
    %v224 = vadd.f32 %v79, %v223
    %v225 = vpop.f32.mrb[0].mxu0
    %v226 = vadd.f32 %v83, %v225
    %227 = vmatprep.mubr.f32.mxu0 0.0
    %228 = vmatmul.mubr.f32.gmra.mrb[0].mxu0 %v119
    %v229 = vpop.f32.mrb[0].mxu0
    %v230 = vadd.f32 %v79, %v229
    %v231 = vpop.f32.mrb[0].mxu0
    %v232 = vadd.f32 %v83, %v231
    %233 = vdwg.mxu0
    %234 = vmatprep.subr.mxu0 %v69
    %235 = vmatpush1.msra.mxu0 %v68
    %236 = vmatprep.subr.mxu0 %v73
    %237 = vmatpush1.msra.mxu0 %v72
    %238 = vmatprep.subr.mxu0 0.0
    %239 = vmatpush1.msra.mxu0 0.0
    %240 = vmatprep.subr.mxu0 0.0
    %241 = vmatpush1.msra.mxu0 0.0
    %242 = vmatprep.subr.mxu0 0.0
    %243 = vmatpush1.msra.mxu0 0.0
    %244 = vmatprep.subr.mxu0 0.0
    %245 = vmatpush1.msra.mxu0 0.0
    %246 = vmatprep.subr.mxu0 0.0
    %247 = vmatpush1.msra.mxu0 0.0
    %248 = vmatprep.subr.mxu0 0.0
    %249 = vmatpush1.msra.mxu0 0.0
    %250 = vmatprep.subr.mxu0 0.0
    %251 = vmatpush1.msra.mxu0 0.0
    %252 = vmatprep.subr.mxu0 0.0
    %253 = vmatpush1.msra.mxu0 0.0
    %254 = vmatprep.subr.mxu0 0.0
    %255 = vmatpush1.msra.mxu0 0.0
    %256 = vmatprep.subr.mxu0 0.0
    %257 = vmatpush1.msra.mxu0 0.0
    %258 = vmatprep.subr.mxu0 0.0
    %259 = vmatpush1.msra.mxu0 0.0
    %260 = vmatprep.subr.mxu0 0.0
    %261 = vmatpush1.msra.mxu0 0.0
    %262 = vmatprep.subr.mxu0 0.0
    %263 = vmatpush1.msra.mxu0 0.0
    %264 = vmatprep.subr.mxu0 0.0
    %265 = vmatpush1.msra.mxu0 0.0
    %266 = vmatprep.subr.mxu0 0.0
    %267 = vmatpush1.msra.mxu0 0.0
    %268 = vmatprep.subr.mxu0 0.0
    %269 = vmatpush1.msra.mxu0 0.0
    %270 = vmatprep.subr.mxu0 0.0
    %271 = vmatpush1.msra.mxu0 0.0
    %272 = vmatprep.subr.mxu0 0.0
    %273 = vmatpush1.msra.mxu0 0.0
    %274 = vmatprep.subr.mxu0 0.0
    %275 = vmatpush1.msra.mxu0 0.0
    %276 = vmatprep.subr.mxu0 0.0
    %277 = vmatpush1.msra.mxu0 0.0
    %278 = vmatprep.subr.mxu0 0.0
    %279 = vmatpush1.msra.mxu0 0.0
    %280 = vmatprep.subr.mxu0 0.0
    %281 = vmatpush1.msra.mxu0 0.0
    %282 = vmatprep.subr.mxu0 0.0
    %283 = vmatpush1.msra.mxu0 0.0
    %284 = vmatprep.subr.mxu0 0.0
    %285 = vmatpush1.msra.mxu0 0.0
    %286 = vmatprep.subr.mxu0 0.0
    %287 = vmatpush1.msra.mxu0 0.0
    %288 = vmatprep.subr.mxu0 0.0
    %289 = vmatpush1.msra.mxu0 0.0
    %290 = vmatprep.subr.mxu0 0.0
    %291 = vmatpush1.msra.mxu0 0.0
    %292 = vmatprep.subr.mxu0 0.0
    %293 = vmatpush1.msra.mxu0 0.0
    %294 = vmatprep.subr.mxu0 0.0
    %295 = vmatpush1.msra.mxu0 0.0
    %296 = vmatprep.subr.mxu0 0.0
    %297 = vmatpush1.msra.mxu0 0.0
    %298 = vmatprep.mubr.f32.mxu0 0.0
    %299 = vmatmul.mubr.f32.gmra.mrb[0].mxu0 %v98
    %v300 = vpop.f32.mrb[0].mxu0
    %v301 = vadd.f32 %v87, %v300
    %v302 = vpop.f32.mrb[0].mxu0
    %v303 = vadd.f32 %v91, %v302
    %304 = vmatprep.mubr.f32.mxu0 0.0
    %305 = vmatmul.mubr.f32.gmra.mrb[0].mxu0 %v101
    %v306 = vpop.f32.mrb[0].mxu0
    %v307 = vadd.f32 %v87, %v306
    %v308 = vpop.f32.mrb[0].mxu0
    %v309 = vadd.f32 %v91, %v308
    %310 = vmatprep.mubr.f32.mxu0 0.0
    %311 = vmatmul.mubr.f32.gmra.mrb[0].mxu0 %v104
    %v312 = vpop.f32.mrb[0].mxu0
    %v313 = vadd.f32 %v87, %v312
    %v314 = vpop.f32.mrb[0].mxu0
    %v315 = vadd.f32 %v91, %v314
    %316 = vmatprep.mubr.f32.mxu0 0.0
    %317 = vmatmul.mubr.f32.gmra.mrb[0].mxu0 %v107
    %v318 = vpop.f32.mrb[0].mxu0
    %v319 = vadd.f32 %v87, %v318
    %v320 = vpop.f32.mrb[0].mxu0
    %v321 = vadd.f32 %v91, %v320
    %322 = vmatprep.mubr.f32.mxu0 0.0
    %323 = vmatmul.mubr.f32.gmra.mrb[0].mxu0 %v110
    %v324 = vpop.f32.mrb[0].mxu0
    %v325 = vadd.f32 %v87, %v324
    %v326 = vpop.f32.mrb[0].mxu0
    %v327 = vadd.f32 %v91, %v326
    %328 = vmatprep.mubr.f32.mxu0 0.0
    %329 = vmatmul.mubr.f32.gmra.mrb[0].mxu0 %v113
    %v330 = vpop.f32.mrb[0].mxu0
    %v331 = vadd.f32 %v87, %v330
    %v332 = vpop.f32.mrb[0].mxu0
    %v333 = vadd.f32 %v91, %v332
    %334 = vmatprep.mubr.f32.mxu0 0.0
    %335 = vmatmul.mubr.f32.gmra.mrb[0].mxu0 %v116
    %v336 = vpop.f32.mrb[0].mxu0
    %v337 = vadd.f32 %v87, %v336
    %v338 = vpop.f32.mrb[0].mxu0
    %v339 = vadd.f32 %v91, %v338
    %340 = vmatprep.mubr.f32.mxu0 0.0
    %341 = vmatmul.mubr.f32.gmra.mrb[0].mxu0 %v119
    %v342 = vpop.f32.mrb[0].mxu0
    %v343 = vadd.f32 %v87, %v342
    %v344 = vpop.f32.mrb[0].mxu0
    %v345 = vadd.f32 %v91, %v344
    %346 = vdwg.mxu0
    %347 = vst [vmem:[#allocation4] sm:$0xff] %v188
    %348 = vst [vmem:[#allocation4 + $0x8] sm:$0xff] %v190
    %349 = vst [vmem:[#allocation4 + $0x10] sm:$0xff] %v301
    %350 = vst [vmem:[#allocation4 + $0x18] sm:$0xff] %v303
    %351 = vst [vmem:[#allocation4 + $0x20] sm:$0xff] %v194
    %352 = vst [vmem:[#allocation4 + $0x28] sm:$0xff] %v196
    %353 = vst [vmem:[#allocation4 + $0x30] sm:$0xff] %v307
    %354 = vst [vmem:[#allocation4 + $0x38] sm:$0xff] %v309
    %355 = vst [vmem:[#allocation4 + $0x40] sm:$0xff] %v200
    %356 = vst [vmem:[#allocation4 + $0x48] sm:$0xff] %v202
    %357 = vst [vmem:[#allocation4 + $0x50] sm:$0xff] %v313
    %358 = vst [vmem:[#allocation4 + $0x58] sm:$0xff] %v315
    %359 = vst [vmem:[#allocation4 + $0x60] sm:$0xff] %v206
    %360 = vst [vmem:[#allocation4 + $0x68] sm:$0xff] %v208
    %361 = vst [vmem:[#allocation4 + $0x70] sm:$0xff] %v319
    %362 = vst [vmem:[#allocation4 + $0x78] sm:$0xff] %v321
    %363 = vst [vmem:[#allocation4 + $0x80] sm:$0xff] %v212
    %364 = vst [vmem:[#allocation4 + $0x88] sm:$0xff] %v214
    %365 = vst [vmem:[#allocation4 + $0x90] sm:$0xff] %v325
    %366 = vst [vmem:[#allocation4 + $0x98] sm:$0xff] %v327
    %367 = vst [vmem:[#allocation4 + $0xa0] sm:$0xff] %v218
    %368 = vst [vmem:[#allocation4 + $0xa8] sm:$0xff] %v220
    %369 = vst [vmem:[#allocation4 + $0xb0] sm:$0xff] %v331
    %370 = vst [vmem:[#allocation4 + $0xb8] sm:$0xff] %v333
    %371 = vst [vmem:[#allocation4 + $0xc0] sm:$0xff] %v224
    %372 = vst [vmem:[#allocation4 + $0xc8] sm:$0xff] %v226
    %373 = vst [vmem:[#allocation4 + $0xd0] sm:$0xff] %v337
    %374 = vst [vmem:[#allocation4 + $0xd8] sm:$0xff] %v339
    %375 = vst [vmem:[#allocation4 + $0xe0] sm:$0xff] %v230
    %376 = vst [vmem:[#allocation4 + $0xe8] sm:$0xff] %v232
    %377 = vst [vmem:[#allocation4 + $0xf0] sm:$0xff] %v343
    %378 = vst [vmem:[#allocation4 + $0xf8] sm:$0xff] %v345
    %s379 = smul.u32 0, 4
    %s380 = smul.addr %s379, 8
    %s381 = scalar_lea.vmem [#allocation4], %s380
    %v382 = vld [vmem:[%s381] sm:$0xff]
    %v383 = vld [vmem:[%s381 + $0x8] sm:$0xff]
    %v384 = vld [vmem:[%s381 + $0x10] sm:$0xff]
    %v385 = vld [vmem:[%s381 + $0x18] sm:$0xff]
    %v386 = vld [vmem:[#allocation2] sm:$0xff]
    %v387 = vld [vmem:[#allocation3] sm:$0xff]
    %v388 = vld [vmem:[#allocation5] sm:$0xff]
    %v389 = vld [vmem:[#allocation5 + $0x8] sm:$0xff]
    %v390 = vld [vmem:[#allocation5 + $0x10] sm:$0xff]
    %v391 = vld [vmem:[#allocation5 + $0x18] sm:$0xff]
    %v392 = vld [vmem:[#allocation5 + $0x20] sm:$0xff]
    %v393 = vld [vmem:[#allocation5 + $0x28] sm:$0xff]
    %v394 = vld [vmem:[#allocation5 + $0x30] sm:$0xff]
    %v395 = vld [vmem:[#allocation5 + $0x38] sm:$0xff]
    %v396 = vld [vmem:[#allocation5 + $0x40] sm:$0xff]
    %v397 = vld [vmem:[#allocation5 + $0x48] sm:$0xff]
    %v398 = vld [vmem:[#allocation5 + $0x50] sm:$0xff]
    %v399 = vld [vmem:[#allocation5 + $0x58] sm:$0xff]
    %v400 = vld [vmem:[#allocation5 + $0x60] sm:$0xff]
    %v401 = vld [vmem:[#allocation5 + $0x68] sm:$0xff]
    %v402 = vld [vmem:[#allocation5 + $0x70] sm:$0xff]
    %v403 = vld [vmem:[#allocation5 + $0x78] sm:$0xff]
    %v404 = vld [vmem:[#allocation5 + $0x80] sm:$0xff]
    %v405 = vld [vmem:[#allocation5 + $0x88] sm:$0xff]
    %v406 = vld [vmem:[#allocation5 + $0x90] sm:$0xff]
    %v407 = vld [vmem:[#allocation5 + $0x98] sm:$0xff]
    %v408 = vld [vmem:[#allocation5 + $0xa0] sm:$0xff]
    %v409 = vld [vmem:[#allocation5 + $0xa8] sm:$0xff]
    %v410 = vld [vmem:[#allocation5 + $0xb0] sm:$0xff]
    %v411 = vld [vmem:[#allocation5 + $0xb8] sm:$0xff]
    %v412 = vld [vmem:[#allocation5 + $0xc0] sm:$0xff]
    %v413 = vld [vmem:[#allocation5 + $0xc8] sm:$0xff]
    %v414 = vld [vmem:[#allocation5 + $0xd0] sm:$0xff]
    %v415 = vld [vmem:[#allocation5 + $0xd8] sm:$0xff]
    %v416 = vld [vmem:[#allocation5 + $0xe0] sm:$0xff]
    %v417 = vld [vmem:[#allocation5 + $0xe8] sm:$0xff]
    %v418 = vld [vmem:[#allocation5 + $0xf0] sm:$0xff]
    %v419 = vld [vmem:[#allocation5 + $0xf8] sm:$0xff]
    %v420 = vld [vmem:[#allocation5 + $0x100] sm:$0xff]
    %v421 = vld [vmem:[#allocation5 + $0x108] sm:$0xff]
    %v422 = vld [vmem:[#allocation5 + $0x110] sm:$0xff]
    %v423 = vld [vmem:[#allocation5 + $0x118] sm:$0xff]
    %v424 = vld [vmem:[#allocation5 + $0x120] sm:$0xff]
    %v425 = vld [vmem:[#allocation5 + $0x128] sm:$0xff]
    %v426 = vld [vmem:[#allocation5 + $0x130] sm:$0xff]
    %v427 = vld [vmem:[#allocation5 + $0x138] sm:$0xff]
    %v428 = vld [vmem:[#allocation5 + $0x140] sm:$0xff]
    %v429 = vld [vmem:[#allocation5 + $0x148] sm:$0xff]
    %v430 = vld [vmem:[#allocation5 + $0x150] sm:$0xff]
    %v431 = vld [vmem:[#allocation5 + $0x158] sm:$0xff]
    %v432 = vld [vmem:[#allocation5 + $0x160] sm:$0xff]
    %v433 = vld [vmem:[#allocation5 + $0x168] sm:$0xff]
    %v434 = vld [vmem:[#allocation5 + $0x170] sm:$0xff]
    %v435 = vld [vmem:[#allocation5 + $0x178] sm:$0xff]
    %v436 = vld [vmem:[#allocation5 + $0x180] sm:$0xff]
    %v437 = vld [vmem:[#allocation5 + $0x188] sm:$0xff]
    %v438 = vld [vmem:[#allocation5 + $0x190] sm:$0xff]
    %v439 = vld [vmem:[#allocation5 + $0x198] sm:$0xff]
    %v440 = vld [vmem:[#allocation5 + $0x1a0] sm:$0xff]
    %v441 = vld [vmem:[#allocation5 + $0x1a8] sm:$0xff]
    %v442 = vld [vmem:[#allocation5 + $0x1b0] sm:$0xff]
    %v443 = vld [vmem:[#allocation5 + $0x1b8] sm:$0xff]
    %v444 = vld [vmem:[#allocation5 + $0x1c0] sm:$0xff]
    %v445 = vld [vmem:[#allocation5 + $0x1c8] sm:$0xff]
    %v446 = vld [vmem:[#allocation5 + $0x1d0] sm:$0xff]
    %v447 = vld [vmem:[#allocation5 + $0x1d8] sm:$0xff]
    %v448 = vld [vmem:[#allocation5 + $0x1e0] sm:$0xff]
    %v449 = vld [vmem:[#allocation5 + $0x1e8] sm:$0xff]
    %v450 = vld [vmem:[#allocation5 + $0x1f0] sm:$0xff]
    %v451 = vld [vmem:[#allocation5 + $0x1f8] sm:$0xff]
    %452 = vmatprep.subr.mxu0 %v389
    %453 = vmatpush1.msra.mxu0 %v388
    %454 = vmatprep.subr.mxu0 %v393
    %455 = vmatpush1.msra.mxu0 %v392
    %456 = vmatprep.subr.mxu0 %v397
    %457 = vmatpush1.msra.mxu0 %v396
    %458 = vmatprep.subr.mxu0 %v401
    %459 = vmatpush1.msra.mxu0 %v400
    %460 = vmatprep.subr.mxu0 %v405
    %461 = vmatpush1.msra.mxu0 %v404
    %462 = vmatprep.subr.mxu0 %v409
    %463 = vmatpush1.msra.mxu0 %v408
    %464 = vmatprep.subr.mxu0 %v413
    %465 = vmatpush1.msra.mxu0 %v412
    %466 = vmatprep.subr.mxu0 %v417
    %467 = vmatpush1.msra.mxu0 %v416
    %468 = vmatprep.subr.mxu0 %v421
    %469 = vmatpush1.msra.mxu0 %v420
    %470 = vmatprep.subr.mxu0 %v425
    %471 = vmatpush1.msra.mxu0 %v424
    %472 = vmatprep.subr.mxu0 %v429
    %473 = vmatpush1.msra.mxu0 %v428
    %474 = vmatprep.subr.mxu0 %v433
    %475 = vmatpush1.msra.mxu0 %v432
    %476 = vmatprep.subr.mxu0 %v437
    %477 = vmatpush1.msra.mxu0 %v436
    %478 = vmatprep.subr.mxu0 %v441
    %479 = vmatpush1.msra.mxu0 %v440
    %480 = vmatprep.subr.mxu0 %v445
    %481 = vmatpush1.msra.mxu0 %v444
    %482 = vmatprep.subr.mxu0 %v449
    %483 = vmatpush1.msra.mxu0 %v448
    %484 = vmatprep.subr.mxu0 0.0
    %485 = vmatpush1.msra.mxu0 0.0
    %486 = vmatprep.subr.mxu0 0.0
    %487 = vmatpush1.msra.mxu0 0.0
    %488 = vmatprep.subr.mxu0 0.0
    %489 = vmatpush1.msra.mxu0 0.0
    %490 = vmatprep.subr.mxu0 0.0
    %491 = vmatpush1.msra.mxu0 0.0
    %492 = vmatprep.subr.mxu0 0.0
    %493 = vmatpush1.msra.mxu0 0.0
    %494 = vmatprep.subr.mxu0 0.0
    %495 = vmatpush1.msra.mxu0 0.0
    %496 = vmatprep.subr.mxu0 0.0
    %497 = vmatpush1.msra.mxu0 0.0
    %498 = vmatprep.subr.mxu0 0.0
    %499 = vmatpush1.msra.mxu0 0.0
    %500 = vmatprep.subr.mxu0 0.0
    %501 = vmatpush1.msra.mxu0 0.0
    %502 = vmatprep.subr.mxu0 0.0
    %503 = vmatpush1.msra.mxu0 0.0
    %504 = vmatprep.subr.mxu0 0.0
    %505 = vmatpush1.msra.mxu0 0.0
    %506 = vmatprep.subr.mxu0 0.0
    %507 = vmatpush1.msra.mxu0 0.0
    %508 = vmatprep.subr.mxu0 0.0
    %509 = vmatpush1.msra.mxu0 0.0
    %510 = vmatprep.subr.mxu0 0.0
    %511 = vmatpush1.msra.mxu0 0.0
    %512 = vmatprep.subr.mxu0 0.0
    %513 = vmatpush1.msra.mxu0 0.0
    %514 = vmatprep.subr.mxu0 0.0
    %515 = vmatpush1.msra.mxu0 0.0
    %516 = vmatprep.mubr.f32.mxu0 0.0
    %517 = vmatmul.mubr.f32.gmra.mrb[0].mxu0 %v386
    %v518 = vpop.f32.mrb[0].mxu0
    %v519 = vadd.f32 0.0, %v518
    %v520 = vpop.f32.mrb[0].mxu0
    %v521 = vadd.f32 0.0, %v520
    %522 = vdwg.mxu0
    %523 = vmatprep.subr.mxu0 %v391
    %524 = vmatpush1.msra.mxu0 %v390
    %525 = vmatprep.subr.mxu0 %v395
    %526 = vmatpush1.msra.mxu0 %v394
    %527 = vmatprep.subr.mxu0 %v399
    %528 = vmatpush1.msra.mxu0 %v398
    %529 = vmatprep.subr.mxu0 %v403
    %530 = vmatpush1.msra.mxu0 %v402
    %531 = vmatprep.subr.mxu0 %v407
    %532 = vmatpush1.msra.mxu0 %v406
    %533 = vmatprep.subr.mxu0 %v411
    %534 = vmatpush1.msra.mxu0 %v410
    %535 = vmatprep.subr.mxu0 %v415
    %536 = vmatpush1.msra.mxu0 %v414
    %537 = vmatprep.subr.mxu0 %v419
    %538 = vmatpush1.msra.mxu0 %v418
    %539 = vmatprep.subr.mxu0 %v423
    %540 = vmatpush1.msra.mxu0 %v422
    %541 = vmatprep.subr.mxu0 %v427
    %542 = vmatpush1.msra.mxu0 %v426
    %543 = vmatprep.subr.mxu0 %v431
    %544 = vmatpush1.msra.mxu0 %v430
    %545 = vmatprep.subr.mxu0 %v435
    %546 = vmatpush1.msra.mxu0 %v434
    %547 = vmatprep.subr.mxu0 %v439
    %548 = vmatpush1.msra.mxu0 %v438
    %549 = vmatprep.subr.mxu0 %v443
    %550 = vmatpush1.msra.mxu0 %v442
    %551 = vmatprep.subr.mxu0 %v447
    %552 = vmatpush1.msra.mxu0 %v446
    %553 = vmatprep.subr.mxu0 %v451
    %554 = vmatpush1.msra.mxu0 %v450
    %555 = vmatprep.subr.mxu0 0.0
    %556 = vmatpush1.msra.mxu0 0.0
    %557 = vmatprep.subr.mxu0 0.0
    %558 = vmatpush1.msra.mxu0 0.0
    %559 = vmatprep.subr.mxu0 0.0
    %560 = vmatpush1.msra.mxu0 0.0
    %561 = vmatprep.subr.mxu0 0.0
    %562 = vmatpush1.msra.mxu0 0.0
    %563 = vmatprep.subr.mxu0 0.0
    %564 = vmatpush1.msra.mxu0 0.0
    %565 = vmatprep.subr.mxu0 0.0
    %566 = vmatpush1.msra.mxu0 0.0
    %567 = vmatprep.subr.mxu0 0.0
    %568 = vmatpush1.msra.mxu0 0.0
    %569 = vmatprep.subr.mxu0 0.0
    %570 = vmatpush1.msra.mxu0 0.0
    %571 = vmatprep.subr.mxu0 0.0
    %572 = vmatpush1.msra.mxu0 0.0
    %573 = vmatprep.subr.mxu0 0.0
    %574 = vmatpush1.msra.mxu0 0.0
    %575 = vmatprep.subr.mxu0 0.0
    %576 = vmatpush1.msra.mxu0 0.0
    %577 = vmatprep.subr.mxu0 0.0
    %578 = vmatpush1.msra.mxu0 0.0
    %579 = vmatprep.subr.mxu0 0.0
    %580 = vmatpush1.msra.mxu0 0.0
    %581 = vmatprep.subr.mxu0 0.0
    %582 = vmatpush1.msra.mxu0 0.0
    %583 = vmatprep.subr.mxu0 0.0
    %584 = vmatpush1.msra.mxu0 0.0
    %585 = vmatprep.subr.mxu0 0.0
    %586 = vmatpush1.msra.mxu0 0.0
    %587 = vmatprep.mubr.f32.mxu0 0.0
    %588 = vmatmul.mubr.f32.gmra.mrb[0].mxu0 %v386
    %v589 = vpop.f32.mrb[0].mxu0
    %v590 = vadd.f32 0.0, %v589
    %v591 = vpop.f32.mrb[0].mxu0
    %v592 = vadd.f32 0.0, %v591
    %593 = vdwg.mxu0
    %v594 = vadd.f32 %v382, %v519
    %v595 = vadd.f32 %v383, %v521
    %v596 = vadd.f32 %v384, %v590
    %v597 = vadd.f32 %v385, %v592
    %v598 = vxor.u32 %v594, 2147483648
    %v599 = vmul.f32 %v598, 1.442695
    %v600 = vpow.pop %v599
    %v601 = vadd.f32 %v600, 1.0
    %v602 = vrcp.pop %v601
    %v603 = vmul.f32 1.0, %v602
    %v604 = vxor.u32 %v595, 2147483648
    %v605 = vmul.f32 %v604, 1.442695
    %v606 = vpow.pop %v605
    %v607 = vadd.f32 %v606, 1.0
    %v608 = vrcp.pop %v607
    %v609 = vmul.f32 1.0, %v608
    %v610 = vtanh.pop %v596
    %v611 = vxor.u32 %v597, 2147483648
    %v612 = vmul.f32 %v611, 1.442695
    %v613 = vpow.pop %v612
    %v614 = vadd.f32 %v613, 1.0
    %v615 = vrcp.pop %v614
    %v616 = vmul.f32 1.0, %v615
    %v617 = vmul.f32 %v609, %v387
    %v618 = vmul.f32 %v603, %v610
    %v619 = vadd.f32 %v617, %v618
    %620 = vst [vmem:[#allocation3] sm:$0xff] %v619
    %v621 = vtanh.pop %v619
    %v622 = vmul.f32 %v616, %v621
    %623 = vst [vmem:[#allocation2] sm:$0xff] %v622
    %s624 = smul.u32 1, 4
    %s625 = smul.addr %s624, 8
    %s626 = scalar_lea.vmem [#allocation4], %s625
    %v627 = vld [vmem:[%s626] sm:$0xff]
    %v628 = vld [vmem:[%s626 + $0x8] sm:$0xff]
    %v629 = vld [vmem:[%s626 + $0x10] sm:$0xff]
    %v630 = vld [vmem:[%s626 + $0x18] sm:$0xff]
    %v631 = vld [vmem:[#allocation2] sm:$0xff]
    %v632 = vld [vmem:[#allocation3] sm:$0xff]
    %v633 = vld [vmem:[#allocation5] sm:$0xff]
    %v634 = vld [vmem:[#allocation5 + $0x8] sm:$0xff]
    %v635 = vld [vmem:[#allocation5 + $0x10] sm:$0xff]
    %v636 = vld [vmem:[#allocation5 + $0x18] sm:$0xff]
    %v637 = vld [vmem:[#allocation5 + $0x20] sm:$0xff]
    %v638 = vld [vmem:[#allocation5 + $0x28] sm:$0xff]
    %v639 = vld [vmem:[#allocation5 + $0x30] sm:$0xff]
    %v640 = vld [vmem:[#allocation5 + $0x38] sm:$0xff]
    %v641 = vld [vmem:[#allocation5 + $0x40] sm:$0xff]
    %v642 = vld [vmem:[#allocation5 + $0x48] sm:$0xff]
    %v643 = vld [vmem:[#allocation5 + $0x50] sm:$0xff]
    %v644 = vld [vmem:[#allocation5 + $0x58] sm:$0xff]
    %v645 = vld [vmem:[#allocation5 + $0x60] sm:$0xff]
    %v646 = vld [vmem:[#allocation5 + $0x68] sm:$0xff]
    %v647 = vld [vmem:[#allocation5 + $0x70] sm:$0xff]
    %v648 = vld [vmem:[#allocation5 + $0x78] sm:$0xff]
    %v649 = vld [vmem:[#allocation5 + $0x80] sm:$0xff]
    %v650 = vld [vmem:[#allocation5 + $0x88] sm:$0xff]
    %v651 = vld [vmem:[#allocation5 + $0x90] sm:$0xff]
    %v652 = vld [vmem:[#allocation5 + $0x98] sm:$0xff]
    %v653 = vld [vmem:[#allocation5 + $0xa0] sm:$0xff]
    %v654 = vld [vmem:[#allocation5 + $0xa8] sm:$0xff]
    %v655 = vld [vmem:[#allocation5 + $0xb0] sm:$0xff]
    %v656 = vld [vmem:[#allocation5 + $0xb8] sm:$0xff]
    %v657 = vld [vmem:[#allocation5 + $0xc0] sm:$0xff]
    %v658 = vld [vmem:[#allocation5 + $0xc8] sm:$0xff]
    %v659 = vld [vmem:[#allocation5 + $0xd0] sm:$0xff]
    %v660 = vld [vmem:[#allocation5 + $0xd8] sm:$0xff]
    %v661 = vld [vmem:[#allocation5 + $0xe0] sm:$0xff]
    %v662 = vld [vmem:[#allocation5 + $0xe8] sm:$0xff]
    %v663 = vld [vmem:[#allocation5 + $0xf0] sm:$0xff]
    %v664 = vld [vmem:[#allocation5 + $0xf8] sm:$0xff]
    %v665 = vld [vmem:[#allocation5 + $0x100] sm:$0xff]
    %v666 = vld [vmem:[#allocation5 + $0x108] sm:$0xff]
    %v667 = vld [vmem:[#allocation5 + $0x110] sm:$0xff]
    %v668 = vld [vmem:[#allocation5 + $0x118] sm:$0xff]
    %v669 = vld [vmem:[#allocation5 + $0x120] sm:$0xff]
    %v670 = vld [vmem:[#allocation5 + $0x128] sm:$0xff]
    %v671 = vld [vmem:[#allocation5 + $0x130] sm:$0xff]
    %v672 = vld [vmem:[#allocation5 + $0x138] sm:$0xff]
    %v673 = vld [vmem:[#allocation5 + $0x140] sm:$0xff]
    %v674 = vld [vmem:[#allocation5 + $0x148] sm:$0xff]
    %v675 = vld [vmem:[#allocation5 + $0x150] sm:$0xff]
    %v676 = vld [vmem:[#allocation5 + $0x158] sm:$0xff]
    %v677 = vld [vmem:[#allocation5 + $0x160] sm:$0xff]
    %v678 = vld [vmem:[#allocation5 + $0x168] sm:$0xff]
    %v679 = vld [vmem:[#allocation5 + $0x170] sm:$0xff]
    %v680 = vld [vmem:[#allocation5 + $0x178] sm:$0xff]
    %v681 = vld [vmem:[#allocation5 + $0x180] sm:$0xff]
    %v682 = vld [vmem:[#allocation5 + $0x188] sm:$0xff]
    %v683 = vld [vmem:[#allocation5 + $0x190] sm:$0xff]
    %v684 = vld [vmem:[#allocation5 + $0x198] sm:$0xff]
    %v685 = vld [vmem:[#allocation5 + $0x1a0] sm:$0xff]
    %v686 = vld [vmem:[#allocation5 + $0x1a8] sm:$0xff]
    %v687 = vld [vmem:[#allocation5 + $0x1b0] sm:$0xff]
    %v688 = vld [vmem:[#allocation5 + $0x1b8] sm:$0xff]
    %v689 = vld [vmem:[#allocation5 + $0x1c0] sm:$0xff]
    %v690 = vld [vmem:[#allocation5 + $0x1c8] sm:$0xff]
    %v691 = vld [vmem:[#allocation5 + $0x1d0] sm:$0xff]
    %v692 = vld [vmem:[#allocation5 + $0x1d8] sm:$0xff]
    %v693 = vld [vmem:[#allocation5 + $0x1e0] sm:$0xff]
    %v694 = vld [vmem:[#allocation5 + $0x1e8] sm:$0xff]
    %v695 = vld [vmem:[#allocation5 + $0x1f0] sm:$0xff]
    %v696 = vld [vmem:[#allocation5 + $0x1f8] sm:$0xff]
    %697 = vmatprep.subr.mxu0 %v634
    %698 = vmatpush1.msra.mxu0 %v633
    %699 = vmatprep.subr.mxu0 %v638
    %700 = vmatpush1.msra.mxu0 %v637
    %701 = vmatprep.subr.mxu0 %v642
    %702 = vmatpush1.msra.mxu0 %v641
    %703 = vmatprep.subr.mxu0 %v646
    %704 = vmatpush1.msra.mxu0 %v645
    %705 = vmatprep.subr.mxu0 %v650
    %706 = vmatpush1.msra.mxu0 %v649
    %707 = vmatprep.subr.mxu0 %v654
    %708 = vmatpush1.msra.mxu0 %v653
    %709 = vmatprep.subr.mxu0 %v658
    %710 = vmatpush1.msra.mxu0 %v657
    %711 = vmatprep.subr.mxu0 %v662
    %712 = vmatpush1.msra.mxu0 %v661
    %713 = vmatprep.subr.mxu0 %v666
    %714 = vmatpush1.msra.mxu0 %v665
    %715 = vmatprep.subr.mxu0 %v670
    %716 = vmatpush1.msra.mxu0 %v669
    %717 = vmatprep.subr.mxu0 %v674
    %718 = vmatpush1.msra.mxu0 %v673
    %719 = vmatprep.subr.mxu0 %v678
    %720 = vmatpush1.msra.mxu0 %v677
    %721 = vmatprep.subr.mxu0 %v682
    %722 = vmatpush1.msra.mxu0 %v681
    %723 = vmatprep.subr.mxu0 %v686
    %724 = vmatpush1.msra.mxu0 %v685
    %725 = vmatprep.subr.mxu0 %v690
    %726 = vmatpush1.msra.mxu0 %v689
    %727 = vmatprep.subr.mxu0 %v694
    %728 = vmatpush1.msra.mxu0 %v693
    %729 = vmatprep.subr.mxu0 0.0
    %730 = vmatpush1.msra.mxu0 0.0
    %731 = vmatprep.subr.mxu0 0.0
    %732 = vmatpush1.msra.mxu0 0.0
    %733 = vmatprep.subr.mxu0 0.0
    %734 = vmatpush1.msra.mxu0 0.0
    %735 = vmatprep.subr.mxu0 0.0
    %736 = vmatpush1.msra.mxu0 0.0
    %737 = vmatprep.subr.mxu0 0.0
    %738 = vmatpush1.msra.mxu0 0.0
    %739 = vmatprep.subr.mxu0 0.0
    %740 = vmatpush1.msra.mxu0 0.0
    %741 = vmatprep.subr.mxu0 0.0
    %742 = vmatpush1.msra.mxu0 0.0
    %743 = vmatprep.subr.mxu0 0.0
    %744 = vmatpush1.msra.mxu0 0.0
    %745 = vmatprep.subr.mxu0 0.0
    %746 = vmatpush1.msra.mxu0 0.0
    %747 = vmatprep.subr.mxu0 0.0
    %748 = vmatpush1.msra.mxu0 0.0
    %749 = vmatprep.subr.mxu0 0.0
    %750 = vmatpush1.msra.mxu0 0.0
    %751 = vmatprep.subr.mxu0 0.0
    %752 = vmatpush1.msra.mxu0 0.0
    %753 = vmatprep.subr.mxu0 0.0
    %754 = vmatpush1.msra.mxu0 0.0
    %755 = vmatprep.subr.mxu0 0.0
    %756 = vmatpush1.msra.mxu0 0.0
    %757 = vmatprep.subr.mxu0 0.0
    %758 = vmatpush1.msra.mxu0 0.0
    %759 = vmatprep.subr.mxu0 0.0
    %760 = vmatpush1.msra.mxu0 0.0
    %761 = vmatprep.mubr.f32.mxu0 0.0
    %762 = vmatmul.mubr.f32.gmra.mrb[0].mxu0 %v631
    %v763 = vpop.f32.mrb[0].mxu0
    %v764 = vadd.f32 0.0, %v763
    %v765 = vpop.f32.mrb[0].mxu0
    %v766 = vadd.f32 0.0, %v765
    %767 = vdwg.mxu0
    %768 = vmatprep.subr.mxu0 %v636
    %769 = vmatpush1.msra.mxu0 %v635
    %770 = vmatprep.subr.mxu0 %v640
    %771 = vmatpush1.msra.mxu0 %v639
    %772 = vmatprep.subr.mxu0 %v644
    %773 = vmatpush1.msra.mxu0 %v643
    %774 = vmatprep.subr.mxu0 %v648
    %775 = vmatpush1.msra.mxu0 %v647
    %776 = vmatprep.subr.mxu0 %v652
    %777 = vmatpush1.msra.mxu0 %v651
    %778 = vmatprep.subr.mxu0 %v656
    %779 = vmatpush1.msra.mxu0 %v655
    %780 = vmatprep.subr.mxu0 %v660
    %781 = vmatpush1.msra.mxu0 %v659
    %782 = vmatprep.subr.mxu0 %v664
    %783 = vmatpush1.msra.mxu0 %v663
    %784 = vmatprep.subr.mxu0 %v668
    %785 = vmatpush1.msra.mxu0 %v667
    %786 = vmatprep.subr.mxu0 %v672
    %787 = vmatpush1.msra.mxu0 %v671
    %788 = vmatprep.subr.mxu0 %v676
    %789 = vmatpush1.msra.mxu0 %v675
    %790 = vmatprep.subr.mxu0 %v680
    %791 = vmatpush1.msra.mxu0 %v679
    %792 = vmatprep.subr.mxu0 %v684
    %793 = vmatpush1.msra.mxu0 %v683
    %794 = vmatprep.subr.mxu0 %v688
    %795 = vmatpush1.msra.mxu0 %v687
    %796 = vmatprep.subr.mxu0 %v692
    %797 = vmatpush1.msra.mxu0 %v691
    %798 = vmatprep.subr.mxu0 %v696
    %799 = vmatpush1.msra.mxu0 %v695
    %800 = vmatprep.subr.mxu0 0.0
    %801 = vmatpush1.msra.mxu0 0.0
    %802 = vmatprep.subr.mxu0 0.0
    %803 = vmatpush1.msra.mxu0 0.0
    %804 = vmatprep.subr.mxu0 0.0
    %805 = vmatpush1.msra.mxu0 0.0
    %806 = vmatprep.subr.mxu0 0.0
    %807 = vmatpush1.msra.mxu0 0.0
    %808 = vmatprep.subr.mxu0 0.0
    %809 = vmatpush1.msra.mxu0 0.0
    %810 = vmatprep.subr.mxu0 0.0
    %811 = vmatpush1.msra.mxu0 0.0
    %812 = vmatprep.subr.mxu0 0.0
    %813 = vmatpush1.msra.mxu0 0.0
    %814 = vmatprep.subr.mxu0 0.0
    %815 = vmatpush1.msra.mxu0 0.0
    %816 = vmatprep.subr.mxu0 0.0
    %817 = vmatpush1.msra.mxu0 0.0
    %818 = vmatprep.subr.mxu0 0.0
    %819 = vmatpush1.msra.mxu0 0.0
    %820 = vmatprep.subr.mxu0 0.0
    %821 = vmatpush1.msra.mxu0 0.0
    %822 = vmatprep.subr.mxu0 0.0
    %823 = vmatpush1.msra.mxu0 0.0
    %824 = vmatprep.subr.mxu0 0.0
    %825 = vmatpush1.msra.mxu0 0.0
    %826 = vmatprep.subr.mxu0 0.0
    %827 = vmatpush1.msra.mxu0 0.0
    %828 = vmatprep.subr.mxu0 0.0
    %829 = vmatpush1.msra.mxu0 0.0
    %830 = vmatprep.subr.mxu0 0.0
    %831 = vmatpush1.msra.mxu0 0.0
    %832 = vmatprep.mubr.f32.mxu0 0.0
    %833 = vmatmul.mubr.f32.gmra.mrb[0].mxu0 %v631
    %v834 = vpop.f32.mrb[0].mxu0
    %v835 = vadd.f32 0.0, %v834
    %v836 = vpop.f32.mrb[0].mxu0
    %v837 = vadd.f32 0.0, %v836
    %838 = vdwg.mxu0
    %v839 = vadd.f32 %v627, %v764
    %v840 = vadd.f32 %v628, %v766
    %v841 = vadd.f32 %v629, %v835
    %v842 = vadd.f32 %v630, %v837
    %v843 = vxor.u32 %v839, 2147483648
    %v844 = vmul.f32 %v843, 1.442695
    %v845 = vpow.pop %v844
    %v846 = vadd.f32 %v845, 1.0
    %v847 = vrcp.pop %v846
    %v848 = vmul.f32 1.0, %v847
    %v849 = vxor.u32 %v840, 2147483648
    %v850 = vmul.f32 %v849, 1.442695
    %v851 = vpow.pop %v850
    %v852 = vadd.f32 %v851, 1.0
    %v853 = vrcp.pop %v852
    %v854 = vmul.f32 1.0, %v853
    %v855 = vtanh.pop %v841
    %v856 = vxor.u32 %v842, 2147483648
    %v857 = vmul.f32 %v856, 1.442695
    %v858 = vpow.pop %v857
    %v859 = vadd.f32 %v858, 1.0
    %v860 = vrcp.pop %v859
    %v861 = vmul.f32 1.0, %v860
    %v862 = vmul.f32 %v854, %v632
    %v863 = vmul.f32 %v848, %v855
    %v864 = vadd.f32 %v862, %v863
    %865 = vst [vmem:[#allocation3] sm:$0xff] %v864
    %v866 = vtanh.pop %v864
    %v867 = vmul.f32 %v861, %v866
    %868 = vst [vmem:[#allocation2] sm:$0xff] %v867
    %s869 = smul.u32 2, 4
    %s870 = smul.addr %s869, 8
    %s871 = scalar_lea.vmem [#allocation4], %s870
    %v872 = vld [vmem:[%s871] sm:$0xff]
    %v873 = vld [vmem:[%s871 + $0x8] sm:$0xff]
    %v874 = vld [vmem:[%s871 + $0x10] sm:$0xff]
    %v875 = vld [vmem:[%s871 + $0x18] sm:$0xff]
    %v876 = vld [vmem:[#allocation2] sm:$0xff]
    %v877 = vld [vmem:[#allocation3] sm:$0xff]
    %v878 = vld [vmem:[#allocation5] sm:$0xff]
    %v879 = vld [vmem:[#allocation5 + $0x8] sm:$0xff]
    %v880 = vld [vmem:[#allocation5 + $0x10] sm:$0xff]
    %v881 = vld [vmem:[#allocation5 + $0x18] sm:$0xff]
    %v882 = vld [vmem:[#allocation5 + $0x20] sm:$0xff]
    %v883 = vld [vmem:[#allocation5 + $0x28] sm:$0xff]
    %v884 = vld [vmem:[#allocation5 + $0x30] sm:$0xff]
    %v885 = vld [vmem:[#allocation5 + $0x38] sm:$0xff]
    %v886 = vld [vmem:[#allocation5 + $0x40] sm:$0xff]
    %v887 = vld [vmem:[#allocation5 + $0x48] sm:$0xff]
    %v888 = vld [vmem:[#allocation5 + $0x50] sm:$0xff]
    %v889 = vld [vmem:[#allocation5 + $0x58] sm:$0xff]
    %v890 = vld [vmem:[#allocation5 + $0x60] sm:$0xff]
    %v891 = vld [vmem:[#allocation5 + $0x68] sm:$0xff]
    %v892 = vld [vmem:[#allocation5 + $0x70] sm:$0xff]
    %v893 = vld [vmem:[#allocation5 + $0x78] sm:$0xff]
    %v894 = vld [vmem:[#allocation5 + $0x80] sm:$0xff]
    %v895 = vld [vmem:[#allocation5 + $0x88] sm:$0xff]
    %v896 = vld [vmem:[#allocation5 + $0x90] sm:$0xff]
    %v897 = vld [vmem:[#allocation5 + $0x98] sm:$0xff]
    %v898 = vld [vmem:[#allocation5 + $0xa0] sm:$0xff]
    %v899 = vld [vmem:[#allocation5 + $0xa8] sm:$0xff]
    %v900 = vld [vmem:[#allocation5 + $0xb0] sm:$0xff]
    %v901 = vld [vmem:[#allocation5 + $0xb8] sm:$0xff]
    %v902 = vld [vmem:[#allocation5 + $0xc0] sm:$0xff]
    %v903 = vld [vmem:[#allocation5 + $0xc8] sm:$0xff]
    %v904 = vld [vmem:[#allocation5 + $0xd0] sm:$0xff]
    %v905 = vld [vmem:[#allocation5 + $0xd8] sm:$0xff]
    %v906 = vld [vmem:[#allocation5 + $0xe0] sm:$0xff]
    %v907 = vld [vmem:[#allocation5 + $0xe8] sm:$0xff]
    %v908 = vld [vmem:[#allocation5 + $0xf0] sm:$0xff]
    %v909 = vld [vmem:[#allocation5 + $0xf8] sm:$0xff]
    %v910 = vld [vmem:[#allocation5 + $0x100] sm:$0xff]
    %v911 = vld [vmem:[#allocation5 + $0x108] sm:$0xff]
    %v912 = vld [vmem:[#allocation5 + $0x110] sm:$0xff]
    %v913 = vld [vmem:[#allocation5 + $0x118] sm:$0xff]
    %v914 = vld [vmem:[#allocation5 + $0x120] sm:$0xff]
    %v915 = vld [vmem:[#allocation5 + $0x128] sm:$0xff]
    %v916 = vld [vmem:[#allocation5 + $0x130] sm:$0xff]
    %v917 = vld [vmem:[#allocation5 + $0x138] sm:$0xff]
    %v918 = vld [vmem:[#allocation5 + $0x140] sm:$0xff]
    %v919 = vld [vmem:[#allocation5 + $0x148] sm:$0xff]
    %v920 = vld [vmem:[#allocation5 + $0x150] sm:$0xff]
    %v921 = vld [vmem:[#allocation5 + $0x158] sm:$0xff]
    %v922 = vld [vmem:[#allocation5 + $0x160] sm:$0xff]
    %v923 = vld [vmem:[#allocation5 + $0x168] sm:$0xff]
    %v924 = vld [vmem:[#allocation5 + $0x170] sm:$0xff]
    %v925 = vld [vmem:[#allocation5 + $0x178] sm:$0xff]
    %v926 = vld [vmem:[#allocation5 + $0x180] sm:$0xff]
    %v927 = vld [vmem:[#allocation5 + $0x188] sm:$0xff]
    %v928 = vld [vmem:[#allocation5 + $0x190] sm:$0xff]
    %v929 = vld [vmem:[#allocation5 + $0x198] sm:$0xff]
    %v930 = vld [vmem:[#allocation5 + $0x1a0] sm:$0xff]
    %v931 = vld [vmem:[#allocation5 + $0x1a8] sm:$0xff]
    %v932 = vld [vmem:[#allocation5 + $0x1b0] sm:$0xff]
    %v933 = vld [vmem:[#allocation5 + $0x1b8] sm:$0xff]
    %v934 = vld [vmem:[#allocation5 + $0x1c0] sm:$0xff]
    %v935 = vld [vmem:[#allocation5 + $0x1c8] sm:$0xff]
    %v936 = vld [vmem:[#allocation5 + $0x1d0] sm:$0xff]
    %v937 = vld [vmem:[#allocation5 + $0x1d8] sm:$0xff]
    %v938 = vld [vmem:[#allocation5 + $0x1e0] sm:$0xff]
    %v939 = vld [vmem:[#allocation5 + $0x1e8] sm:$0xff]
    %v940 = vld [vmem:[#allocation5 + $0x1f0] sm:$0xff]
    %v941 = vld [vmem:[#allocation5 + $0x1f8] sm:$0xff]
    %942 = vmatprep.subr.mxu0 %v879
    %943 = vmatpush1.msra.mxu0 %v878
    %944 = vmatprep.subr.mxu0 %v883
    %945 = vmatpush1.msra.mxu0 %v882
    %946 = vmatprep.subr.mxu0 %v887
    %947 = vmatpush1.msra.mxu0 %v886
    %948 = vmatprep.subr.mxu0 %v891
    %949 = vmatpush1.msra.mxu0 %v890
    %950 = vmatprep.subr.mxu0 %v895
    %951 = vmatpush1.msra.mxu0 %v894
    %952 = vmatprep.subr.mxu0 %v899
    %953 = vmatpush1.msra.mxu0 %v898
    %954 = vmatprep.subr.mxu0 %v903
    %955 = vmatpush1.msra.mxu0 %v902
    %956 = vmatprep.subr.mxu0 %v907
    %957 = vmatpush1.msra.mxu0 %v906
    %958 = vmatprep.subr.mxu0 %v911
    %959 = vmatpush1.msra.mxu0 %v910
    %960 = vmatprep.subr.mxu0 %v915
    %961 = vmatpush1.msra.mxu0 %v914
    %962 = vmatprep.subr.mxu0 %v919
    %963 = vmatpush1.msra.mxu0 %v918
    %964 = vmatprep.subr.mxu0 %v923
    %965 = vmatpush1.msra.mxu0 %v922
    %966 = vmatprep.subr.mxu0 %v927
    %967 = vmatpush1.msra.mxu0 %v926
    %968 = vmatprep.subr.mxu0 %v931
    %969 = vmatpush1.msra.mxu0 %v930
    %970 = vmatprep.subr.mxu0 %v935
    %971 = vmatpush1.msra.mxu0 %v934
    %972 = vmatprep.subr.mxu0 %v939
    %973 = vmatpush1.msra.mxu0 %v938
    %974 = vmatprep.subr.mxu0 0.0
    %975 = vmatpush1.msra.mxu0 0.0
    %976 = vmatprep.subr.mxu0 0.0
    %977 = vmatpush1.msra.mxu0 0.0
    %978 = vmatprep.subr.mxu0 0.0
    %979 = vmatpush1.msra.mxu0 0.0
    %980 = vmatprep.subr.mxu0 0.0
    %981 = vmatpush1.msra.mxu0 0.0
    %982 = vmatprep.subr.mxu0 0.0
    %983 = vmatpush1.msra.mxu0 0.0
    %984 = vmatprep.subr.mxu0 0.0
    %985 = vmatpush1.msra.mxu0 0.0
    %986 = vmatprep.subr.mxu0 0.0
    %987 = vmatpush1.msra.mxu0 0.0
    %988 = vmatprep.subr.mxu0 0.0
    %989 = vmatpush1.msra.mxu0 0.0
    %990 = vmatprep.subr.mxu0 0.0
    %991 = vmatpush1.msra.mxu0 0.0
    %992 = vmatprep.subr.mxu0 0.0
    %993 = vmatpush1.msra.mxu0 0.0
    %994 = vmatprep.subr.mxu0 0.0
    %995 = vmatpush1.msra.mxu0 0.0
    %996 = vmatprep.subr.mxu0 0.0
    %997 = vmatpush1.msra.mxu0 0.0
    %998 = vmatprep.subr.mxu0 0.0
    %999 = vmatpush1.msra.mxu0 0.0
    %1000 = vmatprep.subr.mxu0 0.0
    %1001 = vmatpush1.msra.mxu0 0.0
    %1002 = vmatprep.subr.mxu0 0.0
    %1003 = vmatpush1.msra.mxu0 0.0
    %1004 = vmatprep.subr.mxu0 0.0
    %1005 = vmatpush1.msra.mxu0 0.0
    %1006 = vmatprep.mubr.f32.mxu0 0.0
    %1007 = vmatmul.mubr.f32.gmra.mrb[0].mxu0 %v876
    %v1008 = vpop.f32.mrb[0].mxu0
    %v1009 = vadd.f32 0.0, %v1008
    %v1010 = vpop.f32.mrb[0].mxu0
    %v1011 = vadd.f32 0.0, %v1010
    %1012 = vdwg.mxu0
    %1013 = vmatprep.subr.mxu0 %v881
    %1014 = vmatpush1.msra.mxu0 %v880
    %1015 = vmatprep.subr.mxu0 %v885
    %1016 = vmatpush1.msra.mxu0 %v884
    %1017 = vmatprep.subr.mxu0 %v889
    %1018 = vmatpush1.msra.mxu0 %v888
    %1019 = vmatprep.subr.mxu0 %v893
    %1020 = vmatpush1.msra.mxu0 %v892
    %1021 = vmatprep.subr.mxu0 %v897
    %1022 = vmatpush1.msra.mxu0 %v896
    %1023 = vmatprep.subr.mxu0 %v901
    %1024 = vmatpush1.msra.mxu0 %v900
    %1025 = vmatprep.subr.mxu0 %v905
    %1026 = vmatpush1.msra.mxu0 %v904
    %1027 = vmatprep.subr.mxu0 %v909
    %1028 = vmatpush1.msra.mxu0 %v908
    %1029 = vmatprep.subr.mxu0 %v913
    %1030 = vmatpush1.msra.mxu0 %v912
    %1031 = vmatprep.subr.mxu0 %v917
    %1032 = vmatpush1.msra.mxu0 %v916
    %1033 = vmatprep.subr.mxu0 %v921
    %1034 = vmatpush1.msra.mxu0 %v920
    %1035 = vmatprep.subr.mxu0 %v925
    %1036 = vmatpush1.msra.mxu0 %v924
    %1037 = vmatprep.subr.mxu0 %v929
    %1038 = vmatpush1.msra.mxu0 %v928
    %1039 = vmatprep.subr.mxu0 %v933
    %1040 = vmatpush1.msra.mxu0 %v932
    %1041 = vmatprep.subr.mxu0 %v937
    %1042 = vmatpush1.msra.mxu0 %v936
    %1043 = vmatprep.subr.mxu0 %v941
    %1044 = vmatpush1.msra.mxu0 %v940
    %1045 = vmatprep.subr.mxu0 0.0
    %1046 = vmatpush1.msra.mxu0 0.0
    %1047 = vmatprep.subr.mxu0 0.0
    %1048 = vmatpush1.msra.mxu0 0.0
    %1049 = vmatprep.subr.mxu0 0.0
    %1050 = vmatpush1.msra.mxu0 0.0
    %1051 = vmatprep.subr.mxu0 0.0
    %1052 = vmatpush1.msra.mxu0 0.0
    %1053 = vmatprep.subr.mxu0 0.0
    %1054 = vmatpush1.msra.mxu0 0.0
    %1055 = vmatprep.subr.mxu0 0.0
    %1056 = vmatpush1.msra.mxu0 0.0
    %1057 = vmatprep.subr.mxu0 0.0
    %1058 = vmatpush1.msra.mxu0 0.0
    %1059 = vmatprep.subr.mxu0 0.0
    %1060 = vmatpush1.msra.mxu0 0.0
    %1061 = vmatprep.subr.mxu0 0.0
    %1062 = vmatpush1.msra.mxu0 0.0
    %1063 = vmatprep.subr.mxu0 0.0
    %1064 = vmatpush1.msra.mxu0 0.0
    %1065 = vmatprep.subr.mxu0 0.0
    %1066 = vmatpush1.msra.mxu0 0.0
    %1067 = vmatprep.subr.mxu0 0.0
    %1068 = vmatpush1.msra.mxu0 0.0
    %1069 = vmatprep.subr.mxu0 0.0
    %1070 = vmatpush1.msra.mxu0 0.0
    %1071 = vmatprep.subr.mxu0 0.0
    %1072 = vmatpush1.msra.mxu0 0.0
    %1073 = vmatprep.subr.mxu0 0.0
    %1074 = vmatpush1.msra.mxu0 0.0
    %1075 = vmatprep.subr.mxu0 0.0
    %1076 = vmatpush1.msra.mxu0 0.0
    %1077 = vmatprep.mubr.f32.mxu0 0.0
    %1078 = vmatmul.mubr.f32.gmra.mrb[0].mxu0 %v876
    %v1079 = vpop.f32.mrb[0].mxu0
    %v1080 = vadd.f32 0.0, %v1079
    %v1081 = vpop.f32.mrb[0].mxu0
    %v1082 = vadd.f32 0.0, %v1081
    %1083 = vdwg.mxu0
    %v1084 = vadd.f32 %v872, %v1009
    %v1085 = vadd.f32 %v873, %v1011
    %v1086 = vadd.f32 %v874, %v1080
    %v1087 = vadd.f32 %v875, %v1082
    %v1088 = vxor.u32 %v1084, 2147483648
    %v1089 = vmul.f32 %v1088, 1.442695
    %v1090 = vpow.pop %v1089
    %v1091 = vadd.f32 %v1090, 1.0
    %v1092 = vrcp.pop %v1091
    %v1093 = vmul.f32 1.0, %v1092
    %v1094 = vxor.u32 %v1085, 2147483648
    %v1095 = vmul.f32 %v1094, 1.442695
    %v1096 = vpow.pop %v1095
    %v1097 = vadd.f32 %v1096, 1.0
    %v1098 = vrcp.pop %v1097
    %v1099 = vmul.f32 1.0, %v1098
    %v1100 = vtanh.pop %v1086
    %v1101 = vxor.u32 %v1087, 2147483648
    %v1102 = vmul.f32 %v1101, 1.442695
    %v1103 = vpow.pop %v1102
    %v1104 = vadd.f32 %v1103, 1.0
    %v1105 = vrcp.pop %v1104
    %v1106 = vmul.f32 1.0, %v1105
    %v1107 = vmul.f32 %v1099, %v877
    %v1108 = vmul.f32 %v1093, %v1100
    %v1109 = vadd.f32 %v1107, %v1108
    %1110 = vst [vmem:[#allocation3] sm:$0xff] %v1109
    %v1111 = vtanh.pop %v1109
    %v1112 = vmul.f32 %v1106, %v1111
    %1113 = vst [vmem:[#allocation2] sm:$0xff] %v1112
    %s1114 = smul.u32 3, 4
    %s1115 = smul.addr %s1114, 8
    %s1116 = scalar_lea.vmem [#allocation4], %s1115
    %v1117 = vld [vmem:[%s1116] sm:$0xff]
    %v1118 = vld [vmem:[%s1116 + $0x8] sm:$0xff]
    %v1119 = vld [vmem:[%s1116 + $0x10] sm:$0xff]
    %v1120 = vld [vmem:[%s1116 + $0x18] sm:$0xff]
    %v1121 = vld [vmem:[#allocation2] sm:$0xff]
    %v1122 = vld [vmem:[#allocation3] sm:$0xff]
    %v1123 = vld [vmem:[#allocation5] sm:$0xff]
    %v1124 = vld [vmem:[#allocation5 + $0x8] sm:$0xff]
    %v1125 = vld [vmem:[#allocation5 + $0x10] sm:$0xff]
    %v1126 = vld [vmem:[#allocation5 + $0x18] sm:$0xff]
    %v1127 = vld [vmem:[#allocation5 + $0x20] sm:$0xff]
    %v1128 = vld [vmem:[#allocation5 + $0x28] sm:$0xff]
    %v1129 = vld [vmem:[#allocation5 + $0x30] sm:$0xff]
    %v1130 = vld [vmem:[#allocation5 + $0x38] sm:$0xff]
    %v1131 = vld [vmem:[#allocation5 + $0x40] sm:$0xff]
    %v1132 = vld [vmem:[#allocation5 + $0x48] sm:$0xff]
    %v1133 = vld [vmem:[#allocation5 + $0x50] sm:$0xff]
    %v1134 = vld [vmem:[#allocation5 + $0x58] sm:$0xff]
    %v1135 = vld [vmem:[#allocation5 + $0x60] sm:$0xff]
    %v1136 = vld [vmem:[#allocation5 + $0x68] sm:$0xff]
    %v1137 = vld [vmem:[#allocation5 + $0x70] sm:$0xff]
    %v1138 = vld [vmem:[#allocation5 + $0x78] sm:$0xff]
    %v1139 = vld [vmem:[#allocation5 + $0x80] sm:$0xff]
    %v1140 = vld [vmem:[#allocation5 + $0x88] sm:$0xff]
    %v1141 = vld [vmem:[#allocation5 + $0x90] sm:$0xff]
    %v1142 = vld [vmem:[#allocation5 + $0x98] sm:$0xff]
    %v1143 = vld [vmem:[#allocation5 + $0xa0] sm:$0xff]
    %v1144 = vld [vmem:[#allocation5 + $0xa8] sm:$0xff]
    %v1145 = vld [vmem:[#allocation5 + $0xb0] sm:$0xff]
    %v1146 = vld [vmem:[#allocation5 + $0xb8] sm:$0xff]
    %v1147 = vld [vmem:[#allocation5 + $0xc0] sm:$0xff]
    %v1148 = vld [vmem:[#allocation5 + $0xc8] sm:$0xff]
    %v1149 = vld [vmem:[#allocation5 + $0xd0] sm:$0xff]
    %v1150 = vld [vmem:[#allocation5 + $0xd8] sm:$0xff]
    %v1151 = vld [vmem:[#allocation5 + $0xe0] sm:$0xff]
    %v1152 = vld [vmem:[#allocation5 + $0xe8] sm:$0xff]
    %v1153 = vld [vmem:[#allocation5 + $0xf0] sm:$0xff]
    %v1154 = vld [vmem:[#allocation5 + $0xf8] sm:$0xff]
    %v1155 = vld [vmem:[#allocation5 + $0x100] sm:$0xff]
    %v1156 = vld [vmem:[#allocation5 + $0x108] sm:$0xff]
    %v1157 = vld [vmem:[#allocation5 + $0x110] sm:$0xff]
    %v1158 = vld [vmem:[#allocation5 + $0x118] sm:$0xff]
    %v1159 = vld [vmem:[#allocation5 + $0x120] sm:$0xff]
    %v1160 = vld [vmem:[#allocation5 + $0x128] sm:$0xff]
    %v1161 = vld [vmem:[#allocation5 + $0x130] sm:$0xff]
    %v1162 = vld [vmem:[#allocation5 + $0x138] sm:$0xff]
    %v1163 = vld [vmem:[#allocation5 + $0x140] sm:$0xff]
    %v1164 = vld [vmem:[#allocation5 + $0x148] sm:$0xff]
    %v1165 = vld [vmem:[#allocation5 + $0x150] sm:$0xff]
    %v1166 = vld [vmem:[#allocation5 + $0x158] sm:$0xff]
    %v1167 = vld [vmem:[#allocation5 + $0x160] sm:$0xff]
    %v1168 = vld [vmem:[#allocation5 + $0x168] sm:$0xff]
    %v1169 = vld [vmem:[#allocation5 + $0x170] sm:$0xff]
    %v1170 = vld [vmem:[#allocation5 + $0x178] sm:$0xff]
    %v1171 = vld [vmem:[#allocation5 + $0x180] sm:$0xff]
    %v1172 = vld [vmem:[#allocation5 + $0x188] sm:$0xff]
    %v1173 = vld [vmem:[#allocation5 + $0x190] sm:$0xff]
    %v1174 = vld [vmem:[#allocation5 + $0x198] sm:$0xff]
    %v1175 = vld [vmem:[#allocation5 + $0x1a0] sm:$0xff]
    %v1176 = vld [vmem:[#allocation5 + $0x1a8] sm:$0xff]
    %v1177 = vld [vmem:[#allocation5 + $0x1b0] sm:$0xff]
    %v1178 = vld [vmem:[#allocation5 + $0x1b8] sm:$0xff]
    %v1179 = vld [vmem:[#allocation5 + $0x1c0] sm:$0xff]
    %v1180 = vld [vmem:[#allocation5 + $0x1c8] sm:$0xff]
    %v1181 = vld [vmem:[#allocation5 + $0x1d0] sm:$0xff]
    %v1182 = vld [vmem:[#allocation5 + $0x1d8] sm:$0xff]
    %v1183 = vld [vmem:[#allocation5 + $0x1e0] sm:$0xff]
    %v1184 = vld [vmem:[#allocation5 + $0x1e8] sm:$0xff]
    %v1185 = vld [vmem:[#allocation5 + $0x1f0] sm:$0xff]
    %v1186 = vld [vmem:[#allocation5 + $0x1f8] sm:$0xff]
    %1187 = vmatprep.subr.mxu0 %v1124
    %1188 = vmatpush1.msra.mxu0 %v1123
    %1189 = vmatprep.subr.mxu0 %v1128
    %1190 = vmatpush1.msra.mxu0 %v1127
    %1191 = vmatprep.subr.mxu0 %v1132
    %1192 = vmatpush1.msra.mxu0 %v1131
    %1193 = vmatprep.subr.mxu0 %v1136
    %1194 = vmatpush1.msra.mxu0 %v1135
    %1195 = vmatprep.subr.mxu0 %v1140
    %1196 = vmatpush1.msra.mxu0 %v1139
    %1197 = vmatprep.subr.mxu0 %v1144
    %1198 = vmatpush1.msra.mxu0 %v1143
    %1199 = vmatprep.subr.mxu0 %v1148
    %1200 = vmatpush1.msra.mxu0 %v1147
    %1201 = vmatprep.subr.mxu0 %v1152
    %1202 = vmatpush1.msra.mxu0 %v1151
    %1203 = vmatprep.subr.mxu0 %v1156
    %1204 = vmatpush1.msra.mxu0 %v1155
    %1205 = vmatprep.subr.mxu0 %v1160
    %1206 = vmatpush1.msra.mxu0 %v1159
    %1207 = vmatprep.subr.mxu0 %v1164
    %1208 = vmatpush1.msra.mxu0 %v1163
    %1209 = vmatprep.subr.mxu0 %v1168
    %1210 = vmatpush1.msra.mxu0 %v1167
    %1211 = vmatprep.subr.mxu0 %v1172
    %1212 = vmatpush1.msra.mxu0 %v1171
    %1213 = vmatprep.subr.mxu0 %v1176
    %1214 = vmatpush1.msra.mxu0 %v1175
    %1215 = vmatprep.subr.mxu0 %v1180
    %1216 = vmatpush1.msra.mxu0 %v1179
    %1217 = vmatprep.subr.mxu0 %v1184
    %1218 = vmatpush1.msra.mxu0 %v1183
    %1219 = vmatprep.subr.mxu0 0.0
    %1220 = vmatpush1.msra.mxu0 0.0
    %1221 = vmatprep.subr.mxu0 0.0
    %1222 = vmatpush1.msra.mxu0 0.0
    %1223 = vmatprep.subr.mxu0 0.0
    %1224 = vmatpush1.msra.mxu0 0.0
    %1225 = vmatprep.subr.mxu0 0.0
    %1226 = vmatpush1.msra.mxu0 0.0
    %1227 = vmatprep.subr.mxu0 0.0
    %1228 = vmatpush1.msra.mxu0 0.0
    %1229 = vmatprep.subr.mxu0 0.0
    %1230 = vmatpush1.msra.mxu0 0.0
    %1231 = vmatprep.subr.mxu0 0.0
    %1232 = vmatpush1.msra.mxu0 0.0
    %1233 = vmatprep.subr.mxu0 0.0
    %1234 = vmatpush1.msra.mxu0 0.0
    %1235 = vmatprep.subr.mxu0 0.0
    %1236 = vmatpush1.msra.mxu0 0.0
    %1237 = vmatprep.subr.mxu0 0.0
    %1238 = vmatpush1.msra.mxu0 0.0
    %1239 = vmatprep.subr.mxu0 0.0
    %1240 = vmatpush1.msra.mxu0 0.0
    %1241 = vmatprep.subr.mxu0 0.0
    %1242 = vmatpush1.msra.mxu0 0.0
    %1243 = vmatprep.subr.mxu0 0.0
    %1244 = vmatpush1.msra.mxu0 0.0
    %1245 = vmatprep.subr.mxu0 0.0
    %1246 = vmatpush1.msra.mxu0 0.0
    %1247 = vmatprep.subr.mxu0 0.0
    %1248 = vmatpush1.msra.mxu0 0.0
    %1249 = vmatprep.subr.mxu0 0.0
    %1250 = vmatpush1.msra.mxu0 0.0
    %1251 = vmatprep.mubr.f32.mxu0 0.0
    %1252 = vmatmul.mubr.f32.gmra.mrb[0].mxu0 %v1121
    %v1253 = vpop.f32.mrb[0].mxu0
    %v1254 = vadd.f32 0.0, %v1253
    %v1255 = vpop.f32.mrb[0].mxu0
    %v1256 = vadd.f32 0.0, %v1255
    %1257 = vdwg.mxu0
    %1258 = vmatprep.subr.mxu0 %v1126
    %1259 = vmatpush1.msra.mxu0 %v1125
    %1260 = vmatprep.subr.mxu0 %v1130
    %1261 = vmatpush1.msra.mxu0 %v1129
    %1262 = vmatprep.subr.mxu0 %v1134
    %1263 = vmatpush1.msra.mxu0 %v1133
    %1264 = vmatprep.subr.mxu0 %v1138
    %1265 = vmatpush1.msra.mxu0 %v1137
    %1266 = vmatprep.subr.mxu0 %v1142
    %1267 = vmatpush1.msra.mxu0 %v1141
    %1268 = vmatprep.subr.mxu0 %v1146
    %1269 = vmatpush1.msra.mxu0 %v1145
    %1270 = vmatprep.subr.mxu0 %v1150
    %1271 = vmatpush1.msra.mxu0 %v1149
    %1272 = vmatprep.subr.mxu0 %v1154
    %1273 = vmatpush1.msra.mxu0 %v1153
    %1274 = vmatprep.subr.mxu0 %v1158
    %1275 = vmatpush1.msra.mxu0 %v1157
    %1276 = vmatprep.subr.mxu0 %v1162
    %1277 = vmatpush1.msra.mxu0 %v1161
    %1278 = vmatprep.subr.mxu0 %v1166
    %1279 = vmatpush1.msra.mxu0 %v1165
    %1280 = vmatprep.subr.mxu0 %v1170
    %1281 = vmatpush1.msra.mxu0 %v1169
    %1282 = vmatprep.subr.mxu0 %v1174
    %1283 = vmatpush1.msra.mxu0 %v1173
    %1284 = vmatprep.subr.mxu0 %v1178
    %1285 = vmatpush1.msra.mxu0 %v1177
    %1286 = vmatprep.subr.mxu0 %v1182
    %1287 = vmatpush1.msra.mxu0 %v1181
    %1288 = vmatprep.subr.mxu0 %v1186
    %1289 = vmatpush1.msra.mxu0 %v1185
    %1290 = vmatprep.subr.mxu0 0.0
    %1291 = vmatpush1.msra.mxu0 0.0
    %1292 = vmatprep.subr.mxu0 0.0
    %1293 = vmatpush1.msra.mxu0 0.0
    %1294 = vmatprep.subr.mxu0 0.0
    %1295 = vmatpush1.msra.mxu0 0.0
    %1296 = vmatprep.subr.mxu0 0.0
    %1297 = vmatpush1.msra.mxu0 0.0
    %1298 = vmatprep.subr.mxu0 0.0
    %1299 = vmatpush1.msra.mxu0 0.0
    %1300 = vmatprep.subr.mxu0 0.0
    %1301 = vmatpush1.msra.mxu0 0.0
    %1302 = vmatprep.subr.mxu0 0.0
    %1303 = vmatpush1.msra.mxu0 0.0
    %1304 = vmatprep.subr.mxu0 0.0
    %1305 = vmatpush1.msra.mxu0 0.0
    %1306 = vmatprep.subr.mxu0 0.0
    %1307 = vmatpush1.msra.mxu0 0.0
    %1308 = vmatprep.subr.mxu0 0.0
    %1309 = vmatpush1.msra.mxu0 0.0
    %1310 = vmatprep.subr.mxu0 0.0
    %1311 = vmatpush1.msra.mxu0 0.0
    %1312 = vmatprep.subr.mxu0 0.0
    %1313 = vmatpush1.msra.mxu0 0.0
    %1314 = vmatprep.subr.mxu0 0.0
    %1315 = vmatpush1.msra.mxu0 0.0
    %1316 = vmatprep.subr.mxu0 0.0
    %1317 = vmatpush1.msra.mxu0 0.0
    %1318 = vmatprep.subr.mxu0 0.0
    %1319 = vmatpush1.msra.mxu0 0.0
    %1320 = vmatprep.subr.mxu0 0.0
    %1321 = vmatpush1.msra.mxu0 0.0
    %1322 = vmatprep.mubr.f32.mxu0 0.0
    %1323 = vmatmul.mubr.f32.gmra.mrb[0].mxu0 %v1121
    %v1324 = vpop.f32.mrb[0].mxu0
    %v1325 = vadd.f32 0.0, %v1324
    %v1326 = vpop.f32.mrb[0].mxu0
    %v1327 = vadd.f32 0.0, %v1326
    %1328 = vdwg.mxu0
    %v1329 = vadd.f32 %v1117, %v1254
    %v1330 = vadd.f32 %v1118, %v1256
    %v1331 = vadd.f32 %v1119, %v1325
    %v1332 = vadd.f32 %v1120, %v1327
    %v1333 = vxor.u32 %v1329, 2147483648
    %v1334 = vmul.f32 %v1333, 1.442695
    %v1335 = vpow.pop %v1334
    %v1336 = vadd.f32 %v1335, 1.0
    %v1337 = vrcp.pop %v1336
    %v1338 = vmul.f32 1.0, %v1337
    %v1339 = vxor.u32 %v1330, 2147483648
    %v1340 = vmul.f32 %v1339, 1.442695
    %v1341 = vpow.pop %v1340
    %v1342 = vadd.f32 %v1341, 1.0
    %v1343 = vrcp.pop %v1342
    %v1344 = vmul.f32 1.0, %v1343
    %v1345 = vtanh.pop %v1331
    %v1346 = vxor.u32 %v1332, 2147483648
    %v1347 = vmul.f32 %v1346, 1.442695
    %v1348 = vpow.pop %v1347
    %v1349 = vadd.f32 %v1348, 1.0
    %v1350 = vrcp.pop %v1349
    %v1351 = vmul.f32 1.0, %v1350
    %v1352 = vmul.f32 %v1344, %v1122
    %v1353 = vmul.f32 %v1338, %v1345
    %v1354 = vadd.f32 %v1352, %v1353
    %1355 = vst [vmem:[#allocation3] sm:$0xff] %v1354
    %v1356 = vtanh.pop %v1354
    %v1357 = vmul.f32 %v1351, %v1356
    %1358 = vst [vmem:[#allocation2] sm:$0xff] %v1357
    %s1359 = smul.u32 4, 4
    %s1360 = smul.addr %s1359, 8
    %s1361 = scalar_lea.vmem [#allocation4], %s1360
    %v1362 = vld [vmem:[%s1361] sm:$0xff]
    %v1363 = vld [vmem:[%s1361 + $0x8] sm:$0xff]
    %v1364 = vld [vmem:[%s1361 + $0x10] sm:$0xff]
    %v1365 = vld [vmem:[%s1361 + $0x18] sm:$0xff]
    %v1366 = vld [vmem:[#allocation2] sm:$0xff]
    %v1367 = vld [vmem:[#allocation3] sm:$0xff]
    %v1368 = vld [vmem:[#allocation5] sm:$0xff]
    %v1369 = vld [vmem:[#allocation5 + $0x8] sm:$0xff]
    %v1370 = vld [vmem:[#allocation5 + $0x10] sm:$0xff]
    %v1371 = vld [vmem:[#allocation5 + $0x18] sm:$0xff]
    %v1372 = vld [vmem:[#allocation5 + $0x20] sm:$0xff]
    %v1373 = vld [vmem:[#allocation5 + $0x28] sm:$0xff]
    %v1374 = vld [vmem:[#allocation5 + $0x30] sm:$0xff]
    %v1375 = vld [vmem:[#allocation5 + $0x38] sm:$0xff]
    %v1376 = vld [vmem:[#allocation5 + $0x40] sm:$0xff]
    %v1377 = vld [vmem:[#allocation5 + $0x48] sm:$0xff]
    %v1378 = vld [vmem:[#allocation5 + $0x50] sm:$0xff]
    %v1379 = vld [vmem:[#allocation5 + $0x58] sm:$0xff]
    %v1380 = vld [vmem:[#allocation5 + $0x60] sm:$0xff]
    %v1381 = vld [vmem:[#allocation5 + $0x68] sm:$0xff]
    %v1382 = vld [vmem:[#allocation5 + $0x70] sm:$0xff]
    %v1383 = vld [vmem:[#allocation5 + $0x78] sm:$0xff]
    %v1384 = vld [vmem:[#allocation5 + $0x80] sm:$0xff]
    %v1385 = vld [vmem:[#allocation5 + $0x88] sm:$0xff]
    %v1386 = vld [vmem:[#allocation5 + $0x90] sm:$0xff]
    %v1387 = vld [vmem:[#allocation5 + $0x98] sm:$0xff]
    %v1388 = vld [vmem:[#allocation5 + $0xa0] sm:$0xff]
    %v1389 = vld [vmem:[#allocation5 + $0xa8] sm:$0xff]
    %v1390 = vld [vmem:[#allocation5 + $0xb0] sm:$0xff]
    %v1391 = vld [vmem:[#allocation5 + $0xb8] sm:$0xff]
    %v1392 = vld [vmem:[#allocation5 + $0xc0] sm:$0xff]
    %v1393 = vld [vmem:[#allocation5 + $0xc8] sm:$0xff]
    %v1394 = vld [vmem:[#allocation5 + $0xd0] sm:$0xff]
    %v1395 = vld [vmem:[#allocation5 + $0xd8] sm:$0xff]
    %v1396 = vld [vmem:[#allocation5 + $0xe0] sm:$0xff]
    %v1397 = vld [vmem:[#allocation5 + $0xe8] sm:$0xff]
    %v1398 = vld [vmem:[#allocation5 + $0xf0] sm:$0xff]
    %v1399 = vld [vmem:[#allocation5 + $0xf8] sm:$0xff]
    %v1400 = vld [vmem:[#allocation5 + $0x100] sm:$0xff]
    %v1401 = vld [vmem:[#allocation5 + $0x108] sm:$0xff]
    %v1402 = vld [vmem:[#allocation5 + $0x110] sm:$0xff]
    %v1403 = vld [vmem:[#allocation5 + $0x118] sm:$0xff]
    %v1404 = vld [vmem:[#allocation5 + $0x120] sm:$0xff]
    %v1405 = vld [vmem:[#allocation5 + $0x128] sm:$0xff]
    %v1406 = vld [vmem:[#allocation5 + $0x130] sm:$0xff]
    %v1407 = vld [vmem:[#allocation5 + $0x138] sm:$0xff]
    %v1408 = vld [vmem:[#allocation5 + $0x140] sm:$0xff]
    %v1409 = vld [vmem:[#allocation5 + $0x148] sm:$0xff]
    %v1410 = vld [vmem:[#allocation5 + $0x150] sm:$0xff]
    %v1411 = vld [vmem:[#allocation5 + $0x158] sm:$0xff]
    %v1412 = vld [vmem:[#allocation5 + $0x160] sm:$0xff]
    %v1413 = vld [vmem:[#allocation5 + $0x168] sm:$0xff]
    %v1414 = vld [vmem:[#allocation5 + $0x170] sm:$0xff]
    %v1415 = vld [vmem:[#allocation5 + $0x178] sm:$0xff]
    %v1416 = vld [vmem:[#allocation5 + $0x180] sm:$0xff]
    %v1417 = vld [vmem:[#allocation5 + $0x188] sm:$0xff]
    %v1418 = vld [vmem:[#allocation5 + $0x190] sm:$0xff]
    %v1419 = vld [vmem:[#allocation5 + $0x198] sm:$0xff]
    %v1420 = vld [vmem:[#allocation5 + $0x1a0] sm:$0xff]
    %v1421 = vld [vmem:[#allocation5 + $0x1a8] sm:$0xff]
    %v1422 = vld [vmem:[#allocation5 + $0x1b0] sm:$0xff]
    %v1423 = vld [vmem:[#allocation5 + $0x1b8] sm:$0xff]
    %v1424 = vld [vmem:[#allocation5 + $0x1c0] sm:$0xff]
    %v1425 = vld [vmem:[#allocation5 + $0x1c8] sm:$0xff]
    %v1426 = vld [vmem:[#allocation5 + $0x1d0] sm:$0xff]
    %v1427 = vld [vmem:[#allocation5 + $0x1d8] sm:$0xff]
    %v1428 = vld [vmem:[#allocation5 + $0x1e0] sm:$0xff]
    %v1429 = vld [vmem:[#allocation5 + $0x1e8] sm:$0xff]
    %v1430 = vld [vmem:[#allocation5 + $0x1f0] sm:$0xff]
    %v1431 = vld [vmem:[#allocation5 + $0x1f8] sm:$0xff]
    %1432 = vmatprep.subr.mxu0 %v1369
    %1433 = vmatpush1.msra.mxu0 %v1368
    %1434 = vmatprep.subr.mxu0 %v1373
    %1435 = vmatpush1.msra.mxu0 %v1372
    %1436 = vmatprep.subr.mxu0 %v1377
    %1437 = vmatpush1.msra.mxu0 %v1376
    %1438 = vmatprep.subr.mxu0 %v1381
    %1439 = vmatpush1.msra.mxu0 %v1380
    %1440 = vmatprep.subr.mxu0 %v1385
    %1441 = vmatpush1.msra.mxu0 %v1384
    %1442 = vmatprep.subr.mxu0 %v1389
    %1443 = vmatpush1.msra.mxu0 %v1388
    %1444 = vmatprep.subr.mxu0 %v1393
    %1445 = vmatpush1.msra.mxu0 %v1392
    %1446 = vmatprep.subr.mxu0 %v1397
    %1447 = vmatpush1.msra.mxu0 %v1396
    %1448 = vmatprep.subr.mxu0 %v1401
    %1449 = vmatpush1.msra.mxu0 %v1400
    %1450 = vmatprep.subr.mxu0 %v1405
    %1451 = vmatpush1.msra.mxu0 %v1404
    %1452 = vmatprep.subr.mxu0 %v1409
    %1453 = vmatpush1.msra.mxu0 %v1408
    %1454 = vmatprep.subr.mxu0 %v1413
    %1455 = vmatpush1.msra.mxu0 %v1412
    %1456 = vmatprep.subr.mxu0 %v1417
    %1457 = vmatpush1.msra.mxu0 %v1416
    %1458 = vmatprep.subr.mxu0 %v1421
    %1459 = vmatpush1.msra.mxu0 %v1420
    %1460 = vmatprep.subr.mxu0 %v1425
    %1461 = vmatpush1.msra.mxu0 %v1424
    %1462 = vmatprep.subr.mxu0 %v1429
    %1463 = vmatpush1.msra.mxu0 %v1428
    %1464 = vmatprep.subr.mxu0 0.0
    %1465 = vmatpush1.msra.mxu0 0.0
    %1466 = vmatprep.subr.mxu0 0.0
    %1467 = vmatpush1.msra.mxu0 0.0
    %1468 = vmatprep.subr.mxu0 0.0
    %1469 = vmatpush1.msra.mxu0 0.0
    %1470 = vmatprep.subr.mxu0 0.0
    %1471 = vmatpush1.msra.mxu0 0.0
    %1472 = vmatprep.subr.mxu0 0.0
    %1473 = vmatpush1.msra.mxu0 0.0
    %1474 = vmatprep.subr.mxu0 0.0
    %1475 = vmatpush1.msra.mxu0 0.0
    %1476 = vmatprep.subr.mxu0 0.0
    %1477 = vmatpush1.msra.mxu0 0.0
    %1478 = vmatprep.subr.mxu0 0.0
    %1479 = vmatpush1.msra.mxu0 0.0
    %1480 = vmatprep.subr.mxu0 0.0
    %1481 = vmatpush1.msra.mxu0 0.0
    %1482 = vmatprep.subr.mxu0 0.0
    %1483 = vmatpush1.msra.mxu0 0.0
    %1484 = vmatprep.subr.mxu0 0.0
    %1485 = vmatpush1.msra.mxu0 0.0
    %1486 = vmatprep.subr.mxu0 0.0
    %1487 = vmatpush1.msra.mxu0 0.0
    %1488 = vmatprep.subr.mxu0 0.0
    %1489 = vmatpush1.msra.mxu0 0.0
    %1490 = vmatprep.subr.mxu0 0.0
    %1491 = vmatpush1.msra.mxu0 0.0
    %1492 = vmatprep.subr.mxu0 0.0
    %1493 = vmatpush1.msra.mxu0 0.0
    %1494 = vmatprep.subr.mxu0 0.0
    %1495 = vmatpush1.msra.mxu0 0.0
    %1496 = vmatprep.mubr.f32.mxu0 0.0
    %1497 = vmatmul.mubr.f32.gmra.mrb[0].mxu0 %v1366
    %v1498 = vpop.f32.mrb[0].mxu0
    %v1499 = vadd.f32 0.0, %v1498
    %v1500 = vpop.f32.mrb[0].mxu0
    %v1501 = vadd.f32 0.0, %v1500
    %1502 = vdwg.mxu0
    %1503 = vmatprep.subr.mxu0 %v1371
    %1504 = vmatpush1.msra.mxu0 %v1370
    %1505 = vmatprep.subr.mxu0 %v1375
    %1506 = vmatpush1.msra.mxu0 %v1374
    %1507 = vmatprep.subr.mxu0 %v1379
    %1508 = vmatpush1.msra.mxu0 %v1378
    %1509 = vmatprep.subr.mxu0 %v1383
    %1510 = vmatpush1.msra.mxu0 %v1382
    %1511 = vmatprep.subr.mxu0 %v1387
    %1512 = vmatpush1.msra.mxu0 %v1386
    %1513 = vmatprep.subr.mxu0 %v1391
    %1514 = vmatpush1.msra.mxu0 %v1390
    %1515 = vmatprep.subr.mxu0 %v1395
    %1516 = vmatpush1.msra.mxu0 %v1394
    %1517 = vmatprep.subr.mxu0 %v1399
    %1518 = vmatpush1.msra.mxu0 %v1398
    %1519 = vmatprep.subr.mxu0 %v1403
    %1520 = vmatpush1.msra.mxu0 %v1402
    %1521 = vmatprep.subr.mxu0 %v1407
    %1522 = vmatpush1.msra.mxu0 %v1406
    %1523 = vmatprep.subr.mxu0 %v1411
    %1524 = vmatpush1.msra.mxu0 %v1410
    %1525 = vmatprep.subr.mxu0 %v1415
    %1526 = vmatpush1.msra.mxu0 %v1414
    %1527 = vmatprep.subr.mxu0 %v1419
    %1528 = vmatpush1.msra.mxu0 %v1418
    %1529 = vmatprep.subr.mxu0 %v1423
    %1530 = vmatpush1.msra.mxu0 %v1422
    %1531 = vmatprep.subr.mxu0 %v1427
    %1532 = vmatpush1.msra.mxu0 %v1426
    %1533 = vmatprep.subr.mxu0 %v1431
    %1534 = vmatpush1.msra.mxu0 %v1430
    %1535 = vmatprep.subr.mxu0 0.0
    %1536 = vmatpush1.msra.mxu0 0.0
    %1537 = vmatprep.subr.mxu0 0.0
    %1538 = vmatpush1.msra.mxu0 0.0
    %1539 = vmatprep.subr.mxu0 0.0
    %1540 = vmatpush1.msra.mxu0 0.0
    %1541 = vmatprep.subr.mxu0 0.0
    %1542 = vmatpush1.msra.mxu0 0.0
    %1543 = vmatprep.subr.mxu0 0.0
    %1544 = vmatpush1.msra.mxu0 0.0
    %1545 = vmatprep.subr.mxu0 0.0
    %1546 = vmatpush1.msra.mxu0 0.0
    %1547 = vmatprep.subr.mxu0 0.0
    %1548 = vmatpush1.msra.mxu0 0.0
    %1549 = vmatprep.subr.mxu0 0.0
    %1550 = vmatpush1.msra.mxu0 0.0
    %1551 = vmatprep.subr.mxu0 0.0
    %1552 = vmatpush1.msra.mxu0 0.0
    %1553 = vmatprep.subr.mxu0 0.0
    %1554 = vmatpush1.msra.mxu0 0.0
    %1555 = vmatprep.subr.mxu0 0.0
    %1556 = vmatpush1.msra.mxu0 0.0
    %1557 = vmatprep.subr.mxu0 0.0
    %1558 = vmatpush1.msra.mxu0 0.0
    %1559 = vmatprep.subr.mxu0 0.0
    %1560 = vmatpush1.msra.mxu0 0.0
    %1561 = vmatprep.subr.mxu0 0.0
    %1562 = vmatpush1.msra.mxu0 0.0
    %1563 = vmatprep.subr.mxu0 0.0
    %1564 = vmatpush1.msra.mxu0 0.0
    %1565 = vmatprep.subr.mxu0 0.0
    %1566 = vmatpush1.msra.mxu0 0.0
    %1567 = vmatprep.mubr.f32.mxu0 0.0
    %1568 = vmatmul.mubr.f32.gmra.mrb[0].mxu0 %v1366
    %v1569 = vpop.f32.mrb[0].mxu0
    %v1570 = vadd.f32 0.0, %v1569
    %v1571 = vpop.f32.mrb[0].mxu0
    %v1572 = vadd.f32 0.0, %v1571
    %1573 = vdwg.mxu0
    %v1574 = vadd.f32 %v1362, %v1499
    %v1575 = vadd.f32 %v1363, %v1501
    %v1576 = vadd.f32 %v1364, %v1570
    %v1577 = vadd.f32 %v1365, %v1572
    %v1578 = vxor.u32 %v1574, 2147483648
    %v1579 = vmul.f32 %v1578, 1.442695
    %v1580 = vpow.pop %v1579
    %v1581 = vadd.f32 %v1580, 1.0
    %v1582 = vrcp.pop %v1581
    %v1583 = vmul.f32 1.0, %v1582
    %v1584 = vxor.u32 %v1575, 2147483648
    %v1585 = vmul.f32 %v1584, 1.442695
    %v1586 = vpow.pop %v1585
    %v1587 = vadd.f32 %v1586, 1.0
    %v1588 = vrcp.pop %v1587
    %v1589 = vmul.f32 1.0, %v1588
    %v1590 = vtanh.pop %v1576
    %v1591 = vxor.u32 %v1577, 2147483648
    %v1592 = vmul.f32 %v1591, 1.442695
    %v1593 = vpow.pop %v1592
    %v1594 = vadd.f32 %v1593, 1.0
    %v1595 = vrcp.pop %v1594
    %v1596 = vmul.f32 1.0, %v1595
    %v1597 = vmul.f32 %v1589, %v1367
    %v1598 = vmul.f32 %v1583, %v1590
    %v1599 = vadd.f32 %v1597, %v1598
    %1600 = vst [vmem:[#allocation3] sm:$0xff] %v1599
    %v1601 = vtanh.pop %v1599
    %v1602 = vmul.f32 %v1596, %v1601
    %1603 = vst [vmem:[#allocation2] sm:$0xff] %v1602
    %s1604 = smul.u32 5, 4
    %s1605 = smul.addr %s1604, 8
    %s1606 = scalar_lea.vmem [#allocation4], %s1605
    %v1607 = vld [vmem:[%s1606] sm:$0xff]
    %v1608 = vld [vmem:[%s1606 + $0x8] sm:$0xff]
    %v1609 = vld [vmem:[%s1606 + $0x10] sm:$0xff]
    %v1610 = vld [vmem:[%s1606 + $0x18] sm:$0xff]
    %v1611 = vld [vmem:[#allocation2] sm:$0xff]
    %v1612 = vld [vmem:[#allocation3] sm:$0xff]
    %v1613 = vld [vmem:[#allocation5] sm:$0xff]
    %v1614 = vld [vmem:[#allocation5 + $0x8] sm:$0xff]
    %v1615 = vld [vmem:[#allocation5 + $0x10] sm:$0xff]
    %v1616 = vld [vmem:[#allocation5 + $0x18] sm:$0xff]
    %v1617 = vld [vmem:[#allocation5 + $0x20] sm:$0xff]
    %v1618 = vld [vmem:[#allocation5 + $0x28] sm:$0xff]
    %v1619 = vld [vmem:[#allocation5 + $0x30] sm:$0xff]
    %v1620 = vld [vmem:[#allocation5 + $0x38] sm:$0xff]
    %v1621 = vld [vmem:[#allocation5 + $0x40] sm:$0xff]
    %v1622 = vld [vmem:[#allocation5 + $0x48] sm:$0xff]
    %v1623 = vld [vmem:[#allocation5 + $0x50] sm:$0xff]
    %v1624 = vld [vmem:[#allocation5 + $0x58] sm:$0xff]
    %v1625 = vld [vmem:[#allocation5 + $0x60] sm:$0xff]
    %v1626 = vld [vmem:[#allocation5 + $0x68] sm:$0xff]
    %v1627 = vld [vmem:[#allocation5 + $0x70] sm:$0xff]
    %v1628 = vld [vmem:[#allocation5 + $0x78] sm:$0xff]
    %v1629 = vld [vmem:[#allocation5 + $0x80] sm:$0xff]
    %v1630 = vld [vmem:[#allocation5 + $0x88] sm:$0xff]
    %v1631 = vld [vmem:[#allocation5 + $0x90] sm:$0xff]
    %v1632 = vld [vmem:[#allocation5 + $0x98] sm:$0xff]
    %v1633 = vld [vmem:[#allocation5 + $0xa0] sm:$0xff]
    %v1634 = vld [vmem:[#allocation5 + $0xa8] sm:$0xff]
    %v1635 = vld [vmem:[#allocation5 + $0xb0] sm:$0xff]
    %v1636 = vld [vmem:[#allocation5 + $0xb8] sm:$0xff]
    %v1637 = vld [vmem:[#allocation5 + $0xc0] sm:$0xff]
    %v1638 = vld [vmem:[#allocation5 + $0xc8] sm:$0xff]
    %v1639 = vld [vmem:[#allocation5 + $0xd0] sm:$0xff]
    %v1640 = vld [vmem:[#allocation5 + $0xd8] sm:$0xff]
    %v1641 = vld [vmem:[#allocation5 + $0xe0] sm:$0xff]
    %v1642 = vld [vmem:[#allocation5 + $0xe8] sm:$0xff]
    %v1643 = vld [vmem:[#allocation5 + $0xf0] sm:$0xff]
    %v1644 = vld [vmem:[#allocation5 + $0xf8] sm:$0xff]
    %v1645 = vld [vmem:[#allocation5 + $0x100] sm:$0xff]
    %v1646 = vld [vmem:[#allocation5 + $0x108] sm:$0xff]
    %v1647 = vld [vmem:[#allocation5 + $0x110] sm:$0xff]
    %v1648 = vld [vmem:[#allocation5 + $0x118] sm:$0xff]
    %v1649 = vld [vmem:[#allocation5 + $0x120] sm:$0xff]
    %v1650 = vld [vmem:[#allocation5 + $0x128] sm:$0xff]
    %v1651 = vld [vmem:[#allocation5 + $0x130] sm:$0xff]
    %v1652 = vld [vmem:[#allocation5 + $0x138] sm:$0xff]
    %v1653 = vld [vmem:[#allocation5 + $0x140] sm:$0xff]
    %v1654 = vld [vmem:[#allocation5 + $0x148] sm:$0xff]
    %v1655 = vld [vmem:[#allocation5 + $0x150] sm:$0xff]
    %v1656 = vld [vmem:[#allocation5 + $0x158] sm:$0xff]
    %v1657 = vld [vmem:[#allocation5 + $0x160] sm:$0xff]
    %v1658 = vld [vmem:[#allocation5 + $0x168] sm:$0xff]
    %v1659 = vld [vmem:[#allocation5 + $0x170] sm:$0xff]
    %v1660 = vld [vmem:[#allocation5 + $0x178] sm:$0xff]
    %v1661 = vld [vmem:[#allocation5 + $0x180] sm:$0xff]
    %v1662 = vld [vmem:[#allocation5 + $0x188] sm:$0xff]
    %v1663 = vld [vmem:[#allocation5 + $0x190] sm:$0xff]
    %v1664 = vld [vmem:[#allocation5 + $0x198] sm:$0xff]
    %v1665 = vld [vmem:[#allocation5 + $0x1a0] sm:$0xff]
    %v1666 = vld [vmem:[#allocation5 + $0x1a8] sm:$0xff]
    %v1667 = vld [vmem:[#allocation5 + $0x1b0] sm:$0xff]
    %v1668 = vld [vmem:[#allocation5 + $0x1b8] sm:$0xff]
    %v1669 = vld [vmem:[#allocation5 + $0x1c0] sm:$0xff]
    %v1670 = vld [vmem:[#allocation5 + $0x1c8] sm:$0xff]
    %v1671 = vld [vmem:[#allocation5 + $0x1d0] sm:$0xff]
    %v1672 = vld [vmem:[#allocation5 + $0x1d8] sm:$0xff]
    %v1673 = vld [vmem:[#allocation5 + $0x1e0] sm:$0xff]
    %v1674 = vld [vmem:[#allocation5 + $0x1e8] sm:$0xff]
    %v1675 = vld [vmem:[#allocation5 + $0x1f0] sm:$0xff]
    %v1676 = vld [vmem:[#allocation5 + $0x1f8] sm:$0xff]
    %1677 = vmatprep.subr.mxu0 %v1614
    %1678 = vmatpush1.msra.mxu0 %v1613
    %1679 = vmatprep.subr.mxu0 %v1618
    %1680 = vmatpush1.msra.mxu0 %v1617
    %1681 = vmatprep.subr.mxu0 %v1622
    %1682 = vmatpush1.msra.mxu0 %v1621
    %1683 = vmatprep.subr.mxu0 %v1626
    %1684 = vmatpush1.msra.mxu0 %v1625
    %1685 = vmatprep.subr.mxu0 %v1630
    %1686 = vmatpush1.msra.mxu0 %v1629
    %1687 = vmatprep.subr.mxu0 %v1634
    %1688 = vmatpush1.msra.mxu0 %v1633
    %1689 = vmatprep.subr.mxu0 %v1638
    %1690 = vmatpush1.msra.mxu0 %v1637
    %1691 = vmatprep.subr.mxu0 %v1642
    %1692 = vmatpush1.msra.mxu0 %v1641
    %1693 = vmatprep.subr.mxu0 %v1646
    %1694 = vmatpush1.msra.mxu0 %v1645
    %1695 = vmatprep.subr.mxu0 %v1650
    %1696 = vmatpush1.msra.mxu0 %v1649
    %1697 = vmatprep.subr.mxu0 %v1654
    %1698 = vmatpush1.msra.mxu0 %v1653
    %1699 = vmatprep.subr.mxu0 %v1658
    %1700 = vmatpush1.msra.mxu0 %v1657
    %1701 = vmatprep.subr.mxu0 %v1662
    %1702 = vmatpush1.msra.mxu0 %v1661
    %1703 = vmatprep.subr.mxu0 %v1666
    %1704 = vmatpush1.msra.mxu0 %v1665
    %1705 = vmatprep.subr.mxu0 %v1670
    %1706 = vmatpush1.msra.mxu0 %v1669
    %1707 = vmatprep.subr.mxu0 %v1674
    %1708 = vmatpush1.msra.mxu0 %v1673
    %1709 = vmatprep.subr.mxu0 0.0
    %1710 = vmatpush1.msra.mxu0 0.0
    %1711 = vmatprep.subr.mxu0 0.0
    %1712 = vmatpush1.msra.mxu0 0.0
    %1713 = vmatprep.subr.mxu0 0.0
    %1714 = vmatpush1.msra.mxu0 0.0
    %1715 = vmatprep.subr.mxu0 0.0
    %1716 = vmatpush1.msra.mxu0 0.0
    %1717 = vmatprep.subr.mxu0 0.0
    %1718 = vmatpush1.msra.mxu0 0.0
    %1719 = vmatprep.subr.mxu0 0.0
    %1720 = vmatpush1.msra.mxu0 0.0
    %1721 = vmatprep.subr.mxu0 0.0
    %1722 = vmatpush1.msra.mxu0 0.0
    %1723 = vmatprep.subr.mxu0 0.0
    %1724 = vmatpush1.msra.mxu0 0.0
    %1725 = vmatprep.subr.mxu0 0.0
    %1726 = vmatpush1.msra.mxu0 0.0
    %1727 = vmatprep.subr.mxu0 0.0
    %1728 = vmatpush1.msra.mxu0 0.0
    %1729 = vmatprep.subr.mxu0 0.0
    %1730 = vmatpush1.msra.mxu0 0.0
    %1731 = vmatprep.subr.mxu0 0.0
    %1732 = vmatpush1.msra.mxu0 0.0
    %1733 = vmatprep.subr.mxu0 0.0
    %1734 = vmatpush1.msra.mxu0 0.0
    %1735 = vmatprep.subr.mxu0 0.0
    %1736 = vmatpush1.msra.mxu0 0.0
    %1737 = vmatprep.subr.mxu0 0.0
    %1738 = vmatpush1.msra.mxu0 0.0
    %1739 = vmatprep.subr.mxu0 0.0
    %1740 = vmatpush1.msra.mxu0 0.0
    %1741 = vmatprep.mubr.f32.mxu0 0.0
    %1742 = vmatmul.mubr.f32.gmra.mrb[0].mxu0 %v1611
    %v1743 = vpop.f32.mrb[0].mxu0
    %v1744 = vadd.f32 0.0, %v1743
    %v1745 = vpop.f32.mrb[0].mxu0
    %v1746 = vadd.f32 0.0, %v1745
    %1747 = vdwg.mxu0
    %1748 = vmatprep.subr.mxu0 %v1616
    %1749 = vmatpush1.msra.mxu0 %v1615
    %1750 = vmatprep.subr.mxu0 %v1620
    %1751 = vmatpush1.msra.mxu0 %v1619
    %1752 = vmatprep.subr.mxu0 %v1624
    %1753 = vmatpush1.msra.mxu0 %v1623
    %1754 = vmatprep.subr.mxu0 %v1628
    %1755 = vmatpush1.msra.mxu0 %v1627
    %1756 = vmatprep.subr.mxu0 %v1632
    %1757 = vmatpush1.msra.mxu0 %v1631
    %1758 = vmatprep.subr.mxu0 %v1636
    %1759 = vmatpush1.msra.mxu0 %v1635
    %1760 = vmatprep.subr.mxu0 %v1640
    %1761 = vmatpush1.msra.mxu0 %v1639
    %1762 = vmatprep.subr.mxu0 %v1644
    %1763 = vmatpush1.msra.mxu0 %v1643
    %1764 = vmatprep.subr.mxu0 %v1648
    %1765 = vmatpush1.msra.mxu0 %v1647
    %1766 = vmatprep.subr.mxu0 %v1652
    %1767 = vmatpush1.msra.mxu0 %v1651
    %1768 = vmatprep.subr.mxu0 %v1656
    %1769 = vmatpush1.msra.mxu0 %v1655
    %1770 = vmatprep.subr.mxu0 %v1660
    %1771 = vmatpush1.msra.mxu0 %v1659
    %1772 = vmatprep.subr.mxu0 %v1664
    %1773 = vmatpush1.msra.mxu0 %v1663
    %1774 = vmatprep.subr.mxu0 %v1668
    %1775 = vmatpush1.msra.mxu0 %v1667
    %1776 = vmatprep.subr.mxu0 %v1672
    %1777 = vmatpush1.msra.mxu0 %v1671
    %1778 = vmatprep.subr.mxu0 %v1676
    %1779 = vmatpush1.msra.mxu0 %v1675
    %1780 = vmatprep.subr.mxu0 0.0
    %1781 = vmatpush1.msra.mxu0 0.0
    %1782 = vmatprep.subr.mxu0 0.0
    %1783 = vmatpush1.msra.mxu0 0.0
    %1784 = vmatprep.subr.mxu0 0.0
    %1785 = vmatpush1.msra.mxu0 0.0
    %1786 = vmatprep.subr.mxu0 0.0
    %1787 = vmatpush1.msra.mxu0 0.0
    %1788 = vmatprep.subr.mxu0 0.0
    %1789 = vmatpush1.msra.mxu0 0.0
    %1790 = vmatprep.subr.mxu0 0.0
    %1791 = vmatpush1.msra.mxu0 0.0
    %1792 = vmatprep.subr.mxu0 0.0
    %1793 = vmatpush1.msra.mxu0 0.0
    %1794 = vmatprep.subr.mxu0 0.0
    %1795 = vmatpush1.msra.mxu0 0.0
    %1796 = vmatprep.subr.mxu0 0.0
    %1797 = vmatpush1.msra.mxu0 0.0
    %1798 = vmatprep.subr.mxu0 0.0
    %1799 = vmatpush1.msra.mxu0 0.0
    %1800 = vmatprep.subr.mxu0 0.0
    %1801 = vmatpush1.msra.mxu0 0.0
    %1802 = vmatprep.subr.mxu0 0.0
    %1803 = vmatpush1.msra.mxu0 0.0
    %1804 = vmatprep.subr.mxu0 0.0
    %1805 = vmatpush1.msra.mxu0 0.0
    %1806 = vmatprep.subr.mxu0 0.0
    %1807 = vmatpush1.msra.mxu0 0.0
    %1808 = vmatprep.subr.mxu0 0.0
    %1809 = vmatpush1.msra.mxu0 0.0
    %1810 = vmatprep.subr.mxu0 0.0
    %1811 = vmatpush1.msra.mxu0 0.0
    %1812 = vmatprep.mubr.f32.mxu0 0.0
    %1813 = vmatmul.mubr.f32.gmra.mrb[0].mxu0 %v1611
    %v1814 = vpop.f32.mrb[0].mxu0
    %v1815 = vadd.f32 0.0, %v1814
    %v1816 = vpop.f32.mrb[0].mxu0
    %v1817 = vadd.f32 0.0, %v1816
    %1818 = vdwg.mxu0
    %v1819 = vadd.f32 %v1607, %v1744
    %v1820 = vadd.f32 %v1608, %v1746
    %v1821 = vadd.f32 %v1609, %v1815
    %v1822 = vadd.f32 %v1610, %v1817
    %v1823 = vxor.u32 %v1819, 2147483648
    %v1824 = vmul.f32 %v1823, 1.442695
    %v1825 = vpow.pop %v1824
    %v1826 = vadd.f32 %v1825, 1.0
    %v1827 = vrcp.pop %v1826
    %v1828 = vmul.f32 1.0, %v1827
    %v1829 = vxor.u32 %v1820, 2147483648
    %v1830 = vmul.f32 %v1829, 1.442695
    %v1831 = vpow.pop %v1830
    %v1832 = vadd.f32 %v1831, 1.0
    %v1833 = vrcp.pop %v1832
    %v1834 = vmul.f32 1.0, %v1833
    %v1835 = vtanh.pop %v1821
    %v1836 = vxor.u32 %v1822, 2147483648
    %v1837 = vmul.f32 %v1836, 1.442695
    %v1838 = vpow.pop %v1837
    %v1839 = vadd.f32 %v1838, 1.0
    %v1840 = vrcp.pop %v1839
    %v1841 = vmul.f32 1.0, %v1840
    %v1842 = vmul.f32 %v1834, %v1612
    %v1843 = vmul.f32 %v1828, %v1835
    %v1844 = vadd.f32 %v1842, %v1843
    %1845 = vst [vmem:[#allocation3] sm:$0xff] %v1844
    %v1846 = vtanh.pop %v1844
    %v1847 = vmul.f32 %v1841, %v1846
    %1848 = vst [vmem:[#allocation2] sm:$0xff] %v1847
    %s1849 = smul.u32 6, 4
    %s1850 = smul.addr %s1849, 8
    %s1851 = scalar_lea.vmem [#allocation4], %s1850
    %v1852 = vld [vmem:[%s1851] sm:$0xff]
    %v1853 = vld [vmem:[%s1851 + $0x8] sm:$0xff]
    %v1854 = vld [vmem:[%s1851 + $0x10] sm:$0xff]
    %v1855 = vld [vmem:[%s1851 + $0x18] sm:$0xff]
    %v1856 = vld [vmem:[#allocation2] sm:$0xff]
    %v1857 = vld [vmem:[#allocation3] sm:$0xff]
    %v1858 = vld [vmem:[#allocation5] sm:$0xff]
    %v1859 = vld [vmem:[#allocation5 + $0x8] sm:$0xff]
    %v1860 = vld [vmem:[#allocation5 + $0x10] sm:$0xff]
    %v1861 = vld [vmem:[#allocation5 + $0x18] sm:$0xff]
    %v1862 = vld [vmem:[#allocation5 + $0x20] sm:$0xff]
    %v1863 = vld [vmem:[#allocation5 + $0x28] sm:$0xff]
    %v1864 = vld [vmem:[#allocation5 + $0x30] sm:$0xff]
    %v1865 = vld [vmem:[#allocation5 + $0x38] sm:$0xff]
    %v1866 = vld [vmem:[#allocation5 + $0x40] sm:$0xff]
    %v1867 = vld [vmem:[#allocation5 + $0x48] sm:$0xff]
    %v1868 = vld [vmem:[#allocation5 + $0x50] sm:$0xff]
    %v1869 = vld [vmem:[#allocation5 + $0x58] sm:$0xff]
    %v1870 = vld [vmem:[#allocation5 + $0x60] sm:$0xff]
    %v1871 = vld [vmem:[#allocation5 + $0x68] sm:$0xff]
    %v1872 = vld [vmem:[#allocation5 + $0x70] sm:$0xff]
    %v1873 = vld [vmem:[#allocation5 + $0x78] sm:$0xff]
    %v1874 = vld [vmem:[#allocation5 + $0x80] sm:$0xff]
    %v1875 = vld [vmem:[#allocation5 + $0x88] sm:$0xff]
    %v1876 = vld [vmem:[#allocation5 + $0x90] sm:$0xff]
    %v1877 = vld [vmem:[#allocation5 + $0x98] sm:$0xff]
    %v1878 = vld [vmem:[#allocation5 + $0xa0] sm:$0xff]
    %v1879 = vld [vmem:[#allocation5 + $0xa8] sm:$0xff]
    %v1880 = vld [vmem:[#allocation5 + $0xb0] sm:$0xff]
    %v1881 = vld [vmem:[#allocation5 + $0xb8] sm:$0xff]
    %v1882 = vld [vmem:[#allocation5 + $0xc0] sm:$0xff]
    %v1883 = vld [vmem:[#allocation5 + $0xc8] sm:$0xff]
    %v1884 = vld [vmem:[#allocation5 + $0xd0] sm:$0xff]
    %v1885 = vld [vmem:[#allocation5 + $0xd8] sm:$0xff]
    %v1886 = vld [vmem:[#allocation5 + $0xe0] sm:$0xff]
    %v1887 = vld [vmem:[#allocation5 + $0xe8] sm:$0xff]
    %v1888 = vld [vmem:[#allocation5 + $0xf0] sm:$0xff]
    %v1889 = vld [vmem:[#allocation5 + $0xf8] sm:$0xff]
    %v1890 = vld [vmem:[#allocation5 + $0x100] sm:$0xff]
    %v1891 = vld [vmem:[#allocation5 + $0x108] sm:$0xff]
    %v1892 = vld [vmem:[#allocation5 + $0x110] sm:$0xff]
    %v1893 = vld [vmem:[#allocation5 + $0x118] sm:$0xff]
    %v1894 = vld [vmem:[#allocation5 + $0x120] sm:$0xff]
    %v1895 = vld [vmem:[#allocation5 + $0x128] sm:$0xff]
    %v1896 = vld [vmem:[#allocation5 + $0x130] sm:$0xff]
    %v1897 = vld [vmem:[#allocation5 + $0x138] sm:$0xff]
    %v1898 = vld [vmem:[#allocation5 + $0x140] sm:$0xff]
    %v1899 = vld [vmem:[#allocation5 + $0x148] sm:$0xff]
    %v1900 = vld [vmem:[#allocation5 + $0x150] sm:$0xff]
    %v1901 = vld [vmem:[#allocation5 + $0x158] sm:$0xff]
    %v1902 = vld [vmem:[#allocation5 + $0x160] sm:$0xff]
    %v1903 = vld [vmem:[#allocation5 + $0x168] sm:$0xff]
    %v1904 = vld [vmem:[#allocation5 + $0x170] sm:$0xff]
    %v1905 = vld [vmem:[#allocation5 + $0x178] sm:$0xff]
    %v1906 = vld [vmem:[#allocation5 + $0x180] sm:$0xff]
    %v1907 = vld [vmem:[#allocation5 + $0x188] sm:$0xff]
    %v1908 = vld [vmem:[#allocation5 + $0x190] sm:$0xff]
    %v1909 = vld [vmem:[#allocation5 + $0x198] sm:$0xff]
    %v1910 = vld [vmem:[#allocation5 + $0x1a0] sm:$0xff]
    %v1911 = vld [vmem:[#allocation5 + $0x1a8] sm:$0xff]
    %v1912 = vld [vmem:[#allocation5 + $0x1b0] sm:$0xff]
    %v1913 = vld [vmem:[#allocation5 + $0x1b8] sm:$0xff]
    %v1914 = vld [vmem:[#allocation5 + $0x1c0] sm:$0xff]
    %v1915 = vld [vmem:[#allocation5 + $0x1c8] sm:$0xff]
    %v1916 = vld [vmem:[#allocation5 + $0x1d0] sm:$0xff]
    %v1917 = vld [vmem:[#allocation5 + $0x1d8] sm:$0xff]
    %v1918 = vld [vmem:[#allocation5 + $0x1e0] sm:$0xff]
    %v1919 = vld [vmem:[#allocation5 + $0x1e8] sm:$0xff]
    %v1920 = vld [vmem:[#allocation5 + $0x1f0] sm:$0xff]
    %v1921 = vld [vmem:[#allocation5 + $0x1f8] sm:$0xff]
    %1922 = vmatprep.subr.mxu0 %v1859
    %1923 = vmatpush1.msra.mxu0 %v1858
    %1924 = vmatprep.subr.mxu0 %v1863
    %1925 = vmatpush1.msra.mxu0 %v1862
    %1926 = vmatprep.subr.mxu0 %v1867
    %1927 = vmatpush1.msra.mxu0 %v1866
    %1928 = vmatprep.subr.mxu0 %v1871
    %1929 = vmatpush1.msra.mxu0 %v1870
    %1930 = vmatprep.subr.mxu0 %v1875
    %1931 = vmatpush1.msra.mxu0 %v1874
    %1932 = vmatprep.subr.mxu0 %v1879
    %1933 = vmatpush1.msra.mxu0 %v1878
    %1934 = vmatprep.subr.mxu0 %v1883
    %1935 = vmatpush1.msra.mxu0 %v1882
    %1936 = vmatprep.subr.mxu0 %v1887
    %1937 = vmatpush1.msra.mxu0 %v1886
    %1938 = vmatprep.subr.mxu0 %v1891
    %1939 = vmatpush1.msra.mxu0 %v1890
    %1940 = vmatprep.subr.mxu0 %v1895
    %1941 = vmatpush1.msra.mxu0 %v1894
    %1942 = vmatprep.subr.mxu0 %v1899
    %1943 = vmatpush1.msra.mxu0 %v1898
    %1944 = vmatprep.subr.mxu0 %v1903
    %1945 = vmatpush1.msra.mxu0 %v1902
    %1946 = vmatprep.subr.mxu0 %v1907
    %1947 = vmatpush1.msra.mxu0 %v1906
    %1948 = vmatprep.subr.mxu0 %v1911
    %1949 = vmatpush1.msra.mxu0 %v1910
    %1950 = vmatprep.subr.mxu0 %v1915
    %1951 = vmatpush1.msra.mxu0 %v1914
    %1952 = vmatprep.subr.mxu0 %v1919
    %1953 = vmatpush1.msra.mxu0 %v1918
    %1954 = vmatprep.subr.mxu0 0.0
    %1955 = vmatpush1.msra.mxu0 0.0
    %1956 = vmatprep.subr.mxu0 0.0
    %1957 = vmatpush1.msra.mxu0 0.0
    %1958 = vmatprep.subr.mxu0 0.0
    %1959 = vmatpush1.msra.mxu0 0.0
    %1960 = vmatprep.subr.mxu0 0.0
    %1961 = vmatpush1.msra.mxu0 0.0
    %1962 = vmatprep.subr.mxu0 0.0
    %1963 = vmatpush1.msra.mxu0 0.0
    %1964 = vmatprep.subr.mxu0 0.0
    %1965 = vmatpush1.msra.mxu0 0.0
    %1966 = vmatprep.subr.mxu0 0.0
    %1967 = vmatpush1.msra.mxu0 0.0
    %1968 = vmatprep.subr.mxu0 0.0
    %1969 = vmatpush1.msra.mxu0 0.0
    %1970 = vmatprep.subr.mxu0 0.0
    %1971 = vmatpush1.msra.mxu0 0.0
    %1972 = vmatprep.subr.mxu0 0.0
    %1973 = vmatpush1.msra.mxu0 0.0
    %1974 = vmatprep.subr.mxu0 0.0
    %1975 = vmatpush1.msra.mxu0 0.0
    %1976 = vmatprep.subr.mxu0 0.0
    %1977 = vmatpush1.msra.mxu0 0.0
    %1978 = vmatprep.subr.mxu0 0.0
    %1979 = vmatpush1.msra.mxu0 0.0
    %1980 = vmatprep.subr.mxu0 0.0
    %1981 = vmatpush1.msra.mxu0 0.0
    %1982 = vmatprep.subr.mxu0 0.0
    %1983 = vmatpush1.msra.mxu0 0.0
    %1984 = vmatprep.subr.mxu0 0.0
    %1985 = vmatpush1.msra.mxu0 0.0
    %1986 = vmatprep.mubr.f32.mxu0 0.0
    %1987 = vmatmul.mubr.f32.gmra.mrb[0].mxu0 %v1856
    %v1988 = vpop.f32.mrb[0].mxu0
    %v1989 = vadd.f32 0.0, %v1988
    %v1990 = vpop.f32.mrb[0].mxu0
    %v1991 = vadd.f32 0.0, %v1990
    %1992 = vdwg.mxu0
    %1993 = vmatprep.subr.mxu0 %v1861
    %1994 = vmatpush1.msra.mxu0 %v1860
    %1995 = vmatprep.subr.mxu0 %v1865
    %1996 = vmatpush1.msra.mxu0 %v1864
    %1997 = vmatprep.subr.mxu0 %v1869
    %1998 = vmatpush1.msra.mxu0 %v1868
    %1999 = vmatprep.subr.mxu0 %v1873
    %2000 = vmatpush1.msra.mxu0 %v1872
    %2001 = vmatprep.subr.mxu0 %v1877
    %2002 = vmatpush1.msra.mxu0 %v1876
    %2003 = vmatprep.subr.mxu0 %v1881
    %2004 = vmatpush1.msra.mxu0 %v1880
    %2005 = vmatprep.subr.mxu0 %v1885
    %2006 = vmatpush1.msra.mxu0 %v1884
    %2007 = vmatprep.subr.mxu0 %v1889
    %2008 = vmatpush1.msra.mxu0 %v1888
    %2009 = vmatprep.subr.mxu0 %v1893
    %2010 = vmatpush1.msra.mxu0 %v1892
    %2011 = vmatprep.subr.mxu0 %v1897
    %2012 = vmatpush1.msra.mxu0 %v1896
    %2013 = vmatprep.subr.mxu0 %v1901
    %2014 = vmatpush1.msra.mxu0 %v1900
    %2015 = vmatprep.subr.mxu0 %v1905
    %2016 = vmatpush1.msra.mxu0 %v1904
    %2017 = vmatprep.subr.mxu0 %v1909
    %2018 = vmatpush1.msra.mxu0 %v1908
    %2019 = vmatprep.subr.mxu0 %v1913
    %2020 = vmatpush1.msra.mxu0 %v1912
    %2021 = vmatprep.subr.mxu0 %v1917
    %2022 = vmatpush1.msra.mxu0 %v1916
    %2023 = vmatprep.subr.mxu0 %v1921
    %2024 = vmatpush1.msra.mxu0 %v1920
    %2025 = vmatprep.subr.mxu0 0.0
    %2026 = vmatpush1.msra.mxu0 0.0
    %2027 = vmatprep.subr.mxu0 0.0
    %2028 = vmatpush1.msra.mxu0 0.0
    %2029 = vmatprep.subr.mxu0 0.0
    %2030 = vmatpush1.msra.mxu0 0.0
    %2031 = vmatprep.subr.mxu0 0.0
    %2032 = vmatpush1.msra.mxu0 0.0
    %2033 = vmatprep.subr.mxu0 0.0
    %2034 = vmatpush1.msra.mxu0 0.0
    %2035 = vmatprep.subr.mxu0 0.0
    %2036 = vmatpush1.msra.mxu0 0.0
    %2037 = vmatprep.subr.mxu0 0.0
    %2038 = vmatpush1.msra.mxu0 0.0
    %2039 = vmatprep.subr.mxu0 0.0
    %2040 = vmatpush1.msra.mxu0 0.0
    %2041 = vmatprep.subr.mxu0 0.0
    %2042 = vmatpush1.msra.mxu0 0.0
    %2043 = vmatprep.subr.mxu0 0.0
    %2044 = vmatpush1.msra.mxu0 0.0
    %2045 = vmatprep.subr.mxu0 0.0
    %2046 = vmatpush1.msra.mxu0 0.0
    %2047 = vmatprep.subr.mxu0 0.0
    %2048 = vmatpush1.msra.mxu0 0.0
    %2049 = vmatprep.subr.mxu0 0.0
    %2050 = vmatpush1.msra.mxu0 0.0
    %2051 = vmatprep.subr.mxu0 0.0
    %2052 = vmatpush1.msra.mxu0 0.0
    %2053 = vmatprep.subr.mxu0 0.0
    %2054 = vmatpush1.msra.mxu0 0.0
    %2055 = vmatprep.subr.mxu0 0.0
    %2056 = vmatpush1.msra.mxu0 0.0
    %2057 = vmatprep.mubr.f32.mxu0 0.0
    %2058 = vmatmul.mubr.f32.gmra.mrb[0].mxu0 %v1856
    %v2059 = vpop.f32.mrb[0].mxu0
    %v2060 = vadd.f32 0.0, %v2059
    %v2061 = vpop.f32.mrb[0].mxu0
    %v2062 = vadd.f32 0.0, %v2061
    %2063 = vdwg.mxu0
    %v2064 = vadd.f32 %v1852, %v1989
    %v2065 = vadd.f32 %v1853, %v1991
    %v2066 = vadd.f32 %v1854, %v2060
    %v2067 = vadd.f32 %v1855, %v2062
    %v2068 = vxor.u32 %v2064, 2147483648
    %v2069 = vmul.f32 %v2068, 1.442695
    %v2070 = vpow.pop %v2069
    %v2071 = vadd.f32 %v2070, 1.0
    %v2072 = vrcp.pop %v2071
    %v2073 = vmul.f32 1.0, %v2072
    %v2074 = vxor.u32 %v2065, 2147483648
    %v2075 = vmul.f32 %v2074, 1.442695
    %v2076 = vpow.pop %v2075
    %v2077 = vadd.f32 %v2076, 1.0
    %v2078 = vrcp.pop %v2077
    %v2079 = vmul.f32 1.0, %v2078
    %v2080 = vtanh.pop %v2066
    %v2081 = vxor.u32 %v2067, 2147483648
    %v2082 = vmul.f32 %v2081, 1.442695
    %v2083 = vpow.pop %v2082
    %v2084 = vadd.f32 %v2083, 1.0
    %v2085 = vrcp.pop %v2084
    %v2086 = vmul.f32 1.0, %v2085
    %v2087 = vmul.f32 %v2079, %v1857
    %v2088 = vmul.f32 %v2073, %v2080
    %v2089 = vadd.f32 %v2087, %v2088
    %2090 = vst [vmem:[#allocation3] sm:$0xff] %v2089
    %v2091 = vtanh.pop %v2089
    %v2092 = vmul.f32 %v2086, %v2091
    %2093 = vst [vmem:[#allocation2] sm:$0xff] %v2092
    %s2094 = smul.u32 7, 4
    %s2095 = smul.addr %s2094, 8
    %s2096 = scalar_lea.vmem [#allocation4], %s2095
    %v2097 = vld [vmem:[%s2096] sm:$0xff]
    %v2098 = vld [vmem:[%s2096 + $0x8] sm:$0xff]
    %v2099 = vld [vmem:[%s2096 + $0x10] sm:$0xff]
    %v2100 = vld [vmem:[%s2096 + $0x18] sm:$0xff]
    %v2101 = vld [vmem:[#allocation2] sm:$0xff]
    %v2102 = vld [vmem:[#allocation3] sm:$0xff]
    %v2103 = vld [vmem:[#allocation5] sm:$0xff]
    %v2104 = vld [vmem:[#allocation5 + $0x8] sm:$0xff]
    %v2105 = vld [vmem:[#allocation5 + $0x10] sm:$0xff]
    %v2106 = vld [vmem:[#allocation5 + $0x18] sm:$0xff]
    %v2107 = vld [vmem:[#allocation5 + $0x20] sm:$0xff]
    %v2108 = vld [vmem:[#allocation5 + $0x28] sm:$0xff]
    %v2109 = vld [vmem:[#allocation5 + $0x30] sm:$0xff]
    %v2110 = vld [vmem:[#allocation5 + $0x38] sm:$0xff]
    %v2111 = vld [vmem:[#allocation5 + $0x40] sm:$0xff]
    %v2112 = vld [vmem:[#allocation5 + $0x48] sm:$0xff]
    %v2113 = vld [vmem:[#allocation5 + $0x50] sm:$0xff]
    %v2114 = vld [vmem:[#allocation5 + $0x58] sm:$0xff]
    %v2115 = vld [vmem:[#allocation5 + $0x60] sm:$0xff]
    %v2116 = vld [vmem:[#allocation5 + $0x68] sm:$0xff]
    %v2117 = vld [vmem:[#allocation5 + $0x70] sm:$0xff]
    %v2118 = vld [vmem:[#allocation5 + $0x78] sm:$0xff]
    %v2119 = vld [vmem:[#allocation5 + $0x80] sm:$0xff]
    %v2120 = vld [vmem:[#allocation5 + $0x88] sm:$0xff]
    %v2121 = vld [vmem:[#allocation5 + $0x90] sm:$0xff]
    %v2122 = vld [vmem:[#allocation5 + $0x98] sm:$0xff]
    %v2123 = vld [vmem:[#allocation5 + $0xa0] sm:$0xff]
    %v2124 = vld [vmem:[#allocation5 + $0xa8] sm:$0xff]
    %v2125 = vld [vmem:[#allocation5 + $0xb0] sm:$0xff]
    %v2126 = vld [vmem:[#allocation5 + $0xb8] sm:$0xff]
    %v2127 = vld [vmem:[#allocation5 + $0xc0] sm:$0xff]
    %v2128 = vld [vmem:[#allocation5 + $0xc8] sm:$0xff]
    %v2129 = vld [vmem:[#allocation5 + $0xd0] sm:$0xff]
    %v2130 = vld [vmem:[#allocation5 + $0xd8] sm:$0xff]
    %v2131 = vld [vmem:[#allocation5 + $0xe0] sm:$0xff]
    %v2132 = vld [vmem:[#allocation5 + $0xe8] sm:$0xff]
    %v2133 = vld [vmem:[#allocation5 + $0xf0] sm:$0xff]
    %v2134 = vld [vmem:[#allocation5 + $0xf8] sm:$0xff]
    %v2135 = vld [vmem:[#allocation5 + $0x100] sm:$0xff]
    %v2136 = vld [vmem:[#allocation5 + $0x108] sm:$0xff]
    %v2137 = vld [vmem:[#allocation5 + $0x110] sm:$0xff]
    %v2138 = vld [vmem:[#allocation5 + $0x118] sm:$0xff]
    %v2139 = vld [vmem:[#allocation5 + $0x120] sm:$0xff]
    %v2140 = vld [vmem:[#allocation5 + $0x128] sm:$0xff]
    %v2141 = vld [vmem:[#allocation5 + $0x130] sm:$0xff]
    %v2142 = vld [vmem:[#allocation5 + $0x138] sm:$0xff]
    %v2143 = vld [vmem:[#allocation5 + $0x140] sm:$0xff]
    %v2144 = vld [vmem:[#allocation5 + $0x148] sm:$0xff]
    %v2145 = vld [vmem:[#allocation5 + $0x150] sm:$0xff]
    %v2146 = vld [vmem:[#allocation5 + $0x158] sm:$0xff]
    %v2147 = vld [vmem:[#allocation5 + $0x160] sm:$0xff]
    %v2148 = vld [vmem:[#allocation5 + $0x168] sm:$0xff]
    %v2149 = vld [vmem:[#allocation5 + $0x170] sm:$0xff]
    %v2150 = vld [vmem:[#allocation5 + $0x178] sm:$0xff]
    %v2151 = vld [vmem:[#allocation5 + $0x180] sm:$0xff]
    %v2152 = vld [vmem:[#allocation5 + $0x188] sm:$0xff]
    %v2153 = vld [vmem:[#allocation5 + $0x190] sm:$0xff]
    %v2154 = vld [vmem:[#allocation5 + $0x198] sm:$0xff]
    %v2155 = vld [vmem:[#allocation5 + $0x1a0] sm:$0xff]
    %v2156 = vld [vmem:[#allocation5 + $0x1a8] sm:$0xff]
    %v2157 = vld [vmem:[#allocation5 + $0x1b0] sm:$0xff]
    %v2158 = vld [vmem:[#allocation5 + $0x1b8] sm:$0xff]
    %v2159 = vld [vmem:[#allocation5 + $0x1c0] sm:$0xff]
    %v2160 = vld [vmem:[#allocation5 + $0x1c8] sm:$0xff]
    %v2161 = vld [vmem:[#allocation5 + $0x1d0] sm:$0xff]
    %v2162 = vld [vmem:[#allocation5 + $0x1d8] sm:$0xff]
    %v2163 = vld [vmem:[#allocation5 + $0x1e0] sm:$0xff]
    %v2164 = vld [vmem:[#allocation5 + $0x1e8] sm:$0xff]
    %v2165 = vld [vmem:[#allocation5 + $0x1f0] sm:$0xff]
    %v2166 = vld [vmem:[#allocation5 + $0x1f8] sm:$0xff]
    %2167 = vmatprep.subr.mxu0 %v2104
    %2168 = vmatpush1.msra.mxu0 %v2103
    %2169 = vmatprep.subr.mxu0 %v2108
    %2170 = vmatpush1.msra.mxu0 %v2107
    %2171 = vmatprep.subr.mxu0 %v2112
    %2172 = vmatpush1.msra.mxu0 %v2111
    %2173 = vmatprep.subr.mxu0 %v2116
    %2174 = vmatpush1.msra.mxu0 %v2115
    %2175 = vmatprep.subr.mxu0 %v2120
    %2176 = vmatpush1.msra.mxu0 %v2119
    %2177 = vmatprep.subr.mxu0 %v2124
    %2178 = vmatpush1.msra.mxu0 %v2123
    %2179 = vmatprep.subr.mxu0 %v2128
    %2180 = vmatpush1.msra.mxu0 %v2127
    %2181 = vmatprep.subr.mxu0 %v2132
    %2182 = vmatpush1.msra.mxu0 %v2131
    %2183 = vmatprep.subr.mxu0 %v2136
    %2184 = vmatpush1.msra.mxu0 %v2135
    %2185 = vmatprep.subr.mxu0 %v2140
    %2186 = vmatpush1.msra.mxu0 %v2139
    %2187 = vmatprep.subr.mxu0 %v2144
    %2188 = vmatpush1.msra.mxu0 %v2143
    %2189 = vmatprep.subr.mxu0 %v2148
    %2190 = vmatpush1.msra.mxu0 %v2147
    %2191 = vmatprep.subr.mxu0 %v2152
    %2192 = vmatpush1.msra.mxu0 %v2151
    %2193 = vmatprep.subr.mxu0 %v2156
    %2194 = vmatpush1.msra.mxu0 %v2155
    %2195 = vmatprep.subr.mxu0 %v2160
    %2196 = vmatpush1.msra.mxu0 %v2159
    %2197 = vmatprep.subr.mxu0 %v2164
    %2198 = vmatpush1.msra.mxu0 %v2163
    %2199 = vmatprep.subr.mxu0 0.0
    %2200 = vmatpush1.msra.mxu0 0.0
    %2201 = vmatprep.subr.mxu0 0.0
    %2202 = vmatpush1.msra.mxu0 0.0
    %2203 = vmatprep.subr.mxu0 0.0
    %2204 = vmatpush1.msra.mxu0 0.0
    %2205 = vmatprep.subr.mxu0 0.0
    %2206 = vmatpush1.msra.mxu0 0.0
    %2207 = vmatprep.subr.mxu0 0.0
    %2208 = vmatpush1.msra.mxu0 0.0
    %2209 = vmatprep.subr.mxu0 0.0
    %2210 = vmatpush1.msra.mxu0 0.0
    %2211 = vmatprep.subr.mxu0 0.0
    %2212 = vmatpush1.msra.mxu0 0.0
    %2213 = vmatprep.subr.mxu0 0.0
    %2214 = vmatpush1.msra.mxu0 0.0
    %2215 = vmatprep.subr.mxu0 0.0
    %2216 = vmatpush1.msra.mxu0 0.0
    %2217 = vmatprep.subr.mxu0 0.0
    %2218 = vmatpush1.msra.mxu0 0.0
    %2219 = vmatprep.subr.mxu0 0.0
    %2220 = vmatpush1.msra.mxu0 0.0
    %2221 = vmatprep.subr.mxu0 0.0
    %2222 = vmatpush1.msra.mxu0 0.0
    %2223 = vmatprep.subr.mxu0 0.0
    %2224 = vmatpush1.msra.mxu0 0.0
    %2225 = vmatprep.subr.mxu0 0.0
    %2226 = vmatpush1.msra.mxu0 0.0
    %2227 = vmatprep.subr.mxu0 0.0
    %2228 = vmatpush1.msra.mxu0 0.0
    %2229 = vmatprep.subr.mxu0 0.0
    %2230 = vmatpush1.msra.mxu0 0.0
    %2231 = vmatprep.mubr.f32.mxu0 0.0
    %2232 = vmatmul.mubr.f32.gmra.mrb[0].mxu0 %v2101
    %v2233 = vpop.f32.mrb[0].mxu0
    %v2234 = vadd.f32 0.0, %v2233
    %v2235 = vpop.f32.mrb[0].mxu0
    %v2236 = vadd.f32 0.0, %v2235
    %2237 = vdwg.mxu0
    %2238 = vmatprep.subr.mxu0 %v2106
    %2239 = vmatpush1.msra.mxu0 %v2105
    %2240 = vmatprep.subr.mxu0 %v2110
    %2241 = vmatpush1.msra.mxu0 %v2109
    %2242 = vmatprep.subr.mxu0 %v2114
    %2243 = vmatpush1.msra.mxu0 %v2113
    %2244 = vmatprep.subr.mxu0 %v2118
    %2245 = vmatpush1.msra.mxu0 %v2117
    %2246 = vmatprep.subr.mxu0 %v2122
    %2247 = vmatpush1.msra.mxu0 %v2121
    %2248 = vmatprep.subr.mxu0 %v2126
    %2249 = vmatpush1.msra.mxu0 %v2125
    %2250 = vmatprep.subr.mxu0 %v2130
    %2251 = vmatpush1.msra.mxu0 %v2129
    %2252 = vmatprep.subr.mxu0 %v2134
    %2253 = vmatpush1.msra.mxu0 %v2133
    %2254 = vmatprep.subr.mxu0 %v2138
    %2255 = vmatpush1.msra.mxu0 %v2137
    %2256 = vmatprep.subr.mxu0 %v2142
    %2257 = vmatpush1.msra.mxu0 %v2141
    %2258 = vmatprep.subr.mxu0 %v2146
    %2259 = vmatpush1.msra.mxu0 %v2145
    %2260 = vmatprep.subr.mxu0 %v2150
    %2261 = vmatpush1.msra.mxu0 %v2149
    %2262 = vmatprep.subr.mxu0 %v2154
    %2263 = vmatpush1.msra.mxu0 %v2153
    %2264 = vmatprep.subr.mxu0 %v2158
    %2265 = vmatpush1.msra.mxu0 %v2157
    %2266 = vmatprep.subr.mxu0 %v2162
    %2267 = vmatpush1.msra.mxu0 %v2161
    %2268 = vmatprep.subr.mxu0 %v2166
    %2269 = vmatpush1.msra.mxu0 %v2165
    %2270 = vmatprep.subr.mxu0 0.0
    %2271 = vmatpush1.msra.mxu0 0.0
    %2272 = vmatprep.subr.mxu0 0.0
    %2273 = vmatpush1.msra.mxu0 0.0
    %2274 = vmatprep.subr.mxu0 0.0
    %2275 = vmatpush1.msra.mxu0 0.0
    %2276 = vmatprep.subr.mxu0 0.0
    %2277 = vmatpush1.msra.mxu0 0.0
    %2278 = vmatprep.subr.mxu0 0.0
    %2279 = vmatpush1.msra.mxu0 0.0
    %2280 = vmatprep.subr.mxu0 0.0
    %2281 = vmatpush1.msra.mxu0 0.0
    %2282 = vmatprep.subr.mxu0 0.0
    %2283 = vmatpush1.msra.mxu0 0.0
    %2284 = vmatprep.subr.mxu0 0.0
    %2285 = vmatpush1.msra.mxu0 0.0
    %2286 = vmatprep.subr.mxu0 0.0
    %2287 = vmatpush1.msra.mxu0 0.0
    %2288 = vmatprep.subr.mxu0 0.0
    %2289 = vmatpush1.msra.mxu0 0.0
    %2290 = vmatprep.subr.mxu0 0.0
    %2291 = vmatpush1.msra.mxu0 0.0
    %2292 = vmatprep.subr.mxu0 0.0
    %2293 = vmatpush1.msra.mxu0 0.0
    %2294 = vmatprep.subr.mxu0 0.0
    %2295 = vmatpush1.msra.mxu0 0.0
    %2296 = vmatprep.subr.mxu0 0.0
    %2297 = vmatpush1.msra.mxu0 0.0
    %2298 = vmatprep.subr.mxu0 0.0
    %2299 = vmatpush1.msra.mxu0 0.0
    %2300 = vmatprep.subr.mxu0 0.0
    %2301 = vmatpush1.msra.mxu0 0.0
    %2302 = vmatprep.mubr.f32.mxu0 0.0
    %2303 = vmatmul.mubr.f32.gmra.mrb[0].mxu0 %v2101
    %v2304 = vpop.f32.mrb[0].mxu0
    %v2305 = vadd.f32 0.0, %v2304
    %v2306 = vpop.f32.mrb[0].mxu0
    %v2307 = vadd.f32 0.0, %v2306
    %2308 = vdwg.mxu0
    %v2309 = vadd.f32 %v2097, %v2234
    %v2310 = vadd.f32 %v2098, %v2236
    %v2311 = vadd.f32 %v2099, %v2305
    %v2312 = vadd.f32 %v2100, %v2307
    %v2313 = vxor.u32 %v2309, 2147483648
    %v2314 = vmul.f32 %v2313, 1.442695
    %v2315 = vpow.pop %v2314
    %v2316 = vadd.f32 %v2315, 1.0
    %v2317 = vrcp.pop %v2316
    %v2318 = vmul.f32 1.0, %v2317
    %v2319 = vxor.u32 %v2310, 2147483648
    %v2320 = vmul.f32 %v2319, 1.442695
    %v2321 = vpow.pop %v2320
    %v2322 = vadd.f32 %v2321, 1.0
    %v2323 = vrcp.pop %v2322
    %v2324 = vmul.f32 1.0, %v2323
    %v2325 = vtanh.pop %v2311
    %v2326 = vxor.u32 %v2312, 2147483648
    %v2327 = vmul.f32 %v2326, 1.442695
    %v2328 = vpow.pop %v2327
    %v2329 = vadd.f32 %v2328, 1.0
    %v2330 = vrcp.pop %v2329
    %v2331 = vmul.f32 1.0, %v2330
    %v2332 = vmul.f32 %v2324, %v2102
    %v2333 = vmul.f32 %v2318, %v2325
    %v2334 = vadd.f32 %v2332, %v2333
    %2335 = vst [vmem:[#allocation3] sm:$0xff] %v2334
    %v2336 = vtanh.pop %v2334
    %v2337 = vmul.f32 %v2331, %v2336
    %2338 = vst [vmem:[#allocation2] sm:$0xff] %v2337
    // Predicated region
    $region38: #{tpu_custom_call.1} parent=1 // pred_check
      %p2339 = pneg %p52
    $region39: #{tpu_custom_call.1} parent=1 // pred_check_branch
      %2341 = sbr.rel (%p2339) target = $region41
    $region40: #{tpu_custom_call.1} parent=1 // pred_region
      %v2342 = vld [vmem:[#allocation2] sm:$0xff]
      %v2343 = vld [vmem:[#allocation8] sm:$0xff]
      %v2344 = vld [vmem:[#allocation8 + $0x8] sm:$0xff]
      %v2345 = vld [vmem:[#allocation8 + $0x10] sm:$0xff]
      %v2346 = vld [vmem:[#allocation8 + $0x18] sm:$0xff]
      %v2347 = vld [vmem:[#allocation8 + $0x20] sm:$0xff]
      %v2348 = vld [vmem:[#allocation8 + $0x28] sm:$0xff]
      %v2349 = vld [vmem:[#allocation8 + $0x30] sm:$0xff]
      %v2350 = vld [vmem:[#allocation8 + $0x38] sm:$0xff]
      %v2351 = vld [vmem:[#allocation8 + $0x40] sm:$0xff]
      %v2352 = vld [vmem:[#allocation8 + $0x48] sm:$0xff]
      %v2353 = vld [vmem:[#allocation8 + $0x50] sm:$0xff]
      %v2354 = vld [vmem:[#allocation8 + $0x58] sm:$0xff]
      %v2355 = vld [vmem:[#allocation8 + $0x60] sm:$0xff]
      %v2356 = vld [vmem:[#allocation8 + $0x68] sm:$0xff]
      %v2357 = vld [vmem:[#allocation8 + $0x70] sm:$0xff]
      %v2358 = vld [vmem:[#allocation8 + $0x78] sm:$0xff]
      %v2359 = vld [vmem:[%s5] sm:$0x1]
      %v2361 = vlaneseq
      %v2362 = vshrl.u32 %v2361, 7
      %v2363 = vsub.s32 0, %v2362
      %v2364 = vrot.slane %v2359, %v2363
      %2366 = vmatprep.subr.mxu0 0.0
      %2367 = vmatpush1.msra.mxu0 %v2343
      %2368 = vmatprep.subr.mxu0 0.0
      %2369 = vmatpush1.msra.mxu0 %v2344
      %2370 = vmatprep.subr.mxu0 0.0
      %2371 = vmatpush1.msra.mxu0 %v2345
      %2372 = vmatprep.subr.mxu0 0.0
      %2373 = vmatpush1.msra.mxu0 %v2346
      %2374 = vmatprep.subr.mxu0 0.0
      %2375 = vmatpush1.msra.mxu0 %v2347
      %2376 = vmatprep.subr.mxu0 0.0
      %2377 = vmatpush1.msra.mxu0 %v2348
      %2378 = vmatprep.subr.mxu0 0.0
      %2379 = vmatpush1.msra.mxu0 %v2349
      %2380 = vmatprep.subr.mxu0 0.0
      %2381 = vmatpush1.msra.mxu0 %v2350
      %2382 = vmatprep.subr.mxu0 0.0
      %2383 = vmatpush1.msra.mxu0 %v2351
      %2384 = vmatprep.subr.mxu0 0.0
      %2385 = vmatpush1.msra.mxu0 %v2352
      %2386 = vmatprep.subr.mxu0 0.0
      %2387 = vmatpush1.msra.mxu0 %v2353
      %2388 = vmatprep.subr.mxu0 0.0
      %2389 = vmatpush1.msra.mxu0 %v2354
      %2390 = vmatprep.subr.mxu0 0.0
      %2391 = vmatpush1.msra.mxu0 %v2355
      %2392 = vmatprep.subr.mxu0 0.0
      %2393 = vmatpush1.msra.mxu0 %v2356
      %2394 = vmatprep.subr.mxu0 0.0
      %2395 = vmatpush1.msra.mxu0 %v2357
      %2396 = vmatprep.subr.mxu0 0.0
      %2397 = vmatpush1.msra.mxu0 %v2358
      %2398 = vmatprep.subr.mxu0 0.0
      %2399 = vmatpush1.msra.mxu0 0.0
      %2400 = vmatprep.subr.mxu0 0.0
      %2401 = vmatpush1.msra.mxu0 0.0
      %2402 = vmatprep.subr.mxu0 0.0
      %2403 = vmatpush1.msra.mxu0 0.0
      %2404 = vmatprep.subr.mxu0 0.0
      %2405 = vmatpush1.msra.mxu0 0.0
      %2406 = vmatprep.subr.mxu0 0.0
      %2407 = vmatpush1.msra.mxu0 0.0
      %2408 = vmatprep.subr.mxu0 0.0
      %2409 = vmatpush1.msra.mxu0 0.0
      %2410 = vmatprep.subr.mxu0 0.0
      %2411 = vmatpush1.msra.mxu0 0.0
      %2412 = vmatprep.subr.mxu0 0.0
      %2413 = vmatpush1.msra.mxu0 0.0
      %2414 = vmatprep.subr.mxu0 0.0
      %2415 = vmatpush1.msra.mxu0 0.0
      %2416 = vmatprep.subr.mxu0 0.0
      %2417 = vmatpush1.msra.mxu0 0.0
      %2418 = vmatprep.subr.mxu0 0.0
      %2419 = vmatpush1.msra.mxu0 0.0
      %2420 = vmatprep.subr.mxu0 0.0
      %2421 = vmatpush1.msra.mxu0 0.0
      %2422 = vmatprep.subr.mxu0 0.0
      %2423 = vmatpush1.msra.mxu0 0.0
      %2424 = vmatprep.subr.mxu0 0.0
      %2425 = vmatpush1.msra.mxu0 0.0
      %2426 = vmatprep.subr.mxu0 0.0
      %2427 = vmatpush1.msra.mxu0 0.0
      %2428 = vmatprep.subr.mxu0 0.0
      %2429 = vmatpush1.msra.mxu0 0.0
      %2430 = vmatprep.mubr.f32.mxu0 0.0
      %2431 = vmatmul.mubr.f32.gmra.mrb[0].mxu0 %v2342
      %v2432 = vpop.f32.mrb[0].mxu0
      %v2433 = vadd.f32 %v2364, %v2432
      %v2434 = vpop.f32.mrb[0].mxu0
      %2435 = vdwg.mxu0
      %2436 = vst [vmem:[#allocation10] sm:$0xff] %v2433
    $region41: #{tpu_custom_call.1} parent=1 // pred_fallthru
      _
    // Predicated region
    $region42: #{tpu_custom_call.1} parent=1 // pred_check
      _
    $region43: #{tpu_custom_call.1} parent=1 // pred_check_branch
      %2438 = sbr.rel (0) target = $region45
    $region44: #{tpu_custom_call.1} parent=1 // pred_region
      %s2440 = ssub.s32 128, 128
      %2441 = vsyncadd [#allocation7], %s2440
      %s2443 = sshll.u32 [#allocation10], 4
      %s2444 = int_to_ptr.vmem [resolvable:$true] %s2443
      %2446 = dma.vmem_to_hbm [thread:$0]  %s2444, 128, %s6, [#allocation7]
    $region45: #{tpu_custom_call.1} parent=1 // pred_fallthru
      _
    // Predicated region
    $region46: #{tpu_custom_call.1} parent=1 // pred_check
      _
    $region47: #{tpu_custom_call.1} parent=1 // pred_check_branch
      %2448 = sbr.rel (0) target = $region49
    $region48: #{tpu_custom_call.1} parent=1 // pred_region
      %2449 = dma.done [#allocation7], 128
    $region49: #{tpu_custom_call.1} parent=1 // pred_fallthru
      _
    %2450 = vsyncpa [#allocation6], 1
    %2451 = vsyncpa [#allocation9], 1
    %2452 = vsyncpa [#allocation7], 1

</llo_original>
